<compile_context>
chip_gen: v7x
topology: tpu7x:2x2x1
jax: 0.10.0
libtpu: 0.0.40
codegen_flags: <defaults>
</compile_context>

<pallas_src>
import numpy as np
import jax
import jax.numpy as jnp
from jax.experimental import pallas as pl
from jax.experimental.pallas import tpu as pltpu


def _dft_parts(n):
    """Real/imag parts of the (symmetric) forward DFT matrix F_n (float64 np)."""
    k = np.arange(n)
    ang = -2.0 * np.pi * np.outer(k, k) / float(n)
    return np.cos(ang), np.sin(ang)


def _vmem_capacity_bytes():
    try:
        return int(pltpu.get_tpu_info().vmem_capacity_bytes)
    except Exception:
        return 128 * 1024 * 1024        # v5e/v6e-class default if query unavailable


def _pick_tile_batch(nc, h, w, budget_bytes):
    """Images per grid step, under a VMEM working-set budget, with nb >= 2."""

    def fits(tb):
        m = tb * h
        s = m * w
        const = (w * 2 * w) + 2 * (2 * m) ** 2 + (2 * w) ** 2 + (w * 2 * m)
        # ~16 live f32 slab-equivalents (double-buffered in/out blocks plus
        # intermediates) + double-buffered constant matrices.
        return 4 * 16 * s + 2 * 4 * const <= budget_bytes

    tb = max(1, 256 // max(1, h))        # ~256 matmul rows: native MXU M on v6e/v7x
    tb = min(tb, max(1, nc))
    if nc >= 2:
        tb = min(tb, (nc + 1) // 2)      # guarantee >= 2 grid steps (pipelining, 2 TCs)
    while tb > 1 and not fits(tb):
        tb = max(1, tb // 2)
    return tb


def _make_kernel(tb, h, w):
    m = tb * h                           # matmul M for the W stages

    def kernel(x_ref, fwf_ref, bhf_ref, bhi_ref, bwi_ref, msk_ref, o_ref):
        def dot(a, b):
            return jnp.dot(a, b, preferred_element_type=jnp.float32,
                           precision=jax.lax.Precision.HIGHEST)

        # ---- forward FFT over W (real input): one dot against [Frw | Fiw] ----
        x = x_ref[...].reshape(m, w)                        # (M, W), M = TB*H
        xc = dot(x, fwf_ref[...])                           # (M, 2W) = [re | im]

        # ---- whole-slab 2-D transposes to the H-major layout -----------------
        # rows become the W-frequency axis, cols are (image, spatial-H) fused.
        ar = jnp.transpose(xc[:, :w])                       # (W, M)
        ai = jnp.transpose(xc[:, w:])                       # (W, M)
        hc = jnp.concatenate([ar, ai], axis=1)              # (W, 2M)

        # ---- forward FFT over H: one dot vs the block-diagonal block matrix --
        hc = dot(hc, bhf_ref[...])                          # (W, 2M)

        # ---- k-space mask (pre-transposed, tiled over the batch, re/im
        #      duplicated, with the 1/(H*W) ifft normalisation folded in) ------
        hc = hc * msk_ref[...]

        # ---- inverse FFT over H (unnormalised conjugate block matrix) --------
        hc = dot(hc, bhi_ref[...])                          # (W, 2M)

        # ---- whole-slab 2-D transposes back to the W-major layout ------------
        br = jnp.transpose(hc[:, :m])                       # (M, W)
        bi = jnp.transpose(hc[:, m:])                       # (M, W)
        yc = jnp.concatenate([br, bi], axis=1)              # (M, 2W)

        # ---- inverse FFT over W ----------------------------------------------
        yc = dot(yc, bwi_ref[...])                          # (M, 2W)

        # ---- magnitude ---------------------------------------------------------
        yr = yc[:, :w]
        yi = yc[:, w:]
        o_ref[...] = jnp.sqrt(yr * yr + yi * yi).reshape(tb, h, w)

    return kernel


def fft_mask_forback(x, full_mask, flag=True):
    """x: (N, C, H, W) float; full_mask: (H, W, K) — only [..., 0] is used."""
    n, c, h, w = x.shape
    nc = n * c
    x_flat = x.reshape(nc, h, w).astype(jnp.float32)

    # --- generation-aware sizing ---------------------------------------------
    vmem_cap = _vmem_capacity_bytes()
    # leave headroom on 64 MiB parts (v7x); larger ceiling on 128 MiB parts.
    vmem_limit = 40 * 1024 * 1024 if vmem_cap <= 64 * 1024 * 1024 else 80 * 1024 * 1024
    tb = _pick_tile_batch(nc, h, w, budget_bytes=int(vmem_limit * 0.75))
    nb = pl.cdiv(nc, tb)
    nc_pad = nb * tb
    if nc_pad != nc:       # pad awkward N*C so the MXU M dimension stays wide
        x_flat = jnp.concatenate(
            [x_flat, jnp.zeros((nc_pad - nc, h, w), jnp.float32)], axis=0)

    m = tb * h

    # --- host-side constants (no per-step constant math inside the kernel) ----
    frh, fih = _dft_parts(h)
    frw, fiw = _dft_parts(w)

    # forward W stage on real input: x @ [Frw | Fiw]
    fw_fwd = jnp.asarray(np.concatenate([frw, fiw], axis=1), jnp.float32)      # (W, 2W)
    # inverse W stage: unnormalised conjugate 2x2 block matrix
    bw_inv = jnp.asarray(np.block([[frw, -fiw], [fiw, frw]]), jnp.float32)     # (2W, 2W)
    # H stages: block-diagonal over the TB images so only plain 2-D transposes
    # are needed between stages (no lane-dim reshapes).
    dr_h = np.kron(np.eye(tb), frh)
    di_h = np.kron(np.eye(tb), fih)
    bigh_fwd = jnp.asarray(np.block([[dr_h, di_h], [-di_h, dr_h]]), jnp.float32)  # (2M, 2M)
    bigh_inv = jnp.asarray(np.block([[dr_h, -di_h], [di_h, dr_h]]), jnp.float32)  # (2M, 2M)

    # Transposed mask, tiled over the image batch, duplicated for [re | im],
    # with the 1/(H*W) inverse-FFT normalisation folded in (exact: the scale
    # commutes through the linear inverse transforms and the magnitude).
    mt = jnp.transpose(full_mask[..., 0].astype(jnp.float32))                  # (W, H)
    mbig = jnp.tile(mt, (1, tb))                                               # (W, M)
    msk = jnp.concatenate([mbig, mbig], axis=1) * (1.0 / float(h * w))         # (W, 2M)

    out = pl.pallas_call(
        _make_kernel(tb, h, w),
        out_shape=jax.ShapeDtypeStruct((nc_pad, h, w), jnp.float32),
        grid_spec=pltpu.PrefetchScalarGridSpec(
            num_scalar_prefetch=0,
            grid=(nb,),
            in_specs=[
                pl.BlockSpec((tb, h, w), lambda i: (i, 0, 0)),       # image batch
                pl.BlockSpec((w, 2 * w), lambda i: (0, 0)),          # [Frw | Fiw]
                pl.BlockSpec((2 * m, 2 * m), lambda i: (0, 0)),      # forward H block
                pl.BlockSpec((2 * m, 2 * m), lambda i: (0, 0)),      # inverse H block
                pl.BlockSpec((2 * w, 2 * w), lambda i: (0, 0)),      # inverse W block
                pl.BlockSpec((w, 2 * m), lambda i: (0, 0)),          # scaled mask
            ],
            out_specs=pl.BlockSpec((tb, h, w), lambda i: (i, 0, 0)),
        ),
        compiler_params=pltpu.CompilerParams(
            dimension_semantics=("parallel",),
            vmem_limit_bytes=vmem_limit,
        ),
    )(x_flat, fw_fwd, bigh_fwd, bigh_inv, bw_inv, msk)

    return out[:nc].reshape(n, c, h, w)


if __name__ == "__main__":
    key = jax.random.PRNGKey(0)
    kx, km = jax.random.split(key)

    N, C, H, W = 2, 4, 16, 16
    x = jax.random.normal(kx, (N, C, H, W), dtype=jnp.float32)
    # Binary k-space mask; trailing axis mimics the PyTorch full_mask[..., 0].
    full_mask = (jax.random.uniform(km, (H, W, 2)) > 0.5).astype(jnp.float32)

    out = fft_mask_forback(x, full_mask)
    out = jax.block_until_ready(out)

    # Silent correctness check against the jnp.fft reference.
    ref = jnp.abs(jnp.fft.ifft2(jnp.fft.fft2(x) * full_mask[..., 0][None, None]))
    np.testing.assert_allclose(np.asarray(out), np.asarray(ref), atol=1e-4, rtol=1e-4)

    print("KERNEL_OK")
</pallas_src>

<mosaic_0001>
module attributes {stable_mosaic.version = 11 : i64} {
  func.func @kernel(%arg0: i32, %arg1: memref<4x16x16xf32, #tpu.memory_space<vmem>>, %arg2: memref<16x32xf32, #tpu.memory_space<vmem>>, %arg3: memref<128x128xf32, #tpu.memory_space<vmem>>, %arg4: memref<128x128xf32, #tpu.memory_space<vmem>>, %arg5: memref<32x32xf32, #tpu.memory_space<vmem>>, %arg6: memref<16x128xf32, #tpu.memory_space<vmem>>, %arg7: memref<4x16x16xf32, #tpu.memory_space<vmem>>) attributes {dimension_semantics = [#tpu.dimension_semantics<parallel>], iteration_bounds = array<i64: 2>, scalar_prefetch = 0 : i64, scratch_operands = 0 : i64, tpu.core_type = #tpu.core_type<tc>, window_params = [{transform_indices = @transform_0, window_bounds = array<i64: 4, 16, 16>}, {pipeline_mode = #tpu.pipeline_mode<synchronous>, transform_indices = @transform_1, window_bounds = array<i64: 16, 32>}, {pipeline_mode = #tpu.pipeline_mode<synchronous>, transform_indices = @transform_2, window_bounds = array<i64: 128, 128>}, {pipeline_mode = #tpu.pipeline_mode<synchronous>, transform_indices = @transform_3, window_bounds = array<i64: 128, 128>}, {pipeline_mode = #tpu.pipeline_mode<synchronous>, transform_indices = @transform_4, window_bounds = array<i64: 32, 32>}, {pipeline_mode = #tpu.pipeline_mode<synchronous>, transform_indices = @transform_5, window_bounds = array<i64: 16, 128>}, {transform_indices = @transform_6, window_bounds = array<i64: 4, 16, 16>}]} {
    %c0 = arith.constant 0 : index
    %c0_0 = arith.constant 0 : index
    %c0_1 = arith.constant 0 : index
    %0 = vector.load %arg1[%c0, %c0_0, %c0_1] : memref<4x16x16xf32, #tpu.memory_space<vmem>>, vector<4x16x16xf32>
    %1 = vector.shape_cast %0 : vector<4x16x16xf32> to vector<64x16xf32>
    %c0_2 = arith.constant 0 : index
    %c0_3 = arith.constant 0 : index
    %2 = vector.load %arg2[%c0_2, %c0_3] : memref<16x32xf32, #tpu.memory_space<vmem>>, vector<16x32xf32>
    %cst = arith.constant dense<0.000000e+00> : vector<64x32xf32>
    %3 = tpu.matmul %1, %2, %cst {dimension_numbers = #tpu.dot_dimension_numbers<[1], [0], [0], [1], [0, 0, 1, 1], [], []>, precision = #tpu.contract_precision<fp32>} : vector<64x16xf32>, vector<16x32xf32>, vector<64x32xf32> -> vector<64x32xf32>
    %4 = vector.extract_strided_slice %3 {offsets = [0, 0], sizes = [64, 16], strides = [1, 1]} : vector<64x32xf32> to vector<64x16xf32>
    %5 = tpu.transpose %4, [1, 0] : vector<64x16xf32> -> vector<16x64xf32>
    %6 = vector.extract_strided_slice %3 {offsets = [0, 16], sizes = [64, 16], strides = [1, 1]} : vector<64x32xf32> to vector<64x16xf32>
    %7 = tpu.transpose %6, [1, 0] : vector<64x16xf32> -> vector<16x64xf32>
    %8 = tpu.concatenate %5, %7 in 1 : vector<16x64xf32>, vector<16x64xf32> -> vector<16x128xf32>
    %c0_4 = arith.constant 0 : index
    %c0_5 = arith.constant 0 : index
    %9 = vector.load %arg3[%c0_4, %c0_5] : memref<128x128xf32, #tpu.memory_space<vmem>>, vector<128x128xf32>
    %cst_6 = arith.constant dense<0.000000e+00> : vector<16x128xf32>
    %10 = tpu.matmul %8, %9, %cst_6 {dimension_numbers = #tpu.dot_dimension_numbers<[1], [0], [0], [1], [0, 0, 1, 1], [], []>, precision = #tpu.contract_precision<fp32>} : vector<16x128xf32>, vector<128x128xf32>, vector<16x128xf32> -> vector<16x128xf32>
    %c0_7 = arith.constant 0 : index
    %c0_8 = arith.constant 0 : index
    %11 = vector.load %arg6[%c0_7, %c0_8] : memref<16x128xf32, #tpu.memory_space<vmem>>, vector<16x128xf32>
    %12 = arith.mulf %10, %11 : vector<16x128xf32>
    %c0_9 = arith.constant 0 : index
    %c0_10 = arith.constant 0 : index
    %13 = vector.load %arg4[%c0_9, %c0_10] : memref<128x128xf32, #tpu.memory_space<vmem>>, vector<128x128xf32>
    %cst_11 = arith.constant dense<0.000000e+00> : vector<16x128xf32>
    %14 = tpu.matmul %12, %13, %cst_11 {dimension_numbers = #tpu.dot_dimension_numbers<[1], [0], [0], [1], [0, 0, 1, 1], [], []>, precision = #tpu.contract_precision<fp32>} : vector<16x128xf32>, vector<128x128xf32>, vector<16x128xf32> -> vector<16x128xf32>
    %15 = vector.extract_strided_slice %14 {offsets = [0, 0], sizes = [16, 64], strides = [1, 1]} : vector<16x128xf32> to vector<16x64xf32>
    %16 = tpu.transpose %15, [1, 0] : vector<16x64xf32> -> vector<64x16xf32>
    %17 = vector.extract_strided_slice %14 {offsets = [0, 64], sizes = [16, 64], strides = [1, 1]} : vector<16x128xf32> to vector<16x64xf32>
    %18 = tpu.transpose %17, [1, 0] : vector<16x64xf32> -> vector<64x16xf32>
    %19 = tpu.concatenate %16, %18 in 1 : vector<64x16xf32>, vector<64x16xf32> -> vector<64x32xf32>
    %c0_12 = arith.constant 0 : index
    %c0_13 = arith.constant 0 : index
    %20 = vector.load %arg5[%c0_12, %c0_13] : memref<32x32xf32, #tpu.memory_space<vmem>>, vector<32x32xf32>
    %cst_14 = arith.constant dense<0.000000e+00> : vector<64x32xf32>
    %21 = tpu.matmul %19, %20, %cst_14 {dimension_numbers = #tpu.dot_dimension_numbers<[1], [0], [0], [1], [0, 0, 1, 1], [], []>, precision = #tpu.contract_precision<fp32>} : vector<64x32xf32>, vector<32x32xf32>, vector<64x32xf32> -> vector<64x32xf32>
    %22 = vector.extract_strided_slice %21 {offsets = [0, 0], sizes = [64, 16], strides = [1, 1]} : vector<64x32xf32> to vector<64x16xf32>
    %23 = vector.extract_strided_slice %21 {offsets = [0, 16], sizes = [64, 16], strides = [1, 1]} : vector<64x32xf32> to vector<64x16xf32>
    %24 = arith.mulf %22, %22 : vector<64x16xf32>
    %25 = arith.mulf %23, %23 : vector<64x16xf32>
    %26 = arith.addf %24, %25 : vector<64x16xf32>
    %27 = math.sqrt %26 : vector<64x16xf32>
    %28 = vector.shape_cast %27 : vector<64x16xf32> to vector<4x16x16xf32>
    %c0_15 = arith.constant 0 : index
    %c0_16 = arith.constant 0 : index
    %c0_17 = arith.constant 0 : index
    %29 = vector.load %arg7[%c0_15, %c0_16, %c0_17] : memref<4x16x16xf32, #tpu.memory_space<vmem>>, vector<4x16x16xf32>
    tpu.vector_store %arg7[%c0_15, %c0_16, %c0_17], %28 {strides = array<i32>} : memref<4x16x16xf32, #tpu.memory_space<vmem>>, vector<4x16x16xf32>,
    return
  }
  func.func @transform_0(%arg0: i32) -> (i32, i32, i32) {
    %c0_i32 = arith.constant 0 : i32
    %c0_i32_0 = arith.constant 0 : i32
    %c0_i32_1 = arith.constant 0 : i32
    return %arg0, %c0_i32, %c0_i32_0 : i32, i32, i32
  }
  func.func @transform_1(%arg0: i32) -> (i32, i32) {
    %c0_i32 = arith.constant 0 : i32
    %c0_i32_0 = arith.constant 0 : i32
    %c0_i32_1 = arith.constant 0 : i32
    return %c0_i32, %c0_i32_0 : i32, i32
  }
  func.func @transform_2(%arg0: i32) -> (i32, i32) {
    %c0_i32 = arith.constant 0 : i32
    %c0_i32_0 = arith.constant 0 : i32
    %c0_i32_1 = arith.constant 0 : i32
    return %c0_i32, %c0_i32_0 : i32, i32
  }
  func.func @transform_3(%arg0: i32) -> (i32, i32) {
    %c0_i32 = arith.constant 0 : i32
    %c0_i32_0 = arith.constant 0 : i32
    %c0_i32_1 = arith.constant 0 : i32
    return %c0_i32, %c0_i32_0 : i32, i32
  }
  func.func @transform_4(%arg0: i32) -> (i32, i32) {
    %c0_i32 = arith.constant 0 : i32
    %c0_i32_0 = arith.constant 0 : i32
    %c0_i32_1 = arith.constant 0 : i32
    return %c0_i32, %c0_i32_0 : i32, i32
  }
  func.func @transform_5(%arg0: i32) -> (i32, i32) {
    %c0_i32 = arith.constant 0 : i32
    %c0_i32_0 = arith.constant 0 : i32
    %c0_i32_1 = arith.constant 0 : i32
    return %c0_i32, %c0_i32_0 : i32, i32
  }
  func.func @transform_6(%arg0: i32) -> (i32, i32, i32) {
    %c0_i32 = arith.constant 0 : i32
    %c0_i32_0 = arith.constant 0 : i32
    %c0_i32_1 = arith.constant 0 : i32
    return %arg0, %c0_i32, %c0_i32_0 : i32, i32, i32
  }
}

</mosaic_0001>

<llo_original>
// kernel: tpu_custom_call.1
$region0: #{tpu_custom_call.1}
  #allocation0 [shape = 'u32[]', space=smem, size = 0x4, offset = 0x4, fixed_abs, tag = 'smem constant byte address 0x4 - core index']
  #allocation1 [shape = 'u32[144,128]{1,0:T(1,128)}', space=vmem, size = 0x12000, scoped, tag = 'internal scratch']
  %s0 = inlined_call_operand.hbm [shape: f32[8,16,16], index: 0, kind: input, shape index: {}]
  %s1 = inlined_call_operand.hbm [shape: f32[16,32], index: 1, kind: input, shape index: {}]
  %s2 = inlined_call_operand.hbm [shape: f32[128,128], index: 2, kind: input, shape index: {}]
  %s3 = inlined_call_operand.hbm [shape: f32[128,128], index: 3, kind: input, shape index: {}]
  %s4 = inlined_call_operand.hbm [shape: f32[32,32], index: 4, kind: input, shape index: {}]
  %s5 = inlined_call_operand.hbm [shape: f32[16,128], index: 5, kind: input, shape index: {}]
  %s6 = inlined_call_operand.hbm [shape: f32[8,16,16], index: 6, kind: output, shape index: {}]
  %s7 = sld [smem:[#allocation0]]
  $region81: #{tpu_custom_call.1} parent=0
    _
  %s9 = ssub.s32 1, %s7
  %s10 = scalar_select 0, %s9, %s7
  $region1: #{tpu_custom_call.1} parent=0
    #allocation2 [shape = 'u8[65536]{0}', space=vmem, size = 0x10000, scoped, tag = 'input window, operand 0']
    #allocation3 [shape = 's32[2]{0}', space=sflag, size = 0x8, scoped, tag = 'scoped memory for tpu_custom_call.1']
    #allocation4 [shape = 's32[2]{0}', space=sflag, size = 0x8, scoped, tag = 'scoped memory for tpu_custom_call.1']
    #allocation5 [shape = 'u8[8192]{0}', space=vmem, size = 0x2000, scoped, tag = 'input window, operand 1, single buffered']
    #allocation6 [shape = 's32[1]{0}', space=sflag, size = 0x4, scoped, tag = 'scoped memory for tpu_custom_call.1']
    #allocation7 [shape = 'u8[65536]{0}', space=vmem, size = 0x10000, scoped, tag = 'input window, operand 2, single buffered']
    #allocation8 [shape = 'u8[65536]{0}', space=vmem, size = 0x10000, scoped, tag = 'input window, operand 3, single buffered']
    #allocation9 [shape = 's32[1]{0}', space=sflag, size = 0x4, scoped, tag = 'scoped memory for tpu_custom_call.1']
    #allocation10 [shape = 'u8[16384]{0}', space=vmem, size = 0x4000, scoped, tag = 'input window, operand 4, single buffered']
    #allocation11 [shape = 'u8[8192]{0}', space=vmem, size = 0x2000, scoped, tag = 'input window, operand 5, single buffered']
    #allocation12 [shape = 's32[1]{0}', space=sflag, size = 0x4, scoped, tag = 'scoped memory for tpu_custom_call.1']
    #allocation13 [shape = 'u8[65536]{0}', space=vmem, size = 0x10000, scoped, tag = 'output window, operand 0']
    %11 = vsyncpa [#allocation3], 0
    %s12 = scalar_lea.sflag [#allocation3], 1
    %13 = vsyncpa %s12, 0
    %14 = vsyncpa [#allocation6], 0
    %15 = vsyncpa [#allocation9], 0
    %16 = vsyncpa [#allocation12], 0
    %17 = vsyncpa [#allocation4], 0
    %s18 = scalar_lea.sflag [#allocation4], 1
    %19 = vsyncpa %s18, 0
    loop: start=0, step=1, limit=4
    $region2: #{tpu_custom_call.1} parent=1 // loop_pre_header
      _
    $region3: #{tpu_custom_call.1} parent=1 // loop_header
      %s21 = sphi 0, %s25
      %p22 = scmp.ge.s32.totalorder %s21, 4
      %s31 = sphi 0, %s33
      %s34 = sphi 0, %s31
      %s35 = sphi 0, %s34
      %s51 = sphi 0, %s35
      %s55 = sphi 0, %s55
      %s57 = sphi 0, %s55
      %s58 = sphi 0, %s57
      %s72 = sphi 0, %s58
      %s76 = sphi 0, %s76
      %s78 = sphi 0, %s76
      %s79 = sphi 0, %s78
      %s93 = sphi 0, %s79
      %s97 = sphi 0, %s97
      %s99 = sphi 0, %s97
      %s100 = sphi 0, %s99
      %s114 = sphi 0, %s100
      %s118 = sphi 0, %s118
      %s120 = sphi 0, %s118
      %s121 = sphi 0, %s120
      %s135 = sphi 0, %s121
      %s139 = sphi 0, %s139
      %s141 = sphi 0, %s139
      %s142 = sphi 0, %s141
      %s156 = sphi 0, %s142
      %s162 = sphi 0, %s164
      %s165 = sphi 0, %s162
      %s166 = sphi 0, %s165
      %s182 = sphi 0, %s166
    $region4: #{tpu_custom_call.1} parent=1 // loop_header_branch
      %24 = sbr.rel (%p22) target = $region8
    $region5: #{tpu_custom_call.1} parent=1 // loop_body
      %s26 = ssub.s32 %s21, 1
      %s27 = ssub.s32 %s21, 2
      %s28 = sadd.s32 %s21, 1
      %s29 = ssub.s32 %s21, %s28
      %p30 = scmp.eq.s32.totalorder %s29, 0
      %s32 = sadd.s32 %s31, 1
      %s33 = scalar_select %p30, %s31, %s32
      %p36 = pneg %p30
      %p37 = scmp.eq.s32.totalorder %s21, 1
      %p38 = por %p36, %p37
      %p39 = scmp.ne.s32.totalorder %s31, %s34
      %p40 = scmp.eq.s32.totalorder %s21, 0
      %p41 = por %p39, %p40
      %p42 = scmp.ne.s32.totalorder %s31, %s34
      %p43 = scmp.eq.s32.totalorder %s26, 1
      %p44 = por %p42, %p43
      %p45 = scmp.ne.s32.totalorder %s34, %s35
      %p46 = scmp.eq.s32.totalorder %s26, 0
      %p47 = por %p45, %p46
      %p48 = scmp.ne.s32.totalorder %s34, %s35
      %p49 = scmp.eq.s32.totalorder %s27, 1
      %p50 = por %p48, %p49
      %p52 = scmp.ne.s32.totalorder %s35, %s51
      %p53 = scmp.eq.s32.totalorder %s27, 0
      %p54 = por %p52, %p53
      %s56 = sadd.s32 %s55, 1
      %p59 = scmp.eq.s32.totalorder %s21, 1
      %p60 = scmp.ne.s32.totalorder %s55, %s57
      %p61 = scmp.eq.s32.totalorder %s21, 0
      %p62 = por %p60, %p61
      %p63 = scmp.ne.s32.totalorder %s55, %s57
      %p64 = scmp.eq.s32.totalorder %s26, 1
      %p65 = por %p63, %p64
      %p66 = scmp.ne.s32.totalorder %s57, %s58
      %p67 = scmp.eq.s32.totalorder %s26, 0
      %p68 = por %p66, %p67
      %p69 = scmp.ne.s32.totalorder %s57, %s58
      %p70 = scmp.eq.s32.totalorder %s27, 1
      %p71 = por %p69, %p70
      %p73 = scmp.ne.s32.totalorder %s58, %s72
      %p74 = scmp.eq.s32.totalorder %s27, 0
      %p75 = por %p73, %p74
      %s77 = sadd.s32 %s76, 1
      %p80 = scmp.eq.s32.totalorder %s21, 1
      %p81 = scmp.ne.s32.totalorder %s76, %s78
      %p82 = scmp.eq.s32.totalorder %s21, 0
      %p83 = por %p81, %p82
      %p84 = scmp.ne.s32.totalorder %s76, %s78
      %p85 = scmp.eq.s32.totalorder %s26, 1
      %p86 = por %p84, %p85
      %p87 = scmp.ne.s32.totalorder %s78, %s79
      %p88 = scmp.eq.s32.totalorder %s26, 0
      %p89 = por %p87, %p88
      %p90 = scmp.ne.s32.totalorder %s78, %s79
      %p91 = scmp.eq.s32.totalorder %s27, 1
      %p92 = por %p90, %p91
      %p94 = scmp.ne.s32.totalorder %s79, %s93
      %p95 = scmp.eq.s32.totalorder %s27, 0
      %p96 = por %p94, %p95
      %s98 = sadd.s32 %s97, 1
      %p101 = scmp.eq.s32.totalorder %s21, 1
      %p102 = scmp.ne.s32.totalorder %s97, %s99
      %p103 = scmp.eq.s32.totalorder %s21, 0
      %p104 = por %p102, %p103
      %p105 = scmp.ne.s32.totalorder %s97, %s99
      %p106 = scmp.eq.s32.totalorder %s26, 1
      %p107 = por %p105, %p106
      %p108 = scmp.ne.s32.totalorder %s99, %s100
      %p109 = scmp.eq.s32.totalorder %s26, 0
      %p110 = por %p108, %p109
      %p111 = scmp.ne.s32.totalorder %s99, %s100
      %p112 = scmp.eq.s32.totalorder %s27, 1
      %p113 = por %p111, %p112
      %p115 = scmp.ne.s32.totalorder %s100, %s114
      %p116 = scmp.eq.s32.totalorder %s27, 0
      %p117 = por %p115, %p116
      %s119 = sadd.s32 %s118, 1
      %p122 = scmp.eq.s32.totalorder %s21, 1
      %p123 = scmp.ne.s32.totalorder %s118, %s120
      %p124 = scmp.eq.s32.totalorder %s21, 0
      %p125 = por %p123, %p124
      %p126 = scmp.ne.s32.totalorder %s118, %s120
      %p127 = scmp.eq.s32.totalorder %s26, 1
      %p128 = por %p126, %p127
      %p129 = scmp.ne.s32.totalorder %s120, %s121
      %p130 = scmp.eq.s32.totalorder %s26, 0
      %p131 = por %p129, %p130
      %p132 = scmp.ne.s32.totalorder %s120, %s121
      %p133 = scmp.eq.s32.totalorder %s27, 1
      %p134 = por %p132, %p133
      %p136 = scmp.ne.s32.totalorder %s121, %s135
      %p137 = scmp.eq.s32.totalorder %s27, 0
      %p138 = por %p136, %p137
      %s140 = sadd.s32 %s139, 1
      %p143 = scmp.eq.s32.totalorder %s21, 1
      %p144 = scmp.ne.s32.totalorder %s139, %s141
      %p145 = scmp.eq.s32.totalorder %s21, 0
      %p146 = por %p144, %p145
      %p147 = scmp.ne.s32.totalorder %s139, %s141
      %p148 = scmp.eq.s32.totalorder %s26, 1
      %p149 = por %p147, %p148
      %p150 = scmp.ne.s32.totalorder %s141, %s142
      %p151 = scmp.eq.s32.totalorder %s26, 0
      %p152 = por %p150, %p151
      %p153 = scmp.ne.s32.totalorder %s141, %s142
      %p154 = scmp.eq.s32.totalorder %s27, 1
      %p155 = por %p153, %p154
      %p157 = scmp.ne.s32.totalorder %s142, %s156
      %p158 = scmp.eq.s32.totalorder %s27, 0
      %p159 = por %p157, %p158
      %s160 = ssub.s32 %s21, %s28
      %p161 = scmp.eq.s32.totalorder %s160, 0
      %s163 = sadd.s32 %s162, 1
      %s164 = scalar_select %p161, %s162, %s163
      %p167 = pneg %p161
      %p168 = scmp.eq.s32.totalorder %s21, 1
      %p169 = por %p167, %p168
      %p170 = scmp.ne.s32.totalorder %s162, %s165
      %p171 = scmp.eq.s32.totalorder %s21, 0
      %p172 = por %p170, %p171
      %p173 = scmp.ne.s32.totalorder %s162, %s165
      %p174 = scmp.eq.s32.totalorder %s26, 1
      %p175 = por %p173, %p174
      %p176 = scmp.ne.s32.totalorder %s165, %s166
      %p177 = scmp.eq.s32.totalorder %s26, 0
      %p178 = por %p176, %p177
      %p179 = scmp.ne.s32.totalorder %s165, %s166
      %p180 = scmp.eq.s32.totalorder %s27, 1
      %p181 = por %p179, %p180
      %p183 = scmp.ne.s32.totalorder %s166, %s182
      %p184 = scmp.eq.s32.totalorder %s27, 0
      %p185 = por %p183, %p184
      %p186 = scmp.le.s32.totalorder 1, %s21
      %p187 = scmp.lt.s32.totalorder %s21, 3
      %p188 = pnand %p186, %p187
      %p189 = pneg %p188
      // Predicated region
      $region9: #{tpu_custom_call.1} parent=5 // pred_check
        _
      $region10: #{tpu_custom_call.1} parent=5 // pred_check_branch
        %191 = sbr.rel (%p188) target = $region12
      $region11: #{tpu_custom_call.1} parent=5 // pred_region
        %s192 = ssub.s32 %s21, 1
        // Predicated region
        $region13: #{tpu_custom_call.1} parent=11 // pred_check
          %p193 = pneg %p68
        $region14: #{tpu_custom_call.1} parent=11 // pred_check_branch
          %195 = sbr.rel (%p193) target = $region16
        $region15: #{tpu_custom_call.1} parent=11 // pred_region
          %s197 = ssub.s32 256, 256
          %198 = vsyncadd [#allocation6], %s197
          %s199 = sshll.u32 [#allocation5], 4
          %s200 = int_to_ptr.vmem [resolvable:$true] %s199
          %205 = dma.hbm_to_vmem [thread:$0]  %s1, 256, %s200, [#allocation6], 128, 128, 8
        $region16: #{tpu_custom_call.1} parent=11 // pred_fallthru
          _
        // Predicated region
        $region17: #{tpu_custom_call.1} parent=11 // pred_check
          %p206 = pneg %p89
        $region18: #{tpu_custom_call.1} parent=11 // pred_check_branch
          %208 = sbr.rel (%p206) target = $region20
        $region19: #{tpu_custom_call.1} parent=11 // pred_region
          %s210 = ssub.s32 2048, 2048
          %211 = vsyncadd [#allocation6], %s210
          %s212 = sshll.u32 [#allocation7], 4
          %s213 = int_to_ptr.vmem [resolvable:$true] %s212
          %218 = dma.hbm_to_vmem [thread:$0]  %s2, 2048, %s213, [#allocation6], 128, 128, 8
        $region20: #{tpu_custom_call.1} parent=11 // pred_fallthru
          _
        // Predicated region
        $region21: #{tpu_custom_call.1} parent=11 // pred_check
          %p219 = pneg %p110
        $region22: #{tpu_custom_call.1} parent=11 // pred_check_branch
          %221 = sbr.rel (%p219) target = $region24
        $region23: #{tpu_custom_call.1} parent=11 // pred_region
          %s223 = ssub.s32 2048, 2048
          %224 = vsyncadd [#allocation9], %s223
          %s225 = sshll.u32 [#allocation8], 4
          %s226 = int_to_ptr.vmem [resolvable:$true] %s225
          %231 = dma.hbm_to_vmem [thread:$0]  %s3, 2048, %s226, [#allocation9], 128, 128, 8
        $region24: #{tpu_custom_call.1} parent=11 // pred_fallthru
          _
        // Predicated region
        $region25: #{tpu_custom_call.1} parent=11 // pred_check
          %p232 = pneg %p131
        $region26: #{tpu_custom_call.1} parent=11 // pred_check_branch
          %234 = sbr.rel (%p232) target = $region28
        $region27: #{tpu_custom_call.1} parent=11 // pred_region
          %s236 = ssub.s32 512, 512
          %237 = vsyncadd [#allocation9], %s236
          %s238 = sshll.u32 [#allocation10], 4
          %s239 = int_to_ptr.vmem [resolvable:$true] %s238
          %244 = dma.hbm_to_vmem [thread:$0]  %s4, 512, %s239, [#allocation9], 128, 128, 8
        $region28: #{tpu_custom_call.1} parent=11 // pred_fallthru
          _
        // Predicated region
        $region29: #{tpu_custom_call.1} parent=11 // pred_check
          %p245 = pneg %p152
        $region30: #{tpu_custom_call.1} parent=11 // pred_check_branch
          %247 = sbr.rel (%p245) target = $region32
        $region31: #{tpu_custom_call.1} parent=11 // pred_region
          %s249 = ssub.s32 256, 256
          %250 = vsyncadd [#allocation12], %s249
          %s251 = sshll.u32 [#allocation11], 4
          %s252 = int_to_ptr.vmem [resolvable:$true] %s251
          %257 = dma.hbm_to_vmem [thread:$0]  %s5, 256, %s252, [#allocation12], 128, 128, 8
        $region32: #{tpu_custom_call.1} parent=11 // pred_fallthru
          _
      $region12: #{tpu_custom_call.1} parent=5 // pred_fallthru
        _
      %p258 = scmp.lt.s32.totalorder %s21, 2
      // Predicated region
      $region33: #{tpu_custom_call.1} parent=5 // pred_check
        %p259 = pneg %p258
      $region34: #{tpu_custom_call.1} parent=5 // pred_check_branch
        %261 = sbr.rel (%p259) target = $region36
      $region35: #{tpu_custom_call.1} parent=5 // pred_region
        // Predicated region
        $region37: #{tpu_custom_call.1} parent=35 // pred_check
          %p262 = pneg %p41
        $region38: #{tpu_custom_call.1} parent=35 // pred_check_branch
          %264 = sbr.rel (%p262) target = $region40
        $region39: #{tpu_custom_call.1} parent=35 // pred_region
          %s265 = sand.u32 %s31, 1
          %s266 = scalar_lea.sflag [#allocation3], %s265
          %s267 = sand.u32 %s31, 1
          %s268 = smul.addr %s267, 64
          %s269 = scalar_lea.vmem [#allocation2], %s268
          %s270 = smul.u32 4, %s21
          %s272 = ssub.s32 1024, 1024
          %273 = vsyncadd %s266, %s272
          %s274 = smul.addr %s270, 2
          %s275 = smul.addr %s274, 128
          %s276 = scalar_lea.hbm %s0, %s275
          %s277 = sshll.u32 %s269, 4
          %s278 = int_to_ptr.vmem [resolvable:$true] %s277
          %283 = dma.hbm_to_vmem [thread:$0]  %s276, 1024, %s278, %s266, 128, 128, 8
        $region40: #{tpu_custom_call.1} parent=35 // pred_fallthru
          _
      $region36: #{tpu_custom_call.1} parent=5 // pred_fallthru
        _
      %p284 = scmp.le.s32.totalorder 1, %s21
      %p285 = scmp.lt.s32.totalorder %s21, 3
      %p286 = pnand %p284, %p285
      %p287 = pneg %p286
      // Predicated region
      $region41: #{tpu_custom_call.1} parent=5 // pred_check
        _
      $region42: #{tpu_custom_call.1} parent=5 // pred_check_branch
        %289 = sbr.rel (%p286) target = $region44
      $region43: #{tpu_custom_call.1} parent=5 // pred_region
        %s290 = ssub.s32 %s21, 1
        %s291 = sand.u32 %s34, 1
        %s292 = scalar_lea.sflag [#allocation3], %s291
        %s293 = sand.u32 %s34, 1
        %s294 = smul.addr %s293, 64
        %s295 = scalar_lea.vmem [#allocation2], %s294
        // Predicated region
        $region45: #{tpu_custom_call.1} parent=43 // pred_check
          %p296 = pneg %p47
        $region46: #{tpu_custom_call.1} parent=43 // pred_check_branch
          %298 = sbr.rel (%p296) target = $region48
        $region47: #{tpu_custom_call.1} parent=43 // pred_region
          %299 = dma.done %s292, 1024
        $region48: #{tpu_custom_call.1} parent=43 // pred_fallthru
          _
        // Predicated region
        $region49: #{tpu_custom_call.1} parent=43 // pred_check
          %p300 = pneg %p68
        $region50: #{tpu_custom_call.1} parent=43 // pred_check_branch
          %302 = sbr.rel (%p300) target = $region52
        $region51: #{tpu_custom_call.1} parent=43 // pred_region
          %303 = dma.done [#allocation6], 256
        $region52: #{tpu_custom_call.1} parent=43 // pred_fallthru
          _
        // Predicated region
        $region53: #{tpu_custom_call.1} parent=43 // pred_check
          %p304 = pneg %p89
        $region54: #{tpu_custom_call.1} parent=43 // pred_check_branch
          %306 = sbr.rel (%p304) target = $region56
        $region55: #{tpu_custom_call.1} parent=43 // pred_region
          %307 = dma.done [#allocation6], 2048
        $region56: #{tpu_custom_call.1} parent=43 // pred_fallthru
          _
        // Predicated region
        $region57: #{tpu_custom_call.1} parent=43 // pred_check
          %p308 = pneg %p110
        $region58: #{tpu_custom_call.1} parent=43 // pred_check_branch
          %310 = sbr.rel (%p308) target = $region60
        $region59: #{tpu_custom_call.1} parent=43 // pred_region
          %311 = dma.done [#allocation9], 2048
        $region60: #{tpu_custom_call.1} parent=43 // pred_fallthru
          _
        // Predicated region
        $region61: #{tpu_custom_call.1} parent=43 // pred_check
          %p312 = pneg %p131
        $region62: #{tpu_custom_call.1} parent=43 // pred_check_branch
          %314 = sbr.rel (%p312) target = $region64
        $region63: #{tpu_custom_call.1} parent=43 // pred_region
          %315 = dma.done [#allocation9], 512
        $region64: #{tpu_custom_call.1} parent=43 // pred_fallthru
          _
        // Predicated region
        $region65: #{tpu_custom_call.1} parent=43 // pred_check
          %p316 = pneg %p152
        $region66: #{tpu_custom_call.1} parent=43 // pred_check_branch
          %318 = sbr.rel (%p316) target = $region68
        $region67: #{tpu_custom_call.1} parent=43 // pred_region
          %319 = dma.done [#allocation12], 256
        $region68: #{tpu_custom_call.1} parent=43 // pred_fallthru
          _
        %s320 = sand.u32 %s34, 1
        %s321 = scalar_lea.sflag [#allocation3], %s320
        %s322 = sand.u32 %s34, 1
        %s323 = smul.addr %s322, 64
        %s324 = scalar_lea.vmem [#allocation2], %s323
        %p325 = pneg %p47
        %p326 = pneg %p44
        %p327 = pneg %p68
        %p328 = pneg %p65
        %p329 = pneg %p89
        %p330 = pneg %p86
        %p331 = pneg %p110
        %p332 = pneg %p107
        %p333 = pneg %p131
        %p334 = pneg %p128
        %p335 = pneg %p152
        %p336 = pneg %p149
        %p337 = pneg %p178
        %p338 = pneg %p175
        %s339 = sand.u32 %s165, 1
        %s340 = scalar_lea.sflag [#allocation4], %s339
        %s341 = sand.u32 %s165, 1
        %s342 = smul.addr %s341, 64
        %s343 = scalar_lea.vmem [#allocation13], %s342
        %s344 = smul.u32 4, %s26
        %s345 = smul.u32 4, %s26
        %v346 = vld [vmem:[%s295] sm:$0xff]
        %v347 = vld [vmem:[%s295 + $0x8] sm:$0xff]
        %v348 = vld [vmem:[%s295 + $0x10] sm:$0xff]
        %v349 = vld [vmem:[%s295 + $0x18] sm:$0xff]
        %v350 = vld [vmem:[%s295 + $0x20] sm:$0xff]
        %v351 = vld [vmem:[%s295 + $0x28] sm:$0xff]
        %v352 = vld [vmem:[%s295 + $0x30] sm:$0xff]
        %v353 = vld [vmem:[%s295 + $0x38] sm:$0xff]
        %v354 = vld [vmem:[#allocation5] sm:$0xff]
        %v355 = vld [vmem:[#allocation5 + $0x8] sm:$0xff]
        %vm356 = vcmask 130048
        %v358 = vsel %vm356, %v346, 0
        %v361 = vsel %vm356, %v347, 0
        %v364 = vsel %vm356, %v348, 0
        %v367 = vsel %vm356, %v349, 0
        %v370 = vsel %vm356, %v350, 0
        %v373 = vsel %vm356, %v351, 0
        %v376 = vsel %vm356, %v352, 0
        %v379 = vsel %vm356, %v353, 0
        %381 = vmatprep.subr.mxu0 0.0
        %v382 = vand.u32 %v354, 4294901760
        %383 = vmatpush1.msra.mxu0 %v382
        %384 = vmatprep.subr.mxu0 0.0
        %v385 = vand.u32 %v355, 4294901760
        %386 = vmatpush1.msra.mxu0 %v385
        %387 = vmatprep.subr.mxu0 0.0
        %388 = vmatpush1.msra.mxu0 0.0
        %389 = vmatprep.subr.mxu0 0.0
        %390 = vmatpush1.msra.mxu0 0.0
        %391 = vmatprep.subr.mxu0 0.0
        %392 = vmatpush1.msra.mxu0 0.0
        %393 = vmatprep.subr.mxu0 0.0
        %394 = vmatpush1.msra.mxu0 0.0
        %395 = vmatprep.subr.mxu0 0.0
        %396 = vmatpush1.msra.mxu0 0.0
        %397 = vmatprep.subr.mxu0 0.0
        %398 = vmatpush1.msra.mxu0 0.0
        %399 = vmatprep.subr.mxu0 0.0
        %400 = vmatpush1.msra.mxu0 0.0
        %401 = vmatprep.subr.mxu0 0.0
        %402 = vmatpush1.msra.mxu0 0.0
        %403 = vmatprep.subr.mxu0 0.0
        %404 = vmatpush1.msra.mxu0 0.0
        %405 = vmatprep.subr.mxu0 0.0
        %406 = vmatpush1.msra.mxu0 0.0
        %407 = vmatprep.subr.mxu0 0.0
        %408 = vmatpush1.msra.mxu0 0.0
        %409 = vmatprep.subr.mxu0 0.0
        %410 = vmatpush1.msra.mxu0 0.0
        %411 = vmatprep.subr.mxu0 0.0
        %412 = vmatpush1.msra.mxu0 0.0
        %413 = vmatprep.subr.mxu0 0.0
        %414 = vmatpush1.msra.mxu0 0.0
        %415 = vmatprep.subr.mxu0 0.0
        %416 = vmatpush1.msra.mxu0 0.0
        %417 = vmatprep.subr.mxu0 0.0
        %418 = vmatpush1.msra.mxu0 0.0
        %419 = vmatprep.subr.mxu0 0.0
        %420 = vmatpush1.msra.mxu0 0.0
        %421 = vmatprep.subr.mxu0 0.0
        %422 = vmatpush1.msra.mxu0 0.0
        %423 = vmatprep.subr.mxu0 0.0
        %424 = vmatpush1.msra.mxu0 0.0
        %425 = vmatprep.subr.mxu0 0.0
        %426 = vmatpush1.msra.mxu0 0.0
        %427 = vmatprep.subr.mxu0 0.0
        %428 = vmatpush1.msra.mxu0 0.0
        %429 = vmatprep.subr.mxu0 0.0
        %430 = vmatpush1.msra.mxu0 0.0
        %431 = vmatprep.subr.mxu0 0.0
        %432 = vmatpush1.msra.mxu0 0.0
        %433 = vmatprep.subr.mxu0 0.0
        %434 = vmatpush1.msra.mxu0 0.0
        %435 = vmatprep.subr.mxu0 0.0
        %436 = vmatpush1.msra.mxu0 0.0
        %437 = vmatprep.subr.mxu0 0.0
        %438 = vmatpush1.msra.mxu0 0.0
        %439 = vmatprep.subr.mxu0 0.0
        %440 = vmatpush1.msra.mxu0 0.0
        %441 = vmatprep.subr.mxu0 0.0
        %442 = vmatpush1.msra.mxu0 0.0
        %443 = vmatprep.subr.mxu0 0.0
        %444 = vmatpush1.msra.mxu0 0.0
        %445 = vmatprep.subr.mxu0 0.0
        %446 = vmatpush1.msra.mxu0 0.0
        %447 = vmatprep.mubr.f32.mxu0 0.0
        %v448 = vand.u32 %v358, 4294901760
        %v449 = vsub.f32 %v358, %v448
        %v450 = vand.u32 %v449, 4294901760
        %v451 = vsub.f32 %v449, %v450
        %v452 = vand.u32 %v451, 4294901760
        %453 = vmatmul.mubr.f32.gmra.mrb[0].mxu0 %v452
        %v454 = vpop.f32.mrb[0].mxu0
        %v455 = vadd.f32 0.0, %v454
        %v456 = vpop.f32.mrb[0].mxu0
        %457 = vmatprep.mubr.f32.mxu0 0.0
        %v458 = vand.u32 %v361, 4294901760
        %v459 = vsub.f32 %v361, %v458
        %v460 = vand.u32 %v459, 4294901760
        %v461 = vsub.f32 %v459, %v460
        %v462 = vand.u32 %v461, 4294901760
        %463 = vmatmul.mubr.f32.gmra.mrb[0].mxu0 %v462
        %v464 = vpop.f32.mrb[0].mxu0
        %v465 = vadd.f32 0.0, %v464
        %v466 = vpop.f32.mrb[0].mxu0
        %467 = vmatprep.mubr.f32.mxu0 0.0
        %v468 = vand.u32 %v364, 4294901760
        %v469 = vsub.f32 %v364, %v468
        %v470 = vand.u32 %v469, 4294901760
        %v471 = vsub.f32 %v469, %v470
        %v472 = vand.u32 %v471, 4294901760
        %473 = vmatmul.mubr.f32.gmra.mrb[0].mxu0 %v472
        %v474 = vpop.f32.mrb[0].mxu0
        %v475 = vadd.f32 0.0, %v474
        %v476 = vpop.f32.mrb[0].mxu0
        %477 = vmatprep.mubr.f32.mxu0 0.0
        %v478 = vand.u32 %v367, 4294901760
        %v479 = vsub.f32 %v367, %v478
        %v480 = vand.u32 %v479, 4294901760
        %v481 = vsub.f32 %v479, %v480
        %v482 = vand.u32 %v481, 4294901760
        %483 = vmatmul.mubr.f32.gmra.mrb[0].mxu0 %v482
        %v484 = vpop.f32.mrb[0].mxu0
        %v485 = vadd.f32 0.0, %v484
        %v486 = vpop.f32.mrb[0].mxu0
        %487 = vmatprep.mubr.f32.mxu0 0.0
        %v488 = vand.u32 %v370, 4294901760
        %v489 = vsub.f32 %v370, %v488
        %v490 = vand.u32 %v489, 4294901760
        %v491 = vsub.f32 %v489, %v490
        %v492 = vand.u32 %v491, 4294901760
        %493 = vmatmul.mubr.f32.gmra.mrb[0].mxu0 %v492
        %v494 = vpop.f32.mrb[0].mxu0
        %v495 = vadd.f32 0.0, %v494
        %v496 = vpop.f32.mrb[0].mxu0
        %497 = vmatprep.mubr.f32.mxu0 0.0
        %v498 = vand.u32 %v373, 4294901760
        %v499 = vsub.f32 %v373, %v498
        %v500 = vand.u32 %v499, 4294901760
        %v501 = vsub.f32 %v499, %v500
        %v502 = vand.u32 %v501, 4294901760
        %503 = vmatmul.mubr.f32.gmra.mrb[0].mxu0 %v502
        %v504 = vpop.f32.mrb[0].mxu0
        %v505 = vadd.f32 0.0, %v504
        %v506 = vpop.f32.mrb[0].mxu0
        %507 = vmatprep.mubr.f32.mxu0 0.0
        %v508 = vand.u32 %v376, 4294901760
        %v509 = vsub.f32 %v376, %v508
        %v510 = vand.u32 %v509, 4294901760
        %v511 = vsub.f32 %v509, %v510
        %v512 = vand.u32 %v511, 4294901760
        %513 = vmatmul.mubr.f32.gmra.mrb[0].mxu0 %v512
        %v514 = vpop.f32.mrb[0].mxu0
        %v515 = vadd.f32 0.0, %v514
        %v516 = vpop.f32.mrb[0].mxu0
        %517 = vmatprep.mubr.f32.mxu0 0.0
        %v518 = vand.u32 %v379, 4294901760
        %v519 = vsub.f32 %v379, %v518
        %v520 = vand.u32 %v519, 4294901760
        %v521 = vsub.f32 %v519, %v520
        %v522 = vand.u32 %v521, 4294901760
        %523 = vmatmul.mubr.f32.gmra.mrb[0].mxu0 %v522
        %v524 = vpop.f32.mrb[0].mxu0
        %v525 = vadd.f32 0.0, %v524
        %v526 = vpop.f32.mrb[0].mxu0
        %527 = vdwg.mxu0
        %528 = vmatprep.subr.mxu0 0.0
        %v529 = vand.u32 %v354, 4294901760
        %v530 = vsub.f32 %v354, %v529
        %v531 = vand.u32 %v530, 4294901760
        %v532 = vsub.f32 %v530, %v531
        %v533 = vand.u32 %v532, 4294901760
        %534 = vmatpush1.msra.mxu0 %v533
        %535 = vmatprep.subr.mxu0 0.0
        %v536 = vand.u32 %v355, 4294901760
        %v537 = vsub.f32 %v355, %v536
        %v538 = vand.u32 %v537, 4294901760
        %v539 = vsub.f32 %v537, %v538
        %v540 = vand.u32 %v539, 4294901760
        %541 = vmatpush1.msra.mxu0 %v540
        %542 = vmatprep.subr.mxu0 0.0
        %543 = vmatpush1.msra.mxu0 0.0
        %544 = vmatprep.subr.mxu0 0.0
        %545 = vmatpush1.msra.mxu0 0.0
        %546 = vmatprep.subr.mxu0 0.0
        %547 = vmatpush1.msra.mxu0 0.0
        %548 = vmatprep.subr.mxu0 0.0
        %549 = vmatpush1.msra.mxu0 0.0
        %550 = vmatprep.subr.mxu0 0.0
        %551 = vmatpush1.msra.mxu0 0.0
        %552 = vmatprep.subr.mxu0 0.0
        %553 = vmatpush1.msra.mxu0 0.0
        %554 = vmatprep.subr.mxu0 0.0
        %555 = vmatpush1.msra.mxu0 0.0
        %556 = vmatprep.subr.mxu0 0.0
        %557 = vmatpush1.msra.mxu0 0.0
        %558 = vmatprep.subr.mxu0 0.0
        %559 = vmatpush1.msra.mxu0 0.0
        %560 = vmatprep.subr.mxu0 0.0
        %561 = vmatpush1.msra.mxu0 0.0
        %562 = vmatprep.subr.mxu0 0.0
        %563 = vmatpush1.msra.mxu0 0.0
        %564 = vmatprep.subr.mxu0 0.0
        %565 = vmatpush1.msra.mxu0 0.0
        %566 = vmatprep.subr.mxu0 0.0
        %567 = vmatpush1.msra.mxu0 0.0
        %568 = vmatprep.subr.mxu0 0.0
        %569 = vmatpush1.msra.mxu0 0.0
        %570 = vmatprep.subr.mxu0 0.0
        %571 = vmatpush1.msra.mxu0 0.0
        %572 = vmatprep.subr.mxu0 0.0
        %573 = vmatpush1.msra.mxu0 0.0
        %574 = vmatprep.subr.mxu0 0.0
        %575 = vmatpush1.msra.mxu0 0.0
        %576 = vmatprep.subr.mxu0 0.0
        %577 = vmatpush1.msra.mxu0 0.0
        %578 = vmatprep.subr.mxu0 0.0
        %579 = vmatpush1.msra.mxu0 0.0
        %580 = vmatprep.subr.mxu0 0.0
        %581 = vmatpush1.msra.mxu0 0.0
        %582 = vmatprep.subr.mxu0 0.0
        %583 = vmatpush1.msra.mxu0 0.0
        %584 = vmatprep.subr.mxu0 0.0
        %585 = vmatpush1.msra.mxu0 0.0
        %586 = vmatprep.subr.mxu0 0.0
        %587 = vmatpush1.msra.mxu0 0.0
        %588 = vmatprep.subr.mxu0 0.0
        %589 = vmatpush1.msra.mxu0 0.0
        %590 = vmatprep.subr.mxu0 0.0
        %591 = vmatpush1.msra.mxu0 0.0
        %592 = vmatprep.subr.mxu0 0.0
        %593 = vmatpush1.msra.mxu0 0.0
        %594 = vmatprep.subr.mxu0 0.0
        %595 = vmatpush1.msra.mxu0 0.0
        %596 = vmatprep.subr.mxu0 0.0
        %597 = vmatpush1.msra.mxu0 0.0
        %598 = vmatprep.subr.mxu0 0.0
        %599 = vmatpush1.msra.mxu0 0.0
        %600 = vmatprep.subr.mxu0 0.0
        %601 = vmatpush1.msra.mxu0 0.0
        %602 = vmatprep.mubr.f32.mxu0 0.0
        %v603 = vand.u32 %v358, 4294901760
        %604 = vmatmul.mubr.f32.gmra.mrb[0].mxu0 %v603
        %v605 = vpop.f32.mrb[0].mxu0
        %v606 = vadd.f32 %v455, %v605
        %v607 = vpop.f32.mrb[0].mxu0
        %608 = vmatprep.mubr.f32.mxu0 0.0
        %v609 = vand.u32 %v361, 4294901760
        %610 = vmatmul.mubr.f32.gmra.mrb[0].mxu0 %v609
        %v611 = vpop.f32.mrb[0].mxu0
        %v612 = vadd.f32 %v465, %v611
        %v613 = vpop.f32.mrb[0].mxu0
        %614 = vmatprep.mubr.f32.mxu0 0.0
        %v615 = vand.u32 %v364, 4294901760
        %616 = vmatmul.mubr.f32.gmra.mrb[0].mxu0 %v615
        %v617 = vpop.f32.mrb[0].mxu0
        %v618 = vadd.f32 %v475, %v617
        %v619 = vpop.f32.mrb[0].mxu0
        %620 = vmatprep.mubr.f32.mxu0 0.0
        %v621 = vand.u32 %v367, 4294901760
        %622 = vmatmul.mubr.f32.gmra.mrb[0].mxu0 %v621
        %v623 = vpop.f32.mrb[0].mxu0
        %v624 = vadd.f32 %v485, %v623
        %v625 = vpop.f32.mrb[0].mxu0
        %626 = vmatprep.mubr.f32.mxu0 0.0
        %v627 = vand.u32 %v370, 4294901760
        %628 = vmatmul.mubr.f32.gmra.mrb[0].mxu0 %v627
        %v629 = vpop.f32.mrb[0].mxu0
        %v630 = vadd.f32 %v495, %v629
        %v631 = vpop.f32.mrb[0].mxu0
        %632 = vmatprep.mubr.f32.mxu0 0.0
        %v633 = vand.u32 %v373, 4294901760
        %634 = vmatmul.mubr.f32.gmra.mrb[0].mxu0 %v633
        %v635 = vpop.f32.mrb[0].mxu0
        %v636 = vadd.f32 %v505, %v635
        %v637 = vpop.f32.mrb[0].mxu0
        %638 = vmatprep.mubr.f32.mxu0 0.0
        %v639 = vand.u32 %v376, 4294901760
        %640 = vmatmul.mubr.f32.gmra.mrb[0].mxu0 %v639
        %v641 = vpop.f32.mrb[0].mxu0
        %v642 = vadd.f32 %v515, %v641
        %v643 = vpop.f32.mrb[0].mxu0
        %644 = vmatprep.mubr.f32.mxu0 0.0
        %v645 = vand.u32 %v379, 4294901760
        %646 = vmatmul.mubr.f32.gmra.mrb[0].mxu0 %v645
        %v647 = vpop.f32.mrb[0].mxu0
        %v648 = vadd.f32 %v525, %v647
        %v649 = vpop.f32.mrb[0].mxu0
        %650 = vdwg.mxu0
        %651 = vmatprep.subr.mxu0 0.0
        %v652 = vand.u32 %v354, 4294901760
        %v653 = vsub.f32 %v354, %v652
        %654 = vmatpush1.msra.mxu0 %v653
        %655 = vmatprep.subr.mxu0 0.0
        %v656 = vand.u32 %v355, 4294901760
        %v657 = vsub.f32 %v355, %v656
        %658 = vmatpush1.msra.mxu0 %v657
        %659 = vmatprep.subr.mxu0 0.0
        %660 = vmatpush1.msra.mxu0 0.0
        %661 = vmatprep.subr.mxu0 0.0
        %662 = vmatpush1.msra.mxu0 0.0
        %663 = vmatprep.subr.mxu0 0.0
        %664 = vmatpush1.msra.mxu0 0.0
        %665 = vmatprep.subr.mxu0 0.0
        %666 = vmatpush1.msra.mxu0 0.0
        %667 = vmatprep.subr.mxu0 0.0
        %668 = vmatpush1.msra.mxu0 0.0
        %669 = vmatprep.subr.mxu0 0.0
        %670 = vmatpush1.msra.mxu0 0.0
        %671 = vmatprep.subr.mxu0 0.0
        %672 = vmatpush1.msra.mxu0 0.0
        %673 = vmatprep.subr.mxu0 0.0
        %674 = vmatpush1.msra.mxu0 0.0
        %675 = vmatprep.subr.mxu0 0.0
        %676 = vmatpush1.msra.mxu0 0.0
        %677 = vmatprep.subr.mxu0 0.0
        %678 = vmatpush1.msra.mxu0 0.0
        %679 = vmatprep.subr.mxu0 0.0
        %680 = vmatpush1.msra.mxu0 0.0
        %681 = vmatprep.subr.mxu0 0.0
        %682 = vmatpush1.msra.mxu0 0.0
        %683 = vmatprep.subr.mxu0 0.0
        %684 = vmatpush1.msra.mxu0 0.0
        %685 = vmatprep.subr.mxu0 0.0
        %686 = vmatpush1.msra.mxu0 0.0
        %687 = vmatprep.subr.mxu0 0.0
        %688 = vmatpush1.msra.mxu0 0.0
        %689 = vmatprep.subr.mxu0 0.0
        %690 = vmatpush1.msra.mxu0 0.0
        %691 = vmatprep.subr.mxu0 0.0
        %692 = vmatpush1.msra.mxu0 0.0
        %693 = vmatprep.subr.mxu0 0.0
        %694 = vmatpush1.msra.mxu0 0.0
        %695 = vmatprep.subr.mxu0 0.0
        %696 = vmatpush1.msra.mxu0 0.0
        %697 = vmatprep.subr.mxu0 0.0
        %698 = vmatpush1.msra.mxu0 0.0
        %699 = vmatprep.subr.mxu0 0.0
        %700 = vmatpush1.msra.mxu0 0.0
        %701 = vmatprep.subr.mxu0 0.0
        %702 = vmatpush1.msra.mxu0 0.0
        %703 = vmatprep.subr.mxu0 0.0
        %704 = vmatpush1.msra.mxu0 0.0
        %705 = vmatprep.subr.mxu0 0.0
        %706 = vmatpush1.msra.mxu0 0.0
        %707 = vmatprep.subr.mxu0 0.0
        %708 = vmatpush1.msra.mxu0 0.0
        %709 = vmatprep.subr.mxu0 0.0
        %710 = vmatpush1.msra.mxu0 0.0
        %711 = vmatprep.subr.mxu0 0.0
        %712 = vmatpush1.msra.mxu0 0.0
        %713 = vmatprep.subr.mxu0 0.0
        %714 = vmatpush1.msra.mxu0 0.0
        %715 = vmatprep.subr.mxu0 0.0
        %716 = vmatpush1.msra.mxu0 0.0
        %717 = vmatprep.subr.mxu0 0.0
        %718 = vmatpush1.msra.mxu0 0.0
        %719 = vmatprep.mubr.f32.mxu0 0.0
        %v720 = vand.u32 %v358, 4294901760
        %v721 = vsub.f32 %v358, %v720
        %722 = vmatmul.mubr.f32.gmra.mrb[0].mxu0 %v721
        %v723 = vpop.f32.mrb[0].mxu0
        %v724 = vadd.f32 %v606, %v723
        %v725 = vpop.f32.mrb[0].mxu0
        %726 = vmatprep.mubr.f32.mxu0 0.0
        %v727 = vand.u32 %v361, 4294901760
        %v728 = vsub.f32 %v361, %v727
        %729 = vmatmul.mubr.f32.gmra.mrb[0].mxu0 %v728
        %v730 = vpop.f32.mrb[0].mxu0
        %v731 = vadd.f32 %v612, %v730
        %v732 = vpop.f32.mrb[0].mxu0
        %733 = vmatprep.mubr.f32.mxu0 0.0
        %v734 = vand.u32 %v364, 4294901760
        %v735 = vsub.f32 %v364, %v734
        %736 = vmatmul.mubr.f32.gmra.mrb[0].mxu0 %v735
        %v737 = vpop.f32.mrb[0].mxu0
        %v738 = vadd.f32 %v618, %v737
        %v739 = vpop.f32.mrb[0].mxu0
        %740 = vmatprep.mubr.f32.mxu0 0.0
        %v741 = vand.u32 %v367, 4294901760
        %v742 = vsub.f32 %v367, %v741
        %743 = vmatmul.mubr.f32.gmra.mrb[0].mxu0 %v742
        %v744 = vpop.f32.mrb[0].mxu0
        %v745 = vadd.f32 %v624, %v744
        %v746 = vpop.f32.mrb[0].mxu0
        %747 = vmatprep.mubr.f32.mxu0 0.0
        %v748 = vand.u32 %v370, 4294901760
        %v749 = vsub.f32 %v370, %v748
        %750 = vmatmul.mubr.f32.gmra.mrb[0].mxu0 %v749
        %v751 = vpop.f32.mrb[0].mxu0
        %v752 = vadd.f32 %v630, %v751
        %v753 = vpop.f32.mrb[0].mxu0
        %754 = vmatprep.mubr.f32.mxu0 0.0
        %v755 = vand.u32 %v373, 4294901760
        %v756 = vsub.f32 %v373, %v755
        %757 = vmatmul.mubr.f32.gmra.mrb[0].mxu0 %v756
        %v758 = vpop.f32.mrb[0].mxu0
        %v759 = vadd.f32 %v636, %v758
        %v760 = vpop.f32.mrb[0].mxu0
        %761 = vmatprep.mubr.f32.mxu0 0.0
        %v762 = vand.u32 %v376, 4294901760
        %v763 = vsub.f32 %v376, %v762
        %764 = vmatmul.mubr.f32.gmra.mrb[0].mxu0 %v763
        %v765 = vpop.f32.mrb[0].mxu0
        %v766 = vadd.f32 %v642, %v765
        %v767 = vpop.f32.mrb[0].mxu0
        %768 = vmatprep.mubr.f32.mxu0 0.0
        %v769 = vand.u32 %v379, 4294901760
        %v770 = vsub.f32 %v379, %v769
        %771 = vmatmul.mubr.f32.gmra.mrb[0].mxu0 %v770
        %v772 = vpop.f32.mrb[0].mxu0
        %v773 = vadd.f32 %v648, %v772
        %v774 = vpop.f32.mrb[0].mxu0
        %775 = vdwg.mxu0
        %776 = vmatprep.subr.mxu0 0.0
        %v777 = vand.u32 %v354, 4294901760
        %778 = vmatpush1.msra.mxu0 %v777
        %779 = vmatprep.subr.mxu0 0.0
        %v780 = vand.u32 %v355, 4294901760
        %781 = vmatpush1.msra.mxu0 %v780
        %782 = vmatprep.subr.mxu0 0.0
        %783 = vmatpush1.msra.mxu0 0.0
        %784 = vmatprep.subr.mxu0 0.0
        %785 = vmatpush1.msra.mxu0 0.0
        %786 = vmatprep.subr.mxu0 0.0
        %787 = vmatpush1.msra.mxu0 0.0
        %788 = vmatprep.subr.mxu0 0.0
        %789 = vmatpush1.msra.mxu0 0.0
        %790 = vmatprep.subr.mxu0 0.0
        %791 = vmatpush1.msra.mxu0 0.0
        %792 = vmatprep.subr.mxu0 0.0
        %793 = vmatpush1.msra.mxu0 0.0
        %794 = vmatprep.subr.mxu0 0.0
        %795 = vmatpush1.msra.mxu0 0.0
        %796 = vmatprep.subr.mxu0 0.0
        %797 = vmatpush1.msra.mxu0 0.0
        %798 = vmatprep.subr.mxu0 0.0
        %799 = vmatpush1.msra.mxu0 0.0
        %800 = vmatprep.subr.mxu0 0.0
        %801 = vmatpush1.msra.mxu0 0.0
        %802 = vmatprep.subr.mxu0 0.0
        %803 = vmatpush1.msra.mxu0 0.0
        %804 = vmatprep.subr.mxu0 0.0
        %805 = vmatpush1.msra.mxu0 0.0
        %806 = vmatprep.subr.mxu0 0.0
        %807 = vmatpush1.msra.mxu0 0.0
        %808 = vmatprep.subr.mxu0 0.0
        %809 = vmatpush1.msra.mxu0 0.0
        %810 = vmatprep.subr.mxu0 0.0
        %811 = vmatpush1.msra.mxu0 0.0
        %812 = vmatprep.subr.mxu0 0.0
        %813 = vmatpush1.msra.mxu0 0.0
        %814 = vmatprep.subr.mxu0 0.0
        %815 = vmatpush1.msra.mxu0 0.0
        %816 = vmatprep.subr.mxu0 0.0
        %817 = vmatpush1.msra.mxu0 0.0
        %818 = vmatprep.subr.mxu0 0.0
        %819 = vmatpush1.msra.mxu0 0.0
        %820 = vmatprep.subr.mxu0 0.0
        %821 = vmatpush1.msra.mxu0 0.0
        %822 = vmatprep.subr.mxu0 0.0
        %823 = vmatpush1.msra.mxu0 0.0
        %824 = vmatprep.subr.mxu0 0.0
        %825 = vmatpush1.msra.mxu0 0.0
        %826 = vmatprep.subr.mxu0 0.0
        %827 = vmatpush1.msra.mxu0 0.0
        %828 = vmatprep.subr.mxu0 0.0
        %829 = vmatpush1.msra.mxu0 0.0
        %830 = vmatprep.subr.mxu0 0.0
        %831 = vmatpush1.msra.mxu0 0.0
        %832 = vmatprep.subr.mxu0 0.0
        %833 = vmatpush1.msra.mxu0 0.0
        %834 = vmatprep.subr.mxu0 0.0
        %835 = vmatpush1.msra.mxu0 0.0
        %836 = vmatprep.subr.mxu0 0.0
        %837 = vmatpush1.msra.mxu0 0.0
        %838 = vmatprep.subr.mxu0 0.0
        %839 = vmatpush1.msra.mxu0 0.0
        %840 = vmatprep.subr.mxu0 0.0
        %841 = vmatpush1.msra.mxu0 0.0
        %842 = vmatprep.mubr.f32.mxu0 0.0
        %v843 = vand.u32 %v358, 4294901760
        %v844 = vsub.f32 %v358, %v843
        %v845 = vand.u32 %v844, 4294901760
        %846 = vmatmul.mubr.f32.gmra.mrb[0].mxu0 %v845
        %v847 = vpop.f32.mrb[0].mxu0
        %v848 = vadd.f32 %v724, %v847
        %v849 = vpop.f32.mrb[0].mxu0
        %850 = vmatprep.mubr.f32.mxu0 0.0
        %v851 = vand.u32 %v361, 4294901760
        %v852 = vsub.f32 %v361, %v851
        %v853 = vand.u32 %v852, 4294901760
        %854 = vmatmul.mubr.f32.gmra.mrb[0].mxu0 %v853
        %v855 = vpop.f32.mrb[0].mxu0
        %v856 = vadd.f32 %v731, %v855
        %v857 = vpop.f32.mrb[0].mxu0
        %858 = vmatprep.mubr.f32.mxu0 0.0
        %v859 = vand.u32 %v364, 4294901760
        %v860 = vsub.f32 %v364, %v859
        %v861 = vand.u32 %v860, 4294901760
        %862 = vmatmul.mubr.f32.gmra.mrb[0].mxu0 %v861
        %v863 = vpop.f32.mrb[0].mxu0
        %v864 = vadd.f32 %v738, %v863
        %v865 = vpop.f32.mrb[0].mxu0
        %866 = vmatprep.mubr.f32.mxu0 0.0
        %v867 = vand.u32 %v367, 4294901760
        %v868 = vsub.f32 %v367, %v867
        %v869 = vand.u32 %v868, 4294901760
        %870 = vmatmul.mubr.f32.gmra.mrb[0].mxu0 %v869
        %v871 = vpop.f32.mrb[0].mxu0
        %v872 = vadd.f32 %v745, %v871
        %v873 = vpop.f32.mrb[0].mxu0
        %874 = vmatprep.mubr.f32.mxu0 0.0
        %v875 = vand.u32 %v370, 4294901760
        %v876 = vsub.f32 %v370, %v875
        %v877 = vand.u32 %v876, 4294901760
        %878 = vmatmul.mubr.f32.gmra.mrb[0].mxu0 %v877
        %v879 = vpop.f32.mrb[0].mxu0
        %v880 = vadd.f32 %v752, %v879
        %v881 = vpop.f32.mrb[0].mxu0
        %882 = vmatprep.mubr.f32.mxu0 0.0
        %v883 = vand.u32 %v373, 4294901760
        %v884 = vsub.f32 %v373, %v883
        %v885 = vand.u32 %v884, 4294901760
        %886 = vmatmul.mubr.f32.gmra.mrb[0].mxu0 %v885
        %v887 = vpop.f32.mrb[0].mxu0
        %v888 = vadd.f32 %v759, %v887
        %v889 = vpop.f32.mrb[0].mxu0
        %890 = vmatprep.mubr.f32.mxu0 0.0
        %v891 = vand.u32 %v376, 4294901760
        %v892 = vsub.f32 %v376, %v891
        %v893 = vand.u32 %v892, 4294901760
        %894 = vmatmul.mubr.f32.gmra.mrb[0].mxu0 %v893
        %v895 = vpop.f32.mrb[0].mxu0
        %v896 = vadd.f32 %v766, %v895
        %v897 = vpop.f32.mrb[0].mxu0
        %898 = vmatprep.mubr.f32.mxu0 0.0
        %v899 = vand.u32 %v379, 4294901760
        %v900 = vsub.f32 %v379, %v899
        %v901 = vand.u32 %v900, 4294901760
        %902 = vmatmul.mubr.f32.gmra.mrb[0].mxu0 %v901
        %v903 = vpop.f32.mrb[0].mxu0
        %v904 = vadd.f32 %v773, %v903
        %v905 = vpop.f32.mrb[0].mxu0
        %906 = vdwg.mxu0
        %907 = vmatprep.subr.mxu0 0.0
        %v908 = vand.u32 %v354, 4294901760
        %v909 = vsub.f32 %v354, %v908
        %v910 = vand.u32 %v909, 4294901760
        %911 = vmatpush1.msra.mxu0 %v910
        %912 = vmatprep.subr.mxu0 0.0
        %v913 = vand.u32 %v355, 4294901760
        %v914 = vsub.f32 %v355, %v913
        %v915 = vand.u32 %v914, 4294901760
        %916 = vmatpush1.msra.mxu0 %v915
        %917 = vmatprep.subr.mxu0 0.0
        %918 = vmatpush1.msra.mxu0 0.0
        %919 = vmatprep.subr.mxu0 0.0
        %920 = vmatpush1.msra.mxu0 0.0
        %921 = vmatprep.subr.mxu0 0.0
        %922 = vmatpush1.msra.mxu0 0.0
        %923 = vmatprep.subr.mxu0 0.0
        %924 = vmatpush1.msra.mxu0 0.0
        %925 = vmatprep.subr.mxu0 0.0
        %926 = vmatpush1.msra.mxu0 0.0
        %927 = vmatprep.subr.mxu0 0.0
        %928 = vmatpush1.msra.mxu0 0.0
        %929 = vmatprep.subr.mxu0 0.0
        %930 = vmatpush1.msra.mxu0 0.0
        %931 = vmatprep.subr.mxu0 0.0
        %932 = vmatpush1.msra.mxu0 0.0
        %933 = vmatprep.subr.mxu0 0.0
        %934 = vmatpush1.msra.mxu0 0.0
        %935 = vmatprep.subr.mxu0 0.0
        %936 = vmatpush1.msra.mxu0 0.0
        %937 = vmatprep.subr.mxu0 0.0
        %938 = vmatpush1.msra.mxu0 0.0
        %939 = vmatprep.subr.mxu0 0.0
        %940 = vmatpush1.msra.mxu0 0.0
        %941 = vmatprep.subr.mxu0 0.0
        %942 = vmatpush1.msra.mxu0 0.0
        %943 = vmatprep.subr.mxu0 0.0
        %944 = vmatpush1.msra.mxu0 0.0
        %945 = vmatprep.subr.mxu0 0.0
        %946 = vmatpush1.msra.mxu0 0.0
        %947 = vmatprep.subr.mxu0 0.0
        %948 = vmatpush1.msra.mxu0 0.0
        %949 = vmatprep.subr.mxu0 0.0
        %950 = vmatpush1.msra.mxu0 0.0
        %951 = vmatprep.subr.mxu0 0.0
        %952 = vmatpush1.msra.mxu0 0.0
        %953 = vmatprep.subr.mxu0 0.0
        %954 = vmatpush1.msra.mxu0 0.0
        %955 = vmatprep.subr.mxu0 0.0
        %956 = vmatpush1.msra.mxu0 0.0
        %957 = vmatprep.subr.mxu0 0.0
        %958 = vmatpush1.msra.mxu0 0.0
        %959 = vmatprep.subr.mxu0 0.0
        %960 = vmatpush1.msra.mxu0 0.0
        %961 = vmatprep.subr.mxu0 0.0
        %962 = vmatpush1.msra.mxu0 0.0
        %963 = vmatprep.subr.mxu0 0.0
        %964 = vmatpush1.msra.mxu0 0.0
        %965 = vmatprep.subr.mxu0 0.0
        %966 = vmatpush1.msra.mxu0 0.0
        %967 = vmatprep.subr.mxu0 0.0
        %968 = vmatpush1.msra.mxu0 0.0
        %969 = vmatprep.subr.mxu0 0.0
        %970 = vmatpush1.msra.mxu0 0.0
        %971 = vmatprep.subr.mxu0 0.0
        %972 = vmatpush1.msra.mxu0 0.0
        %973 = vmatprep.subr.mxu0 0.0
        %974 = vmatpush1.msra.mxu0 0.0
        %975 = vmatprep.subr.mxu0 0.0
        %976 = vmatpush1.msra.mxu0 0.0
        %977 = vmatprep.mubr.f32.mxu0 0.0
        %v978 = vand.u32 %v358, 4294901760
        %979 = vmatmul.mubr.f32.gmra.mrb[0].mxu0 %v978
        %v980 = vpop.f32.mrb[0].mxu0
        %v981 = vadd.f32 %v848, %v980
        %v982 = vpop.f32.mrb[0].mxu0
        %983 = vmatprep.mubr.f32.mxu0 0.0
        %v984 = vand.u32 %v361, 4294901760
        %985 = vmatmul.mubr.f32.gmra.mrb[0].mxu0 %v984
        %v986 = vpop.f32.mrb[0].mxu0
        %v987 = vadd.f32 %v856, %v986
        %v988 = vpop.f32.mrb[0].mxu0
        %989 = vmatprep.mubr.f32.mxu0 0.0
        %v990 = vand.u32 %v364, 4294901760
        %991 = vmatmul.mubr.f32.gmra.mrb[0].mxu0 %v990
        %v992 = vpop.f32.mrb[0].mxu0
        %v993 = vadd.f32 %v864, %v992
        %v994 = vpop.f32.mrb[0].mxu0
        %995 = vmatprep.mubr.f32.mxu0 0.0
        %v996 = vand.u32 %v367, 4294901760
        %997 = vmatmul.mubr.f32.gmra.mrb[0].mxu0 %v996
        %v998 = vpop.f32.mrb[0].mxu0
        %v999 = vadd.f32 %v872, %v998
        %v1000 = vpop.f32.mrb[0].mxu0
        %1001 = vmatprep.mubr.f32.mxu0 0.0
        %v1002 = vand.u32 %v370, 4294901760
        %1003 = vmatmul.mubr.f32.gmra.mrb[0].mxu0 %v1002
        %v1004 = vpop.f32.mrb[0].mxu0
        %v1005 = vadd.f32 %v880, %v1004
        %v1006 = vpop.f32.mrb[0].mxu0
        %1007 = vmatprep.mubr.f32.mxu0 0.0
        %v1008 = vand.u32 %v373, 4294901760
        %1009 = vmatmul.mubr.f32.gmra.mrb[0].mxu0 %v1008
        %v1010 = vpop.f32.mrb[0].mxu0
        %v1011 = vadd.f32 %v888, %v1010
        %v1012 = vpop.f32.mrb[0].mxu0
        %1013 = vmatprep.mubr.f32.mxu0 0.0
        %v1014 = vand.u32 %v376, 4294901760
        %1015 = vmatmul.mubr.f32.gmra.mrb[0].mxu0 %v1014
        %v1016 = vpop.f32.mrb[0].mxu0
        %v1017 = vadd.f32 %v896, %v1016
        %v1018 = vpop.f32.mrb[0].mxu0
        %1019 = vmatprep.mubr.f32.mxu0 0.0
        %v1020 = vand.u32 %v379, 4294901760
        %1021 = vmatmul.mubr.f32.gmra.mrb[0].mxu0 %v1020
        %v1022 = vpop.f32.mrb[0].mxu0
        %v1023 = vadd.f32 %v904, %v1022
        %v1024 = vpop.f32.mrb[0].mxu0
        %1025 = vdwg.mxu0
        %1026 = vmatprep.subr.mxu0 0.0
        %v1027 = vand.u32 %v354, 4294901760
        %1028 = vmatpush1.msra.mxu0 %v1027
        %1029 = vmatprep.subr.mxu0 0.0
        %v1030 = vand.u32 %v355, 4294901760
        %1031 = vmatpush1.msra.mxu0 %v1030
        %1032 = vmatprep.subr.mxu0 0.0
        %1033 = vmatpush1.msra.mxu0 0.0
        %1034 = vmatprep.subr.mxu0 0.0
        %1035 = vmatpush1.msra.mxu0 0.0
        %1036 = vmatprep.subr.mxu0 0.0
        %1037 = vmatpush1.msra.mxu0 0.0
        %1038 = vmatprep.subr.mxu0 0.0
        %1039 = vmatpush1.msra.mxu0 0.0
        %1040 = vmatprep.subr.mxu0 0.0
        %1041 = vmatpush1.msra.mxu0 0.0
        %1042 = vmatprep.subr.mxu0 0.0
        %1043 = vmatpush1.msra.mxu0 0.0
        %1044 = vmatprep.subr.mxu0 0.0
        %1045 = vmatpush1.msra.mxu0 0.0
        %1046 = vmatprep.subr.mxu0 0.0
        %1047 = vmatpush1.msra.mxu0 0.0
        %1048 = vmatprep.subr.mxu0 0.0
        %1049 = vmatpush1.msra.mxu0 0.0
        %1050 = vmatprep.subr.mxu0 0.0
        %1051 = vmatpush1.msra.mxu0 0.0
        %1052 = vmatprep.subr.mxu0 0.0
        %1053 = vmatpush1.msra.mxu0 0.0
        %1054 = vmatprep.subr.mxu0 0.0
        %1055 = vmatpush1.msra.mxu0 0.0
        %1056 = vmatprep.subr.mxu0 0.0
        %1057 = vmatpush1.msra.mxu0 0.0
        %1058 = vmatprep.subr.mxu0 0.0
        %1059 = vmatpush1.msra.mxu0 0.0
        %1060 = vmatprep.subr.mxu0 0.0
        %1061 = vmatpush1.msra.mxu0 0.0
        %1062 = vmatprep.subr.mxu0 0.0
        %1063 = vmatpush1.msra.mxu0 0.0
        %1064 = vmatprep.subr.mxu0 0.0
        %1065 = vmatpush1.msra.mxu0 0.0
        %1066 = vmatprep.subr.mxu0 0.0
        %1067 = vmatpush1.msra.mxu0 0.0
        %1068 = vmatprep.subr.mxu0 0.0
        %1069 = vmatpush1.msra.mxu0 0.0
        %1070 = vmatprep.subr.mxu0 0.0
        %1071 = vmatpush1.msra.mxu0 0.0
        %1072 = vmatprep.subr.mxu0 0.0
        %1073 = vmatpush1.msra.mxu0 0.0
        %1074 = vmatprep.subr.mxu0 0.0
        %1075 = vmatpush1.msra.mxu0 0.0
        %1076 = vmatprep.subr.mxu0 0.0
        %1077 = vmatpush1.msra.mxu0 0.0
        %1078 = vmatprep.subr.mxu0 0.0
        %1079 = vmatpush1.msra.mxu0 0.0
        %1080 = vmatprep.subr.mxu0 0.0
        %1081 = vmatpush1.msra.mxu0 0.0
        %1082 = vmatprep.subr.mxu0 0.0
        %1083 = vmatpush1.msra.mxu0 0.0
        %1084 = vmatprep.subr.mxu0 0.0
        %1085 = vmatpush1.msra.mxu0 0.0
        %1086 = vmatprep.subr.mxu0 0.0
        %1087 = vmatpush1.msra.mxu0 0.0
        %1088 = vmatprep.subr.mxu0 0.0
        %1089 = vmatpush1.msra.mxu0 0.0
        %1090 = vmatprep.subr.mxu0 0.0
        %1091 = vmatpush1.msra.mxu0 0.0
        %1092 = vmatprep.mubr.f32.mxu0 0.0
        %v1093 = vand.u32 %v358, 4294901760
        %1094 = vmatmul.mubr.f32.gmra.mrb[0].mxu0 %v1093
        %v1095 = vpop.f32.mrb[0].mxu0
        %v1096 = vadd.f32 %v981, %v1095
        %v1097 = vpop.f32.mrb[0].mxu0
        %1098 = vmatprep.mubr.f32.mxu0 0.0
        %v1099 = vand.u32 %v361, 4294901760
        %1100 = vmatmul.mubr.f32.gmra.mrb[0].mxu0 %v1099
        %v1101 = vpop.f32.mrb[0].mxu0
        %v1102 = vadd.f32 %v987, %v1101
        %v1103 = vpop.f32.mrb[0].mxu0
        %1104 = vmatprep.mubr.f32.mxu0 0.0
        %v1105 = vand.u32 %v364, 4294901760
        %1106 = vmatmul.mubr.f32.gmra.mrb[0].mxu0 %v1105
        %v1107 = vpop.f32.mrb[0].mxu0
        %v1108 = vadd.f32 %v993, %v1107
        %v1109 = vpop.f32.mrb[0].mxu0
        %1110 = vmatprep.mubr.f32.mxu0 0.0
        %v1111 = vand.u32 %v367, 4294901760
        %1112 = vmatmul.mubr.f32.gmra.mrb[0].mxu0 %v1111
        %v1113 = vpop.f32.mrb[0].mxu0
        %v1114 = vadd.f32 %v999, %v1113
        %v1115 = vpop.f32.mrb[0].mxu0
        %1116 = vmatprep.mubr.f32.mxu0 0.0
        %v1117 = vand.u32 %v370, 4294901760
        %1118 = vmatmul.mubr.f32.gmra.mrb[0].mxu0 %v1117
        %v1119 = vpop.f32.mrb[0].mxu0
        %v1120 = vadd.f32 %v1005, %v1119
        %v1121 = vpop.f32.mrb[0].mxu0
        %1122 = vmatprep.mubr.f32.mxu0 0.0
        %v1123 = vand.u32 %v373, 4294901760
        %1124 = vmatmul.mubr.f32.gmra.mrb[0].mxu0 %v1123
        %v1125 = vpop.f32.mrb[0].mxu0
        %v1126 = vadd.f32 %v1011, %v1125
        %v1127 = vpop.f32.mrb[0].mxu0
        %1128 = vmatprep.mubr.f32.mxu0 0.0
        %v1129 = vand.u32 %v376, 4294901760
        %1130 = vmatmul.mubr.f32.gmra.mrb[0].mxu0 %v1129
        %v1131 = vpop.f32.mrb[0].mxu0
        %v1132 = vadd.f32 %v1017, %v1131
        %v1133 = vpop.f32.mrb[0].mxu0
        %1134 = vmatprep.mubr.f32.mxu0 0.0
        %v1135 = vand.u32 %v379, 4294901760
        %1136 = vmatmul.mubr.f32.gmra.mrb[0].mxu0 %v1135
        %v1137 = vpop.f32.mrb[0].mxu0
        %v1138 = vadd.f32 %v1023, %v1137
        %v1139 = vpop.f32.mrb[0].mxu0
        %1140 = vdwg.mxu0
        %1141 = vxpose.xlu0.b32.start [1/16] %v1096, 128
        %1142 = vxpose.xlu0.b32.cont [2/16] %v1102, 128
        %1143 = vxpose.xlu0.b32.cont [3/16] %v1108, 128
        %1144 = vxpose.xlu0.b32.cont [4/16] %v1114, 128
        %1145 = vxpose.xlu0.b32.cont [5/16] %v1120, 128
        %1146 = vxpose.xlu0.b32.cont [6/16] %v1126, 128
        %1147 = vxpose.xlu0.b32.cont [7/16] %v1132, 128
        %1148 = vxpose.xlu0.b32.cont [8/16] %v1138, 128
        %1149 = vxpose.xlu0.b32.cont [9/16] 0.0, 128
        %1150 = vxpose.xlu0.b32.cont [10/16] 0.0, 128
        %1151 = vxpose.xlu0.b32.cont [11/16] 0.0, 128
        %1152 = vxpose.xlu0.b32.cont [12/16] 0.0, 128
        %1153 = vxpose.xlu0.b32.cont [13/16] 0.0, 128
        %1154 = vxpose.xlu0.b32.cont [14/16] 0.0, 128
        %1155 = vxpose.xlu0.b32.cont [15/16] 0.0, 128
        %1156 = vxpose.xlu0.b32.end [16/16] 0.0, 128
        %v1157 = vpop.trf.xlu0
        %v1158 = vpop.trf.xlu0
        %v1159 = vpop.trf.xlu0
        %v1160 = vpop.trf.xlu0
        %v1161 = vpop.trf.xlu0
        %v1162 = vpop.trf.xlu0
        %v1163 = vpop.trf.xlu0
        %v1164 = vpop.trf.xlu0
        %v1165 = vpop.trf.xlu0
        %v1166 = vpop.trf.xlu0
        %v1167 = vpop.trf.xlu0
        %v1168 = vpop.trf.xlu0
        %v1169 = vpop.trf.xlu0
        %v1170 = vpop.trf.xlu0
        %v1171 = vpop.trf.xlu0
        %v1172 = vpop.trf.xlu0
        %1181 = vrot.lane.b32.xlu0 %v1096, 112
        %v1182 = vpop.permute.xlu0 %1181
        %1183 = vrot.lane.b32.xlu0 %v1102, 112
        %v1184 = vpop.permute.xlu0 %1183
        %1185 = vrot.lane.b32.xlu0 %v1108, 112
        %v1186 = vpop.permute.xlu0 %1185
        %1187 = vrot.lane.b32.xlu0 %v1114, 112
        %v1188 = vpop.permute.xlu0 %1187
        %1189 = vrot.lane.b32.xlu0 %v1120, 112
        %v1190 = vpop.permute.xlu0 %1189
        %1191 = vrot.lane.b32.xlu0 %v1126, 112
        %v1192 = vpop.permute.xlu0 %1191
        %1193 = vrot.lane.b32.xlu0 %v1132, 112
        %v1194 = vpop.permute.xlu0 %1193
        %1195 = vrot.lane.b32.xlu0 %v1138, 112
        %v1196 = vpop.permute.xlu0 %1195
        %1205 = vxpose.xlu0.b32.start [1/16] %v1182, 128
        %1206 = vxpose.xlu0.b32.cont [2/16] %v1184, 128
        %1207 = vxpose.xlu0.b32.cont [3/16] %v1186, 128
        %1208 = vxpose.xlu0.b32.cont [4/16] %v1188, 128
        %1209 = vxpose.xlu0.b32.cont [5/16] %v1190, 128
        %1210 = vxpose.xlu0.b32.cont [6/16] %v1192, 128
        %1211 = vxpose.xlu0.b32.cont [7/16] %v1194, 128
        %1212 = vxpose.xlu0.b32.cont [8/16] %v1196, 128
        %1213 = vxpose.xlu0.b32.cont [9/16] 0.0, 128
        %1214 = vxpose.xlu0.b32.cont [10/16] 0.0, 128
        %1215 = vxpose.xlu0.b32.cont [11/16] 0.0, 128
        %1216 = vxpose.xlu0.b32.cont [12/16] 0.0, 128
        %1217 = vxpose.xlu0.b32.cont [13/16] 0.0, 128
        %1218 = vxpose.xlu0.b32.cont [14/16] 0.0, 128
        %1219 = vxpose.xlu0.b32.cont [15/16] 0.0, 128
        %1220 = vxpose.xlu0.b32.end [16/16] 0.0, 128
        %v1221 = vpop.trf.xlu0
        %v1222 = vpop.trf.xlu0
        %v1223 = vpop.trf.xlu0
        %v1224 = vpop.trf.xlu0
        %v1225 = vpop.trf.xlu0
        %v1226 = vpop.trf.xlu0
        %v1227 = vpop.trf.xlu0
        %v1228 = vpop.trf.xlu0
        %v1229 = vpop.trf.xlu0
        %v1230 = vpop.trf.xlu0
        %v1231 = vpop.trf.xlu0
        %v1232 = vpop.trf.xlu0
        %v1233 = vpop.trf.xlu0
        %v1234 = vpop.trf.xlu0
        %v1235 = vpop.trf.xlu0
        %v1236 = vpop.trf.xlu0
        %1239 = vrot.lane.b32.xlu0 %v1221, 64
        %v1240 = vpop.permute.xlu0 %1239
        %1241 = vrot.lane.b32.xlu0 %v1222, 64
        %v1242 = vpop.permute.xlu0 %1241
        %vm1245 = vcmask 523264
        %v1246 = vsel %vm1245, %v1157, %v1240
        %v1247 = vsel %vm1245, %v1158, %v1242
        %v1248 = vld [vmem:[#allocation7] sm:$0xff]
        %v1249 = vld [vmem:[#allocation7 + $0x8] sm:$0xff]
        %v1250 = vld [vmem:[#allocation7 + $0x10] sm:$0xff]
        %v1251 = vld [vmem:[#allocation7 + $0x18] sm:$0xff]
        %v1252 = vld [vmem:[#allocation7 + $0x20] sm:$0xff]
        %v1253 = vld [vmem:[#allocation7 + $0x28] sm:$0xff]
        %v1254 = vld [vmem:[#allocation7 + $0x30] sm:$0xff]
        %v1255 = vld [vmem:[#allocation7 + $0x38] sm:$0xff]
        %v1256 = vld [vmem:[#allocation7 + $0x40] sm:$0xff]
        %v1257 = vld [vmem:[#allocation7 + $0x48] sm:$0xff]
        %v1258 = vld [vmem:[#allocation7 + $0x50] sm:$0xff]
        %v1259 = vld [vmem:[#allocation7 + $0x58] sm:$0xff]
        %v1260 = vld [vmem:[#allocation7 + $0x60] sm:$0xff]
        %v1261 = vld [vmem:[#allocation7 + $0x68] sm:$0xff]
        %v1262 = vld [vmem:[#allocation7 + $0x70] sm:$0xff]
        %v1263 = vld [vmem:[#allocation7 + $0x78] sm:$0xff]
        %1264 = vmatprep.subr.mxu0 0.0
        %v1265 = vand.u32 %v1248, 4294901760
        %1266 = vmatpush1.msra.mxu0 %v1265
        %1267 = vmatprep.subr.mxu0 0.0
        %v1268 = vand.u32 %v1249, 4294901760
        %1269 = vmatpush1.msra.mxu0 %v1268
        %1270 = vmatprep.subr.mxu0 0.0
        %v1271 = vand.u32 %v1250, 4294901760
        %1272 = vmatpush1.msra.mxu0 %v1271
        %1273 = vmatprep.subr.mxu0 0.0
        %v1274 = vand.u32 %v1251, 4294901760
        %1275 = vmatpush1.msra.mxu0 %v1274
        %1276 = vmatprep.subr.mxu0 0.0
        %v1277 = vand.u32 %v1252, 4294901760
        %1278 = vmatpush1.msra.mxu0 %v1277
        %1279 = vmatprep.subr.mxu0 0.0
        %v1280 = vand.u32 %v1253, 4294901760
        %1281 = vmatpush1.msra.mxu0 %v1280
        %1282 = vmatprep.subr.mxu0 0.0
        %v1283 = vand.u32 %v1254, 4294901760
        %1284 = vmatpush1.msra.mxu0 %v1283
        %1285 = vmatprep.subr.mxu0 0.0
        %v1286 = vand.u32 %v1255, 4294901760
        %1287 = vmatpush1.msra.mxu0 %v1286
        %1288 = vmatprep.subr.mxu0 0.0
        %v1289 = vand.u32 %v1256, 4294901760
        %1290 = vmatpush1.msra.mxu0 %v1289
        %1291 = vmatprep.subr.mxu0 0.0
        %v1292 = vand.u32 %v1257, 4294901760
        %1293 = vmatpush1.msra.mxu0 %v1292
        %1294 = vmatprep.subr.mxu0 0.0
        %v1295 = vand.u32 %v1258, 4294901760
        %1296 = vmatpush1.msra.mxu0 %v1295
        %1297 = vmatprep.subr.mxu0 0.0
        %v1298 = vand.u32 %v1259, 4294901760
        %1299 = vmatpush1.msra.mxu0 %v1298
        %1300 = vmatprep.subr.mxu0 0.0
        %v1301 = vand.u32 %v1260, 4294901760
        %1302 = vmatpush1.msra.mxu0 %v1301
        %1303 = vmatprep.subr.mxu0 0.0
        %v1304 = vand.u32 %v1261, 4294901760
        %1305 = vmatpush1.msra.mxu0 %v1304
        %1306 = vmatprep.subr.mxu0 0.0
        %v1307 = vand.u32 %v1262, 4294901760
        %1308 = vmatpush1.msra.mxu0 %v1307
        %1309 = vmatprep.subr.mxu0 0.0
        %v1310 = vand.u32 %v1263, 4294901760
        %1311 = vmatpush1.msra.mxu0 %v1310
        %1312 = vmatprep.subr.mxu0 0.0
        %1313 = vmatpush1.msra.mxu0 0.0
        %1314 = vmatprep.subr.mxu0 0.0
        %1315 = vmatpush1.msra.mxu0 0.0
        %1316 = vmatprep.subr.mxu0 0.0
        %1317 = vmatpush1.msra.mxu0 0.0
        %1318 = vmatprep.subr.mxu0 0.0
        %1319 = vmatpush1.msra.mxu0 0.0
        %1320 = vmatprep.subr.mxu0 0.0
        %1321 = vmatpush1.msra.mxu0 0.0
        %1322 = vmatprep.subr.mxu0 0.0
        %1323 = vmatpush1.msra.mxu0 0.0
        %1324 = vmatprep.subr.mxu0 0.0
        %1325 = vmatpush1.msra.mxu0 0.0
        %1326 = vmatprep.subr.mxu0 0.0
        %1327 = vmatpush1.msra.mxu0 0.0
        %1328 = vmatprep.subr.mxu0 0.0
        %1329 = vmatpush1.msra.mxu0 0.0
        %1330 = vmatprep.subr.mxu0 0.0
        %1331 = vmatpush1.msra.mxu0 0.0
        %1332 = vmatprep.subr.mxu0 0.0
        %1333 = vmatpush1.msra.mxu0 0.0
        %1334 = vmatprep.subr.mxu0 0.0
        %1335 = vmatpush1.msra.mxu0 0.0
        %1336 = vmatprep.subr.mxu0 0.0
        %1337 = vmatpush1.msra.mxu0 0.0
        %1338 = vmatprep.subr.mxu0 0.0
        %1339 = vmatpush1.msra.mxu0 0.0
        %1340 = vmatprep.subr.mxu0 0.0
        %1341 = vmatpush1.msra.mxu0 0.0
        %1342 = vmatprep.subr.mxu0 0.0
        %1343 = vmatpush1.msra.mxu0 0.0
        %1344 = vmatprep.mubr.f32.mxu0 0.0
        %v1345 = vand.u32 %v1246, 4294901760
        %v1346 = vsub.f32 %v1246, %v1345
        %v1347 = vand.u32 %v1346, 4294901760
        %v1348 = vsub.f32 %v1346, %v1347
        %v1349 = vand.u32 %v1348, 4294901760
        %1350 = vmatmul.mubr.f32.gmra.mrb[0].mxu0 %v1349
        %v1351 = vpop.f32.mrb[0].mxu0
        %v1352 = vadd.f32 0.0, %v1351
        %v1353 = vpop.f32.mrb[0].mxu0
        %1354 = vmatprep.mubr.f32.mxu0 0.0
        %v1355 = vand.u32 %v1247, 4294901760
        %v1356 = vsub.f32 %v1247, %v1355
        %v1357 = vand.u32 %v1356, 4294901760
        %v1358 = vsub.f32 %v1356, %v1357
        %v1359 = vand.u32 %v1358, 4294901760
        %1360 = vmatmul.mubr.f32.gmra.mrb[0].mxu0 %v1359
        %v1361 = vpop.f32.mrb[0].mxu0
        %v1362 = vadd.f32 0.0, %v1361
        %v1363 = vpop.f32.mrb[0].mxu0
        %1364 = vdwg.mxu0
        %1365 = vmatprep.subr.mxu0 0.0
        %v1366 = vand.u32 %v1248, 4294901760
        %v1367 = vsub.f32 %v1248, %v1366
        %v1368 = vand.u32 %v1367, 4294901760
        %v1369 = vsub.f32 %v1367, %v1368
        %v1370 = vand.u32 %v1369, 4294901760
        %1371 = vmatpush1.msra.mxu0 %v1370
        %1372 = vmatprep.subr.mxu0 0.0
        %v1373 = vand.u32 %v1249, 4294901760
        %v1374 = vsub.f32 %v1249, %v1373
        %v1375 = vand.u32 %v1374, 4294901760
        %v1376 = vsub.f32 %v1374, %v1375
        %v1377 = vand.u32 %v1376, 4294901760
        %1378 = vmatpush1.msra.mxu0 %v1377
        %1379 = vmatprep.subr.mxu0 0.0
        %v1380 = vand.u32 %v1250, 4294901760
        %v1381 = vsub.f32 %v1250, %v1380
        %v1382 = vand.u32 %v1381, 4294901760
        %v1383 = vsub.f32 %v1381, %v1382
        %v1384 = vand.u32 %v1383, 4294901760
        %1385 = vmatpush1.msra.mxu0 %v1384
        %1386 = vmatprep.subr.mxu0 0.0
        %v1387 = vand.u32 %v1251, 4294901760
        %v1388 = vsub.f32 %v1251, %v1387
        %v1389 = vand.u32 %v1388, 4294901760
        %v1390 = vsub.f32 %v1388, %v1389
        %v1391 = vand.u32 %v1390, 4294901760
        %1392 = vmatpush1.msra.mxu0 %v1391
        %1393 = vmatprep.subr.mxu0 0.0
        %v1394 = vand.u32 %v1252, 4294901760
        %v1395 = vsub.f32 %v1252, %v1394
        %v1396 = vand.u32 %v1395, 4294901760
        %v1397 = vsub.f32 %v1395, %v1396
        %v1398 = vand.u32 %v1397, 4294901760
        %1399 = vmatpush1.msra.mxu0 %v1398
        %1400 = vmatprep.subr.mxu0 0.0
        %v1401 = vand.u32 %v1253, 4294901760
        %v1402 = vsub.f32 %v1253, %v1401
        %v1403 = vand.u32 %v1402, 4294901760
        %v1404 = vsub.f32 %v1402, %v1403
        %v1405 = vand.u32 %v1404, 4294901760
        %1406 = vmatpush1.msra.mxu0 %v1405
        %1407 = vmatprep.subr.mxu0 0.0
        %v1408 = vand.u32 %v1254, 4294901760
        %v1409 = vsub.f32 %v1254, %v1408
        %v1410 = vand.u32 %v1409, 4294901760
        %v1411 = vsub.f32 %v1409, %v1410
        %v1412 = vand.u32 %v1411, 4294901760
        %1413 = vmatpush1.msra.mxu0 %v1412
        %1414 = vmatprep.subr.mxu0 0.0
        %v1415 = vand.u32 %v1255, 4294901760
        %v1416 = vsub.f32 %v1255, %v1415
        %v1417 = vand.u32 %v1416, 4294901760
        %v1418 = vsub.f32 %v1416, %v1417
        %v1419 = vand.u32 %v1418, 4294901760
        %1420 = vmatpush1.msra.mxu0 %v1419
        %1421 = vmatprep.subr.mxu0 0.0
        %v1422 = vand.u32 %v1256, 4294901760
        %v1423 = vsub.f32 %v1256, %v1422
        %v1424 = vand.u32 %v1423, 4294901760
        %v1425 = vsub.f32 %v1423, %v1424
        %v1426 = vand.u32 %v1425, 4294901760
        %1427 = vmatpush1.msra.mxu0 %v1426
        %1428 = vmatprep.subr.mxu0 0.0
        %v1429 = vand.u32 %v1257, 4294901760
        %v1430 = vsub.f32 %v1257, %v1429
        %v1431 = vand.u32 %v1430, 4294901760
        %v1432 = vsub.f32 %v1430, %v1431
        %v1433 = vand.u32 %v1432, 4294901760
        %1434 = vmatpush1.msra.mxu0 %v1433
        %1435 = vmatprep.subr.mxu0 0.0
        %v1436 = vand.u32 %v1258, 4294901760
        %v1437 = vsub.f32 %v1258, %v1436
        %v1438 = vand.u32 %v1437, 4294901760
        %v1439 = vsub.f32 %v1437, %v1438
        %v1440 = vand.u32 %v1439, 4294901760
        %1441 = vmatpush1.msra.mxu0 %v1440
        %1442 = vmatprep.subr.mxu0 0.0
        %v1443 = vand.u32 %v1259, 4294901760
        %v1444 = vsub.f32 %v1259, %v1443
        %v1445 = vand.u32 %v1444, 4294901760
        %v1446 = vsub.f32 %v1444, %v1445
        %v1447 = vand.u32 %v1446, 4294901760
        %1448 = vmatpush1.msra.mxu0 %v1447
        %1449 = vmatprep.subr.mxu0 0.0
        %v1450 = vand.u32 %v1260, 4294901760
        %v1451 = vsub.f32 %v1260, %v1450
        %v1452 = vand.u32 %v1451, 4294901760
        %v1453 = vsub.f32 %v1451, %v1452
        %v1454 = vand.u32 %v1453, 4294901760
        %1455 = vmatpush1.msra.mxu0 %v1454
        %1456 = vmatprep.subr.mxu0 0.0
        %v1457 = vand.u32 %v1261, 4294901760
        %v1458 = vsub.f32 %v1261, %v1457
        %v1459 = vand.u32 %v1458, 4294901760
        %v1460 = vsub.f32 %v1458, %v1459
        %v1461 = vand.u32 %v1460, 4294901760
        %1462 = vmatpush1.msra.mxu0 %v1461
        %1463 = vmatprep.subr.mxu0 0.0
        %v1464 = vand.u32 %v1262, 4294901760
        %v1465 = vsub.f32 %v1262, %v1464
        %v1466 = vand.u32 %v1465, 4294901760
        %v1467 = vsub.f32 %v1465, %v1466
        %v1468 = vand.u32 %v1467, 4294901760
        %1469 = vmatpush1.msra.mxu0 %v1468
        %1470 = vmatprep.subr.mxu0 0.0
        %v1471 = vand.u32 %v1263, 4294901760
        %v1472 = vsub.f32 %v1263, %v1471
        %v1473 = vand.u32 %v1472, 4294901760
        %v1474 = vsub.f32 %v1472, %v1473
        %v1475 = vand.u32 %v1474, 4294901760
        %1476 = vmatpush1.msra.mxu0 %v1475
        %1477 = vmatprep.subr.mxu0 0.0
        %1478 = vmatpush1.msra.mxu0 0.0
        %1479 = vmatprep.subr.mxu0 0.0
        %1480 = vmatpush1.msra.mxu0 0.0
        %1481 = vmatprep.subr.mxu0 0.0
        %1482 = vmatpush1.msra.mxu0 0.0
        %1483 = vmatprep.subr.mxu0 0.0
        %1484 = vmatpush1.msra.mxu0 0.0
        %1485 = vmatprep.subr.mxu0 0.0
        %1486 = vmatpush1.msra.mxu0 0.0
        %1487 = vmatprep.subr.mxu0 0.0
        %1488 = vmatpush1.msra.mxu0 0.0
        %1489 = vmatprep.subr.mxu0 0.0
        %1490 = vmatpush1.msra.mxu0 0.0
        %1491 = vmatprep.subr.mxu0 0.0
        %1492 = vmatpush1.msra.mxu0 0.0
        %1493 = vmatprep.subr.mxu0 0.0
        %1494 = vmatpush1.msra.mxu0 0.0
        %1495 = vmatprep.subr.mxu0 0.0
        %1496 = vmatpush1.msra.mxu0 0.0
        %1497 = vmatprep.subr.mxu0 0.0
        %1498 = vmatpush1.msra.mxu0 0.0
        %1499 = vmatprep.subr.mxu0 0.0
        %1500 = vmatpush1.msra.mxu0 0.0
        %1501 = vmatprep.subr.mxu0 0.0
        %1502 = vmatpush1.msra.mxu0 0.0
        %1503 = vmatprep.subr.mxu0 0.0
        %1504 = vmatpush1.msra.mxu0 0.0
        %1505 = vmatprep.subr.mxu0 0.0
        %1506 = vmatpush1.msra.mxu0 0.0
        %1507 = vmatprep.subr.mxu0 0.0
        %1508 = vmatpush1.msra.mxu0 0.0
        %1509 = vmatprep.mubr.f32.mxu0 0.0
        %v1510 = vand.u32 %v1246, 4294901760
        %1511 = vmatmul.mubr.f32.gmra.mrb[0].mxu0 %v1510
        %v1512 = vpop.f32.mrb[0].mxu0
        %v1513 = vadd.f32 %v1352, %v1512
        %v1514 = vpop.f32.mrb[0].mxu0
        %1515 = vmatprep.mubr.f32.mxu0 0.0
        %v1516 = vand.u32 %v1247, 4294901760
        %1517 = vmatmul.mubr.f32.gmra.mrb[0].mxu0 %v1516
        %v1518 = vpop.f32.mrb[0].mxu0
        %v1519 = vadd.f32 %v1362, %v1518
        %v1520 = vpop.f32.mrb[0].mxu0
        %1521 = vdwg.mxu0
        %1522 = vmatprep.subr.mxu0 0.0
        %v1523 = vand.u32 %v1248, 4294901760
        %v1524 = vsub.f32 %v1248, %v1523
        %1525 = vmatpush1.msra.mxu0 %v1524
        %1526 = vmatprep.subr.mxu0 0.0
        %v1527 = vand.u32 %v1249, 4294901760
        %v1528 = vsub.f32 %v1249, %v1527
        %1529 = vmatpush1.msra.mxu0 %v1528
        %1530 = vmatprep.subr.mxu0 0.0
        %v1531 = vand.u32 %v1250, 4294901760
        %v1532 = vsub.f32 %v1250, %v1531
        %1533 = vmatpush1.msra.mxu0 %v1532
        %1534 = vmatprep.subr.mxu0 0.0
        %v1535 = vand.u32 %v1251, 4294901760
        %v1536 = vsub.f32 %v1251, %v1535
        %1537 = vmatpush1.msra.mxu0 %v1536
        %1538 = vmatprep.subr.mxu0 0.0
        %v1539 = vand.u32 %v1252, 4294901760
        %v1540 = vsub.f32 %v1252, %v1539
        %1541 = vmatpush1.msra.mxu0 %v1540
        %1542 = vmatprep.subr.mxu0 0.0
        %v1543 = vand.u32 %v1253, 4294901760
        %v1544 = vsub.f32 %v1253, %v1543
        %1545 = vmatpush1.msra.mxu0 %v1544
        %1546 = vmatprep.subr.mxu0 0.0
        %v1547 = vand.u32 %v1254, 4294901760
        %v1548 = vsub.f32 %v1254, %v1547
        %1549 = vmatpush1.msra.mxu0 %v1548
        %1550 = vmatprep.subr.mxu0 0.0
        %v1551 = vand.u32 %v1255, 4294901760
        %v1552 = vsub.f32 %v1255, %v1551
        %1553 = vmatpush1.msra.mxu0 %v1552
        %1554 = vmatprep.subr.mxu0 0.0
        %v1555 = vand.u32 %v1256, 4294901760
        %v1556 = vsub.f32 %v1256, %v1555
        %1557 = vmatpush1.msra.mxu0 %v1556
        %1558 = vmatprep.subr.mxu0 0.0
        %v1559 = vand.u32 %v1257, 4294901760
        %v1560 = vsub.f32 %v1257, %v1559
        %1561 = vmatpush1.msra.mxu0 %v1560
        %1562 = vmatprep.subr.mxu0 0.0
        %v1563 = vand.u32 %v1258, 4294901760
        %v1564 = vsub.f32 %v1258, %v1563
        %1565 = vmatpush1.msra.mxu0 %v1564
        %1566 = vmatprep.subr.mxu0 0.0
        %v1567 = vand.u32 %v1259, 4294901760
        %v1568 = vsub.f32 %v1259, %v1567
        %1569 = vmatpush1.msra.mxu0 %v1568
        %1570 = vmatprep.subr.mxu0 0.0
        %v1571 = vand.u32 %v1260, 4294901760
        %v1572 = vsub.f32 %v1260, %v1571
        %1573 = vmatpush1.msra.mxu0 %v1572
        %1574 = vmatprep.subr.mxu0 0.0
        %v1575 = vand.u32 %v1261, 4294901760
        %v1576 = vsub.f32 %v1261, %v1575
        %1577 = vmatpush1.msra.mxu0 %v1576
        %1578 = vmatprep.subr.mxu0 0.0
        %v1579 = vand.u32 %v1262, 4294901760
        %v1580 = vsub.f32 %v1262, %v1579
        %1581 = vmatpush1.msra.mxu0 %v1580
        %1582 = vmatprep.subr.mxu0 0.0
        %v1583 = vand.u32 %v1263, 4294901760
        %v1584 = vsub.f32 %v1263, %v1583
        %1585 = vmatpush1.msra.mxu0 %v1584
        %1586 = vmatprep.subr.mxu0 0.0
        %1587 = vmatpush1.msra.mxu0 0.0
        %1588 = vmatprep.subr.mxu0 0.0
        %1589 = vmatpush1.msra.mxu0 0.0
        %1590 = vmatprep.subr.mxu0 0.0
        %1591 = vmatpush1.msra.mxu0 0.0
        %1592 = vmatprep.subr.mxu0 0.0
        %1593 = vmatpush1.msra.mxu0 0.0
        %1594 = vmatprep.subr.mxu0 0.0
        %1595 = vmatpush1.msra.mxu0 0.0
        %1596 = vmatprep.subr.mxu0 0.0
        %1597 = vmatpush1.msra.mxu0 0.0
        %1598 = vmatprep.subr.mxu0 0.0
        %1599 = vmatpush1.msra.mxu0 0.0
        %1600 = vmatprep.subr.mxu0 0.0
        %1601 = vmatpush1.msra.mxu0 0.0
        %1602 = vmatprep.subr.mxu0 0.0
        %1603 = vmatpush1.msra.mxu0 0.0
        %1604 = vmatprep.subr.mxu0 0.0
        %1605 = vmatpush1.msra.mxu0 0.0
        %1606 = vmatprep.subr.mxu0 0.0
        %1607 = vmatpush1.msra.mxu0 0.0
        %1608 = vmatprep.subr.mxu0 0.0
        %1609 = vmatpush1.msra.mxu0 0.0
        %1610 = vmatprep.subr.mxu0 0.0
        %1611 = vmatpush1.msra.mxu0 0.0
        %1612 = vmatprep.subr.mxu0 0.0
        %1613 = vmatpush1.msra.mxu0 0.0
        %1614 = vmatprep.subr.mxu0 0.0
        %1615 = vmatpush1.msra.mxu0 0.0
        %1616 = vmatprep.subr.mxu0 0.0
        %1617 = vmatpush1.msra.mxu0 0.0
        %1618 = vmatprep.mubr.f32.mxu0 0.0
        %v1619 = vand.u32 %v1246, 4294901760
        %v1620 = vsub.f32 %v1246, %v1619
        %1621 = vmatmul.mubr.f32.gmra.mrb[0].mxu0 %v1620
        %v1622 = vpop.f32.mrb[0].mxu0
        %v1623 = vadd.f32 %v1513, %v1622
        %v1624 = vpop.f32.mrb[0].mxu0
        %1625 = vmatprep.mubr.f32.mxu0 0.0
        %v1626 = vand.u32 %v1247, 4294901760
        %v1627 = vsub.f32 %v1247, %v1626
        %1628 = vmatmul.mubr.f32.gmra.mrb[0].mxu0 %v1627
        %v1629 = vpop.f32.mrb[0].mxu0
        %v1630 = vadd.f32 %v1519, %v1629
        %v1631 = vpop.f32.mrb[0].mxu0
        %1632 = vdwg.mxu0
        %1633 = vmatprep.subr.mxu0 0.0
        %v1634 = vand.u32 %v1248, 4294901760
        %1635 = vmatpush1.msra.mxu0 %v1634
        %1636 = vmatprep.subr.mxu0 0.0
        %v1637 = vand.u32 %v1249, 4294901760
        %1638 = vmatpush1.msra.mxu0 %v1637
        %1639 = vmatprep.subr.mxu0 0.0
        %v1640 = vand.u32 %v1250, 4294901760
        %1641 = vmatpush1.msra.mxu0 %v1640
        %1642 = vmatprep.subr.mxu0 0.0
        %v1643 = vand.u32 %v1251, 4294901760
        %1644 = vmatpush1.msra.mxu0 %v1643
        %1645 = vmatprep.subr.mxu0 0.0
        %v1646 = vand.u32 %v1252, 4294901760
        %1647 = vmatpush1.msra.mxu0 %v1646
        %1648 = vmatprep.subr.mxu0 0.0
        %v1649 = vand.u32 %v1253, 4294901760
        %1650 = vmatpush1.msra.mxu0 %v1649
        %1651 = vmatprep.subr.mxu0 0.0
        %v1652 = vand.u32 %v1254, 4294901760
        %1653 = vmatpush1.msra.mxu0 %v1652
        %1654 = vmatprep.subr.mxu0 0.0
        %v1655 = vand.u32 %v1255, 4294901760
        %1656 = vmatpush1.msra.mxu0 %v1655
        %1657 = vmatprep.subr.mxu0 0.0
        %v1658 = vand.u32 %v1256, 4294901760
        %1659 = vmatpush1.msra.mxu0 %v1658
        %1660 = vmatprep.subr.mxu0 0.0
        %v1661 = vand.u32 %v1257, 4294901760
        %1662 = vmatpush1.msra.mxu0 %v1661
        %1663 = vmatprep.subr.mxu0 0.0
        %v1664 = vand.u32 %v1258, 4294901760
        %1665 = vmatpush1.msra.mxu0 %v1664
        %1666 = vmatprep.subr.mxu0 0.0
        %v1667 = vand.u32 %v1259, 4294901760
        %1668 = vmatpush1.msra.mxu0 %v1667
        %1669 = vmatprep.subr.mxu0 0.0
        %v1670 = vand.u32 %v1260, 4294901760
        %1671 = vmatpush1.msra.mxu0 %v1670
        %1672 = vmatprep.subr.mxu0 0.0
        %v1673 = vand.u32 %v1261, 4294901760
        %1674 = vmatpush1.msra.mxu0 %v1673
        %1675 = vmatprep.subr.mxu0 0.0
        %v1676 = vand.u32 %v1262, 4294901760
        %1677 = vmatpush1.msra.mxu0 %v1676
        %1678 = vmatprep.subr.mxu0 0.0
        %v1679 = vand.u32 %v1263, 4294901760
        %1680 = vmatpush1.msra.mxu0 %v1679
        %1681 = vmatprep.subr.mxu0 0.0
        %1682 = vmatpush1.msra.mxu0 0.0
        %1683 = vmatprep.subr.mxu0 0.0
        %1684 = vmatpush1.msra.mxu0 0.0
        %1685 = vmatprep.subr.mxu0 0.0
        %1686 = vmatpush1.msra.mxu0 0.0
        %1687 = vmatprep.subr.mxu0 0.0
        %1688 = vmatpush1.msra.mxu0 0.0
        %1689 = vmatprep.subr.mxu0 0.0
        %1690 = vmatpush1.msra.mxu0 0.0
        %1691 = vmatprep.subr.mxu0 0.0
        %1692 = vmatpush1.msra.mxu0 0.0
        %1693 = vmatprep.subr.mxu0 0.0
        %1694 = vmatpush1.msra.mxu0 0.0
        %1695 = vmatprep.subr.mxu0 0.0
        %1696 = vmatpush1.msra.mxu0 0.0
        %1697 = vmatprep.subr.mxu0 0.0
        %1698 = vmatpush1.msra.mxu0 0.0
        %1699 = vmatprep.subr.mxu0 0.0
        %1700 = vmatpush1.msra.mxu0 0.0
        %1701 = vmatprep.subr.mxu0 0.0
        %1702 = vmatpush1.msra.mxu0 0.0
        %1703 = vmatprep.subr.mxu0 0.0
        %1704 = vmatpush1.msra.mxu0 0.0
        %1705 = vmatprep.subr.mxu0 0.0
        %1706 = vmatpush1.msra.mxu0 0.0
        %1707 = vmatprep.subr.mxu0 0.0
        %1708 = vmatpush1.msra.mxu0 0.0
        %1709 = vmatprep.subr.mxu0 0.0
        %1710 = vmatpush1.msra.mxu0 0.0
        %1711 = vmatprep.subr.mxu0 0.0
        %1712 = vmatpush1.msra.mxu0 0.0
        %1713 = vmatprep.mubr.f32.mxu0 0.0
        %v1714 = vand.u32 %v1246, 4294901760
        %v1715 = vsub.f32 %v1246, %v1714
        %v1716 = vand.u32 %v1715, 4294901760
        %1717 = vmatmul.mubr.f32.gmra.mrb[0].mxu0 %v1716
        %v1718 = vpop.f32.mrb[0].mxu0
        %v1719 = vadd.f32 %v1623, %v1718
        %v1720 = vpop.f32.mrb[0].mxu0
        %1721 = vmatprep.mubr.f32.mxu0 0.0
        %v1722 = vand.u32 %v1247, 4294901760
        %v1723 = vsub.f32 %v1247, %v1722
        %v1724 = vand.u32 %v1723, 4294901760
        %1725 = vmatmul.mubr.f32.gmra.mrb[0].mxu0 %v1724
        %v1726 = vpop.f32.mrb[0].mxu0
        %v1727 = vadd.f32 %v1630, %v1726
        %v1728 = vpop.f32.mrb[0].mxu0
        %1729 = vdwg.mxu0
        %1730 = vmatprep.subr.mxu0 0.0
        %v1731 = vand.u32 %v1248, 4294901760
        %v1732 = vsub.f32 %v1248, %v1731
        %v1733 = vand.u32 %v1732, 4294901760
        %1734 = vmatpush1.msra.mxu0 %v1733
        %1735 = vmatprep.subr.mxu0 0.0
        %v1736 = vand.u32 %v1249, 4294901760
        %v1737 = vsub.f32 %v1249, %v1736
        %v1738 = vand.u32 %v1737, 4294901760
        %1739 = vmatpush1.msra.mxu0 %v1738
        %1740 = vmatprep.subr.mxu0 0.0
        %v1741 = vand.u32 %v1250, 4294901760
        %v1742 = vsub.f32 %v1250, %v1741
        %v1743 = vand.u32 %v1742, 4294901760
        %1744 = vmatpush1.msra.mxu0 %v1743
        %1745 = vmatprep.subr.mxu0 0.0
        %v1746 = vand.u32 %v1251, 4294901760
        %v1747 = vsub.f32 %v1251, %v1746
        %v1748 = vand.u32 %v1747, 4294901760
        %1749 = vmatpush1.msra.mxu0 %v1748
        %1750 = vmatprep.subr.mxu0 0.0
        %v1751 = vand.u32 %v1252, 4294901760
        %v1752 = vsub.f32 %v1252, %v1751
        %v1753 = vand.u32 %v1752, 4294901760
        %1754 = vmatpush1.msra.mxu0 %v1753
        %1755 = vmatprep.subr.mxu0 0.0
        %v1756 = vand.u32 %v1253, 4294901760
        %v1757 = vsub.f32 %v1253, %v1756
        %v1758 = vand.u32 %v1757, 4294901760
        %1759 = vmatpush1.msra.mxu0 %v1758
        %1760 = vmatprep.subr.mxu0 0.0
        %v1761 = vand.u32 %v1254, 4294901760
        %v1762 = vsub.f32 %v1254, %v1761
        %v1763 = vand.u32 %v1762, 4294901760
        %1764 = vmatpush1.msra.mxu0 %v1763
        %1765 = vmatprep.subr.mxu0 0.0
        %v1766 = vand.u32 %v1255, 4294901760
        %v1767 = vsub.f32 %v1255, %v1766
        %v1768 = vand.u32 %v1767, 4294901760
        %1769 = vmatpush1.msra.mxu0 %v1768
        %1770 = vmatprep.subr.mxu0 0.0
        %v1771 = vand.u32 %v1256, 4294901760
        %v1772 = vsub.f32 %v1256, %v1771
        %v1773 = vand.u32 %v1772, 4294901760
        %1774 = vmatpush1.msra.mxu0 %v1773
        %1775 = vmatprep.subr.mxu0 0.0
        %v1776 = vand.u32 %v1257, 4294901760
        %v1777 = vsub.f32 %v1257, %v1776
        %v1778 = vand.u32 %v1777, 4294901760
        %1779 = vmatpush1.msra.mxu0 %v1778
        %1780 = vmatprep.subr.mxu0 0.0
        %v1781 = vand.u32 %v1258, 4294901760
        %v1782 = vsub.f32 %v1258, %v1781
        %v1783 = vand.u32 %v1782, 4294901760
        %1784 = vmatpush1.msra.mxu0 %v1783
        %1785 = vmatprep.subr.mxu0 0.0
        %v1786 = vand.u32 %v1259, 4294901760
        %v1787 = vsub.f32 %v1259, %v1786
        %v1788 = vand.u32 %v1787, 4294901760
        %1789 = vmatpush1.msra.mxu0 %v1788
        %1790 = vmatprep.subr.mxu0 0.0
        %v1791 = vand.u32 %v1260, 4294901760
        %v1792 = vsub.f32 %v1260, %v1791
        %v1793 = vand.u32 %v1792, 4294901760
        %1794 = vmatpush1.msra.mxu0 %v1793
        %1795 = vmatprep.subr.mxu0 0.0
        %v1796 = vand.u32 %v1261, 4294901760
        %v1797 = vsub.f32 %v1261, %v1796
        %v1798 = vand.u32 %v1797, 4294901760
        %1799 = vmatpush1.msra.mxu0 %v1798
        %1800 = vmatprep.subr.mxu0 0.0
        %v1801 = vand.u32 %v1262, 4294901760
        %v1802 = vsub.f32 %v1262, %v1801
        %v1803 = vand.u32 %v1802, 4294901760
        %1804 = vmatpush1.msra.mxu0 %v1803
        %1805 = vmatprep.subr.mxu0 0.0
        %v1806 = vand.u32 %v1263, 4294901760
        %v1807 = vsub.f32 %v1263, %v1806
        %v1808 = vand.u32 %v1807, 4294901760
        %1809 = vmatpush1.msra.mxu0 %v1808
        %1810 = vmatprep.subr.mxu0 0.0
        %1811 = vmatpush1.msra.mxu0 0.0
        %1812 = vmatprep.subr.mxu0 0.0
        %1813 = vmatpush1.msra.mxu0 0.0
        %1814 = vmatprep.subr.mxu0 0.0
        %1815 = vmatpush1.msra.mxu0 0.0
        %1816 = vmatprep.subr.mxu0 0.0
        %1817 = vmatpush1.msra.mxu0 0.0
        %1818 = vmatprep.subr.mxu0 0.0
        %1819 = vmatpush1.msra.mxu0 0.0
        %1820 = vmatprep.subr.mxu0 0.0
        %1821 = vmatpush1.msra.mxu0 0.0
        %1822 = vmatprep.subr.mxu0 0.0
        %1823 = vmatpush1.msra.mxu0 0.0
        %1824 = vmatprep.subr.mxu0 0.0
        %1825 = vmatpush1.msra.mxu0 0.0
        %1826 = vmatprep.subr.mxu0 0.0
        %1827 = vmatpush1.msra.mxu0 0.0
        %1828 = vmatprep.subr.mxu0 0.0
        %1829 = vmatpush1.msra.mxu0 0.0
        %1830 = vmatprep.subr.mxu0 0.0
        %1831 = vmatpush1.msra.mxu0 0.0
        %1832 = vmatprep.subr.mxu0 0.0
        %1833 = vmatpush1.msra.mxu0 0.0
        %1834 = vmatprep.subr.mxu0 0.0
        %1835 = vmatpush1.msra.mxu0 0.0
        %1836 = vmatprep.subr.mxu0 0.0
        %1837 = vmatpush1.msra.mxu0 0.0
        %1838 = vmatprep.subr.mxu0 0.0
        %1839 = vmatpush1.msra.mxu0 0.0
        %1840 = vmatprep.subr.mxu0 0.0
        %1841 = vmatpush1.msra.mxu0 0.0
        %1842 = vmatprep.mubr.f32.mxu0 0.0
        %v1843 = vand.u32 %v1246, 4294901760
        %1844 = vmatmul.mubr.f32.gmra.mrb[0].mxu0 %v1843
        %v1845 = vpop.f32.mrb[0].mxu0
        %v1846 = vadd.f32 %v1719, %v1845
        %v1847 = vpop.f32.mrb[0].mxu0
        %1848 = vmatprep.mubr.f32.mxu0 0.0
        %v1849 = vand.u32 %v1247, 4294901760
        %1850 = vmatmul.mubr.f32.gmra.mrb[0].mxu0 %v1849
        %v1851 = vpop.f32.mrb[0].mxu0
        %v1852 = vadd.f32 %v1727, %v1851
        %v1853 = vpop.f32.mrb[0].mxu0
        %1854 = vdwg.mxu0
        %1855 = vmatprep.subr.mxu0 0.0
        %v1856 = vand.u32 %v1248, 4294901760
        %1857 = vmatpush1.msra.mxu0 %v1856
        %1858 = vmatprep.subr.mxu0 0.0
        %v1859 = vand.u32 %v1249, 4294901760
        %1860 = vmatpush1.msra.mxu0 %v1859
        %1861 = vmatprep.subr.mxu0 0.0
        %v1862 = vand.u32 %v1250, 4294901760
        %1863 = vmatpush1.msra.mxu0 %v1862
        %1864 = vmatprep.subr.mxu0 0.0
        %v1865 = vand.u32 %v1251, 4294901760
        %1866 = vmatpush1.msra.mxu0 %v1865
        %1867 = vmatprep.subr.mxu0 0.0
        %v1868 = vand.u32 %v1252, 4294901760
        %1869 = vmatpush1.msra.mxu0 %v1868
        %1870 = vmatprep.subr.mxu0 0.0
        %v1871 = vand.u32 %v1253, 4294901760
        %1872 = vmatpush1.msra.mxu0 %v1871
        %1873 = vmatprep.subr.mxu0 0.0
        %v1874 = vand.u32 %v1254, 4294901760
        %1875 = vmatpush1.msra.mxu0 %v1874
        %1876 = vmatprep.subr.mxu0 0.0
        %v1877 = vand.u32 %v1255, 4294901760
        %1878 = vmatpush1.msra.mxu0 %v1877
        %1879 = vmatprep.subr.mxu0 0.0
        %v1880 = vand.u32 %v1256, 4294901760
        %1881 = vmatpush1.msra.mxu0 %v1880
        %1882 = vmatprep.subr.mxu0 0.0
        %v1883 = vand.u32 %v1257, 4294901760
        %1884 = vmatpush1.msra.mxu0 %v1883
        %1885 = vmatprep.subr.mxu0 0.0
        %v1886 = vand.u32 %v1258, 4294901760
        %1887 = vmatpush1.msra.mxu0 %v1886
        %1888 = vmatprep.subr.mxu0 0.0
        %v1889 = vand.u32 %v1259, 4294901760
        %1890 = vmatpush1.msra.mxu0 %v1889
        %1891 = vmatprep.subr.mxu0 0.0
        %v1892 = vand.u32 %v1260, 4294901760
        %1893 = vmatpush1.msra.mxu0 %v1892
        %1894 = vmatprep.subr.mxu0 0.0
        %v1895 = vand.u32 %v1261, 4294901760
        %1896 = vmatpush1.msra.mxu0 %v1895
        %1897 = vmatprep.subr.mxu0 0.0
        %v1898 = vand.u32 %v1262, 4294901760
        %1899 = vmatpush1.msra.mxu0 %v1898
        %1900 = vmatprep.subr.mxu0 0.0
        %v1901 = vand.u32 %v1263, 4294901760
        %1902 = vmatpush1.msra.mxu0 %v1901
        %1903 = vmatprep.subr.mxu0 0.0
        %1904 = vmatpush1.msra.mxu0 0.0
        %1905 = vmatprep.subr.mxu0 0.0
        %1906 = vmatpush1.msra.mxu0 0.0
        %1907 = vmatprep.subr.mxu0 0.0
        %1908 = vmatpush1.msra.mxu0 0.0
        %1909 = vmatprep.subr.mxu0 0.0
        %1910 = vmatpush1.msra.mxu0 0.0
        %1911 = vmatprep.subr.mxu0 0.0
        %1912 = vmatpush1.msra.mxu0 0.0
        %1913 = vmatprep.subr.mxu0 0.0
        %1914 = vmatpush1.msra.mxu0 0.0
        %1915 = vmatprep.subr.mxu0 0.0
        %1916 = vmatpush1.msra.mxu0 0.0
        %1917 = vmatprep.subr.mxu0 0.0
        %1918 = vmatpush1.msra.mxu0 0.0
        %1919 = vmatprep.subr.mxu0 0.0
        %1920 = vmatpush1.msra.mxu0 0.0
        %1921 = vmatprep.subr.mxu0 0.0
        %1922 = vmatpush1.msra.mxu0 0.0
        %1923 = vmatprep.subr.mxu0 0.0
        %1924 = vmatpush1.msra.mxu0 0.0
        %1925 = vmatprep.subr.mxu0 0.0
        %1926 = vmatpush1.msra.mxu0 0.0
        %1927 = vmatprep.subr.mxu0 0.0
        %1928 = vmatpush1.msra.mxu0 0.0
        %1929 = vmatprep.subr.mxu0 0.0
        %1930 = vmatpush1.msra.mxu0 0.0
        %1931 = vmatprep.subr.mxu0 0.0
        %1932 = vmatpush1.msra.mxu0 0.0
        %1933 = vmatprep.subr.mxu0 0.0
        %1934 = vmatpush1.msra.mxu0 0.0
        %1935 = vmatprep.mubr.f32.mxu0 0.0
        %v1936 = vand.u32 %v1246, 4294901760
        %1937 = vmatmul.mubr.f32.gmra.mrb[0].mxu0 %v1936
        %v1938 = vpop.f32.mrb[0].mxu0
        %v1939 = vadd.f32 %v1846, %v1938
        %v1940 = vpop.f32.mrb[0].mxu0
        %1941 = vmatprep.mubr.f32.mxu0 0.0
        %v1942 = vand.u32 %v1247, 4294901760
        %1943 = vmatmul.mubr.f32.gmra.mrb[0].mxu0 %v1942
        %v1944 = vpop.f32.mrb[0].mxu0
        %v1945 = vadd.f32 %v1852, %v1944
        %v1946 = vpop.f32.mrb[0].mxu0
        %1947 = vdwg.mxu0
        %v1948 = vld [vmem:[#allocation11] sm:$0xff]
        %v1949 = vld [vmem:[#allocation11 + $0x8] sm:$0xff]
        %v1950 = vmul.f32 %v1939, %v1948
        %v1951 = vmul.f32 %v1945, %v1949
        %v1952 = vld [vmem:[#allocation8] sm:$0xff]
        %v1953 = vld [vmem:[#allocation8 + $0x8] sm:$0xff]
        %v1954 = vld [vmem:[#allocation8 + $0x10] sm:$0xff]
        %v1955 = vld [vmem:[#allocation8 + $0x18] sm:$0xff]
        %v1956 = vld [vmem:[#allocation8 + $0x20] sm:$0xff]
        %v1957 = vld [vmem:[#allocation8 + $0x28] sm:$0xff]
        %v1958 = vld [vmem:[#allocation8 + $0x30] sm:$0xff]
        %v1959 = vld [vmem:[#allocation8 + $0x38] sm:$0xff]
        %v1960 = vld [vmem:[#allocation8 + $0x40] sm:$0xff]
        %v1961 = vld [vmem:[#allocation8 + $0x48] sm:$0xff]
        %v1962 = vld [vmem:[#allocation8 + $0x50] sm:$0xff]
        %v1963 = vld [vmem:[#allocation8 + $0x58] sm:$0xff]
        %v1964 = vld [vmem:[#allocation8 + $0x60] sm:$0xff]
        %v1965 = vld [vmem:[#allocation8 + $0x68] sm:$0xff]
        %v1966 = vld [vmem:[#allocation8 + $0x70] sm:$0xff]
        %v1967 = vld [vmem:[#allocation8 + $0x78] sm:$0xff]
        %1968 = vmatprep.subr.mxu0 0.0
        %v1969 = vand.u32 %v1952, 4294901760
        %1970 = vmatpush1.msra.mxu0 %v1969
        %1971 = vmatprep.subr.mxu0 0.0
        %v1972 = vand.u32 %v1953, 4294901760
        %1973 = vmatpush1.msra.mxu0 %v1972
        %1974 = vmatprep.subr.mxu0 0.0
        %v1975 = vand.u32 %v1954, 4294901760
        %1976 = vmatpush1.msra.mxu0 %v1975
        %1977 = vmatprep.subr.mxu0 0.0
        %v1978 = vand.u32 %v1955, 4294901760
        %1979 = vmatpush1.msra.mxu0 %v1978
        %1980 = vmatprep.subr.mxu0 0.0
        %v1981 = vand.u32 %v1956, 4294901760
        %1982 = vmatpush1.msra.mxu0 %v1981
        %1983 = vmatprep.subr.mxu0 0.0
        %v1984 = vand.u32 %v1957, 4294901760
        %1985 = vmatpush1.msra.mxu0 %v1984
        %1986 = vmatprep.subr.mxu0 0.0
        %v1987 = vand.u32 %v1958, 4294901760
        %1988 = vmatpush1.msra.mxu0 %v1987
        %1989 = vmatprep.subr.mxu0 0.0
        %v1990 = vand.u32 %v1959, 4294901760
        %1991 = vmatpush1.msra.mxu0 %v1990
        %1992 = vmatprep.subr.mxu0 0.0
        %v1993 = vand.u32 %v1960, 4294901760
        %1994 = vmatpush1.msra.mxu0 %v1993
        %1995 = vmatprep.subr.mxu0 0.0
        %v1996 = vand.u32 %v1961, 4294901760
        %1997 = vmatpush1.msra.mxu0 %v1996
        %1998 = vmatprep.subr.mxu0 0.0
        %v1999 = vand.u32 %v1962, 4294901760
        %2000 = vmatpush1.msra.mxu0 %v1999
        %2001 = vmatprep.subr.mxu0 0.0
        %v2002 = vand.u32 %v1963, 4294901760
        %2003 = vmatpush1.msra.mxu0 %v2002
        %2004 = vmatprep.subr.mxu0 0.0
        %v2005 = vand.u32 %v1964, 4294901760
        %2006 = vmatpush1.msra.mxu0 %v2005
        %2007 = vmatprep.subr.mxu0 0.0
        %v2008 = vand.u32 %v1965, 4294901760
        %2009 = vmatpush1.msra.mxu0 %v2008
        %2010 = vmatprep.subr.mxu0 0.0
        %v2011 = vand.u32 %v1966, 4294901760
        %2012 = vmatpush1.msra.mxu0 %v2011
        %2013 = vmatprep.subr.mxu0 0.0
        %v2014 = vand.u32 %v1967, 4294901760
        %2015 = vmatpush1.msra.mxu0 %v2014
        %2016 = vmatprep.subr.mxu0 0.0
        %2017 = vmatpush1.msra.mxu0 0.0
        %2018 = vmatprep.subr.mxu0 0.0
        %2019 = vmatpush1.msra.mxu0 0.0
        %2020 = vmatprep.subr.mxu0 0.0
        %2021 = vmatpush1.msra.mxu0 0.0
        %2022 = vmatprep.subr.mxu0 0.0
        %2023 = vmatpush1.msra.mxu0 0.0
        %2024 = vmatprep.subr.mxu0 0.0
        %2025 = vmatpush1.msra.mxu0 0.0
        %2026 = vmatprep.subr.mxu0 0.0
        %2027 = vmatpush1.msra.mxu0 0.0
        %2028 = vmatprep.subr.mxu0 0.0
        %2029 = vmatpush1.msra.mxu0 0.0
        %2030 = vmatprep.subr.mxu0 0.0
        %2031 = vmatpush1.msra.mxu0 0.0
        %2032 = vmatprep.subr.mxu0 0.0
        %2033 = vmatpush1.msra.mxu0 0.0
        %2034 = vmatprep.subr.mxu0 0.0
        %2035 = vmatpush1.msra.mxu0 0.0
        %2036 = vmatprep.subr.mxu0 0.0
        %2037 = vmatpush1.msra.mxu0 0.0
        %2038 = vmatprep.subr.mxu0 0.0
        %2039 = vmatpush1.msra.mxu0 0.0
        %2040 = vmatprep.subr.mxu0 0.0
        %2041 = vmatpush1.msra.mxu0 0.0
        %2042 = vmatprep.subr.mxu0 0.0
        %2043 = vmatpush1.msra.mxu0 0.0
        %2044 = vmatprep.subr.mxu0 0.0
        %2045 = vmatpush1.msra.mxu0 0.0
        %2046 = vmatprep.subr.mxu0 0.0
        %2047 = vmatpush1.msra.mxu0 0.0
        %2048 = vmatprep.mubr.f32.mxu0 0.0
        %v2049 = vand.u32 %v1950, 4294901760
        %v2050 = vsub.f32 %v1950, %v2049
        %v2051 = vand.u32 %v2050, 4294901760
        %v2052 = vsub.f32 %v2050, %v2051
        %v2053 = vand.u32 %v2052, 4294901760
        %2054 = vmatmul.mubr.f32.gmra.mrb[0].mxu0 %v2053
        %v2055 = vpop.f32.mrb[0].mxu0
        %v2056 = vadd.f32 0.0, %v2055
        %v2057 = vpop.f32.mrb[0].mxu0
        %2058 = vmatprep.mubr.f32.mxu0 0.0
        %v2059 = vand.u32 %v1951, 4294901760
        %v2060 = vsub.f32 %v1951, %v2059
        %v2061 = vand.u32 %v2060, 4294901760
        %v2062 = vsub.f32 %v2060, %v2061
        %v2063 = vand.u32 %v2062, 4294901760
        %2064 = vmatmul.mubr.f32.gmra.mrb[0].mxu0 %v2063
        %v2065 = vpop.f32.mrb[0].mxu0
        %v2066 = vadd.f32 0.0, %v2065
        %v2067 = vpop.f32.mrb[0].mxu0
        %2068 = vdwg.mxu0
        %2069 = vmatprep.subr.mxu0 0.0
        %v2070 = vand.u32 %v1952, 4294901760
        %v2071 = vsub.f32 %v1952, %v2070
        %v2072 = vand.u32 %v2071, 4294901760
        %v2073 = vsub.f32 %v2071, %v2072
        %v2074 = vand.u32 %v2073, 4294901760
        %2075 = vmatpush1.msra.mxu0 %v2074
        %2076 = vmatprep.subr.mxu0 0.0
        %v2077 = vand.u32 %v1953, 4294901760
        %v2078 = vsub.f32 %v1953, %v2077
        %v2079 = vand.u32 %v2078, 4294901760
        %v2080 = vsub.f32 %v2078, %v2079
        %v2081 = vand.u32 %v2080, 4294901760
        %2082 = vmatpush1.msra.mxu0 %v2081
        %2083 = vmatprep.subr.mxu0 0.0
        %v2084 = vand.u32 %v1954, 4294901760
        %v2085 = vsub.f32 %v1954, %v2084
        %v2086 = vand.u32 %v2085, 4294901760
        %v2087 = vsub.f32 %v2085, %v2086
        %v2088 = vand.u32 %v2087, 4294901760
        %2089 = vmatpush1.msra.mxu0 %v2088
        %2090 = vmatprep.subr.mxu0 0.0
        %v2091 = vand.u32 %v1955, 4294901760
        %v2092 = vsub.f32 %v1955, %v2091
        %v2093 = vand.u32 %v2092, 4294901760
        %v2094 = vsub.f32 %v2092, %v2093
        %v2095 = vand.u32 %v2094, 4294901760
        %2096 = vmatpush1.msra.mxu0 %v2095
        %2097 = vmatprep.subr.mxu0 0.0
        %v2098 = vand.u32 %v1956, 4294901760
        %v2099 = vsub.f32 %v1956, %v2098
        %v2100 = vand.u32 %v2099, 4294901760
        %v2101 = vsub.f32 %v2099, %v2100
        %v2102 = vand.u32 %v2101, 4294901760
        %2103 = vmatpush1.msra.mxu0 %v2102
        %2104 = vmatprep.subr.mxu0 0.0
        %v2105 = vand.u32 %v1957, 4294901760
        %v2106 = vsub.f32 %v1957, %v2105
        %v2107 = vand.u32 %v2106, 4294901760
        %v2108 = vsub.f32 %v2106, %v2107
        %v2109 = vand.u32 %v2108, 4294901760
        %2110 = vmatpush1.msra.mxu0 %v2109
        %2111 = vmatprep.subr.mxu0 0.0
        %v2112 = vand.u32 %v1958, 4294901760
        %v2113 = vsub.f32 %v1958, %v2112
        %v2114 = vand.u32 %v2113, 4294901760
        %v2115 = vsub.f32 %v2113, %v2114
        %v2116 = vand.u32 %v2115, 4294901760
        %2117 = vmatpush1.msra.mxu0 %v2116
        %2118 = vmatprep.subr.mxu0 0.0
        %v2119 = vand.u32 %v1959, 4294901760
        %v2120 = vsub.f32 %v1959, %v2119
        %v2121 = vand.u32 %v2120, 4294901760
        %v2122 = vsub.f32 %v2120, %v2121
        %v2123 = vand.u32 %v2122, 4294901760
        %2124 = vmatpush1.msra.mxu0 %v2123
        %2125 = vmatprep.subr.mxu0 0.0
        %v2126 = vand.u32 %v1960, 4294901760
        %v2127 = vsub.f32 %v1960, %v2126
        %v2128 = vand.u32 %v2127, 4294901760
        %v2129 = vsub.f32 %v2127, %v2128
        %v2130 = vand.u32 %v2129, 4294901760
        %2131 = vmatpush1.msra.mxu0 %v2130
        %2132 = vmatprep.subr.mxu0 0.0
        %v2133 = vand.u32 %v1961, 4294901760
        %v2134 = vsub.f32 %v1961, %v2133
        %v2135 = vand.u32 %v2134, 4294901760
        %v2136 = vsub.f32 %v2134, %v2135
        %v2137 = vand.u32 %v2136, 4294901760
        %2138 = vmatpush1.msra.mxu0 %v2137
        %2139 = vmatprep.subr.mxu0 0.0
        %v2140 = vand.u32 %v1962, 4294901760
        %v2141 = vsub.f32 %v1962, %v2140
        %v2142 = vand.u32 %v2141, 4294901760
        %v2143 = vsub.f32 %v2141, %v2142
        %v2144 = vand.u32 %v2143, 4294901760
        %2145 = vmatpush1.msra.mxu0 %v2144
        %2146 = vmatprep.subr.mxu0 0.0
        %v2147 = vand.u32 %v1963, 4294901760
        %v2148 = vsub.f32 %v1963, %v2147
        %v2149 = vand.u32 %v2148, 4294901760
        %v2150 = vsub.f32 %v2148, %v2149
        %v2151 = vand.u32 %v2150, 4294901760
        %2152 = vmatpush1.msra.mxu0 %v2151
        %2153 = vmatprep.subr.mxu0 0.0
        %v2154 = vand.u32 %v1964, 4294901760
        %v2155 = vsub.f32 %v1964, %v2154
        %v2156 = vand.u32 %v2155, 4294901760
        %v2157 = vsub.f32 %v2155, %v2156
        %v2158 = vand.u32 %v2157, 4294901760
        %2159 = vmatpush1.msra.mxu0 %v2158
        %2160 = vmatprep.subr.mxu0 0.0
        %v2161 = vand.u32 %v1965, 4294901760
        %v2162 = vsub.f32 %v1965, %v2161
        %v2163 = vand.u32 %v2162, 4294901760
        %v2164 = vsub.f32 %v2162, %v2163
        %v2165 = vand.u32 %v2164, 4294901760
        %2166 = vmatpush1.msra.mxu0 %v2165
        %2167 = vmatprep.subr.mxu0 0.0
        %v2168 = vand.u32 %v1966, 4294901760
        %v2169 = vsub.f32 %v1966, %v2168
        %v2170 = vand.u32 %v2169, 4294901760
        %v2171 = vsub.f32 %v2169, %v2170
        %v2172 = vand.u32 %v2171, 4294901760
        %2173 = vmatpush1.msra.mxu0 %v2172
        %2174 = vmatprep.subr.mxu0 0.0
        %v2175 = vand.u32 %v1967, 4294901760
        %v2176 = vsub.f32 %v1967, %v2175
        %v2177 = vand.u32 %v2176, 4294901760
        %v2178 = vsub.f32 %v2176, %v2177
        %v2179 = vand.u32 %v2178, 4294901760
        %2180 = vmatpush1.msra.mxu0 %v2179
        %2181 = vmatprep.subr.mxu0 0.0
        %2182 = vmatpush1.msra.mxu0 0.0
        %2183 = vmatprep.subr.mxu0 0.0
        %2184 = vmatpush1.msra.mxu0 0.0
        %2185 = vmatprep.subr.mxu0 0.0
        %2186 = vmatpush1.msra.mxu0 0.0
        %2187 = vmatprep.subr.mxu0 0.0
        %2188 = vmatpush1.msra.mxu0 0.0
        %2189 = vmatprep.subr.mxu0 0.0
        %2190 = vmatpush1.msra.mxu0 0.0
        %2191 = vmatprep.subr.mxu0 0.0
        %2192 = vmatpush1.msra.mxu0 0.0
        %2193 = vmatprep.subr.mxu0 0.0
        %2194 = vmatpush1.msra.mxu0 0.0
        %2195 = vmatprep.subr.mxu0 0.0
        %2196 = vmatpush1.msra.mxu0 0.0
        %2197 = vmatprep.subr.mxu0 0.0
        %2198 = vmatpush1.msra.mxu0 0.0
        %2199 = vmatprep.subr.mxu0 0.0
        %2200 = vmatpush1.msra.mxu0 0.0
        %2201 = vmatprep.subr.mxu0 0.0
        %2202 = vmatpush1.msra.mxu0 0.0
        %2203 = vmatprep.subr.mxu0 0.0
        %2204 = vmatpush1.msra.mxu0 0.0
        %2205 = vmatprep.subr.mxu0 0.0
        %2206 = vmatpush1.msra.mxu0 0.0
        %2207 = vmatprep.subr.mxu0 0.0
        %2208 = vmatpush1.msra.mxu0 0.0
        %2209 = vmatprep.subr.mxu0 0.0
        %2210 = vmatpush1.msra.mxu0 0.0
        %2211 = vmatprep.subr.mxu0 0.0
        %2212 = vmatpush1.msra.mxu0 0.0
        %2213 = vmatprep.mubr.f32.mxu0 0.0
        %v2214 = vand.u32 %v1950, 4294901760
        %2215 = vmatmul.mubr.f32.gmra.mrb[0].mxu0 %v2214
        %v2216 = vpop.f32.mrb[0].mxu0
        %v2217 = vadd.f32 %v2056, %v2216
        %v2218 = vpop.f32.mrb[0].mxu0
        %2219 = vmatprep.mubr.f32.mxu0 0.0
        %v2220 = vand.u32 %v1951, 4294901760
        %2221 = vmatmul.mubr.f32.gmra.mrb[0].mxu0 %v2220
        %v2222 = vpop.f32.mrb[0].mxu0
        %v2223 = vadd.f32 %v2066, %v2222
        %v2224 = vpop.f32.mrb[0].mxu0
        %2225 = vdwg.mxu0
        %2226 = vmatprep.subr.mxu0 0.0
        %v2227 = vand.u32 %v1952, 4294901760
        %v2228 = vsub.f32 %v1952, %v2227
        %2229 = vmatpush1.msra.mxu0 %v2228
        %2230 = vmatprep.subr.mxu0 0.0
        %v2231 = vand.u32 %v1953, 4294901760
        %v2232 = vsub.f32 %v1953, %v2231
        %2233 = vmatpush1.msra.mxu0 %v2232
        %2234 = vmatprep.subr.mxu0 0.0
        %v2235 = vand.u32 %v1954, 4294901760
        %v2236 = vsub.f32 %v1954, %v2235
        %2237 = vmatpush1.msra.mxu0 %v2236
        %2238 = vmatprep.subr.mxu0 0.0
        %v2239 = vand.u32 %v1955, 4294901760
        %v2240 = vsub.f32 %v1955, %v2239
        %2241 = vmatpush1.msra.mxu0 %v2240
        %2242 = vmatprep.subr.mxu0 0.0
        %v2243 = vand.u32 %v1956, 4294901760
        %v2244 = vsub.f32 %v1956, %v2243
        %2245 = vmatpush1.msra.mxu0 %v2244
        %2246 = vmatprep.subr.mxu0 0.0
        %v2247 = vand.u32 %v1957, 4294901760
        %v2248 = vsub.f32 %v1957, %v2247
        %2249 = vmatpush1.msra.mxu0 %v2248
        %2250 = vmatprep.subr.mxu0 0.0
        %v2251 = vand.u32 %v1958, 4294901760
        %v2252 = vsub.f32 %v1958, %v2251
        %2253 = vmatpush1.msra.mxu0 %v2252
        %2254 = vmatprep.subr.mxu0 0.0
        %v2255 = vand.u32 %v1959, 4294901760
        %v2256 = vsub.f32 %v1959, %v2255
        %2257 = vmatpush1.msra.mxu0 %v2256
        %2258 = vmatprep.subr.mxu0 0.0
        %v2259 = vand.u32 %v1960, 4294901760
        %v2260 = vsub.f32 %v1960, %v2259
        %2261 = vmatpush1.msra.mxu0 %v2260
        %2262 = vmatprep.subr.mxu0 0.0
        %v2263 = vand.u32 %v1961, 4294901760
        %v2264 = vsub.f32 %v1961, %v2263
        %2265 = vmatpush1.msra.mxu0 %v2264
        %2266 = vmatprep.subr.mxu0 0.0
        %v2267 = vand.u32 %v1962, 4294901760
        %v2268 = vsub.f32 %v1962, %v2267
        %2269 = vmatpush1.msra.mxu0 %v2268
        %2270 = vmatprep.subr.mxu0 0.0
        %v2271 = vand.u32 %v1963, 4294901760
        %v2272 = vsub.f32 %v1963, %v2271
        %2273 = vmatpush1.msra.mxu0 %v2272
        %2274 = vmatprep.subr.mxu0 0.0
        %v2275 = vand.u32 %v1964, 4294901760
        %v2276 = vsub.f32 %v1964, %v2275
        %2277 = vmatpush1.msra.mxu0 %v2276
        %2278 = vmatprep.subr.mxu0 0.0
        %v2279 = vand.u32 %v1965, 4294901760
        %v2280 = vsub.f32 %v1965, %v2279
        %2281 = vmatpush1.msra.mxu0 %v2280
        %2282 = vmatprep.subr.mxu0 0.0
        %v2283 = vand.u32 %v1966, 4294901760
        %v2284 = vsub.f32 %v1966, %v2283
        %2285 = vmatpush1.msra.mxu0 %v2284
        %2286 = vmatprep.subr.mxu0 0.0
        %v2287 = vand.u32 %v1967, 4294901760
        %v2288 = vsub.f32 %v1967, %v2287
        %2289 = vmatpush1.msra.mxu0 %v2288
        %2290 = vmatprep.subr.mxu0 0.0
        %2291 = vmatpush1.msra.mxu0 0.0
        %2292 = vmatprep.subr.mxu0 0.0
        %2293 = vmatpush1.msra.mxu0 0.0
        %2294 = vmatprep.subr.mxu0 0.0
        %2295 = vmatpush1.msra.mxu0 0.0
        %2296 = vmatprep.subr.mxu0 0.0
        %2297 = vmatpush1.msra.mxu0 0.0
        %2298 = vmatprep.subr.mxu0 0.0
        %2299 = vmatpush1.msra.mxu0 0.0
        %2300 = vmatprep.subr.mxu0 0.0
        %2301 = vmatpush1.msra.mxu0 0.0
        %2302 = vmatprep.subr.mxu0 0.0
        %2303 = vmatpush1.msra.mxu0 0.0
        %2304 = vmatprep.subr.mxu0 0.0
        %2305 = vmatpush1.msra.mxu0 0.0
        %2306 = vmatprep.subr.mxu0 0.0
        %2307 = vmatpush1.msra.mxu0 0.0
        %2308 = vmatprep.subr.mxu0 0.0
        %2309 = vmatpush1.msra.mxu0 0.0
        %2310 = vmatprep.subr.mxu0 0.0
        %2311 = vmatpush1.msra.mxu0 0.0
        %2312 = vmatprep.subr.mxu0 0.0
        %2313 = vmatpush1.msra.mxu0 0.0
        %2314 = vmatprep.subr.mxu0 0.0
        %2315 = vmatpush1.msra.mxu0 0.0
        %2316 = vmatprep.subr.mxu0 0.0
        %2317 = vmatpush1.msra.mxu0 0.0
        %2318 = vmatprep.subr.mxu0 0.0
        %2319 = vmatpush1.msra.mxu0 0.0
        %2320 = vmatprep.subr.mxu0 0.0
        %2321 = vmatpush1.msra.mxu0 0.0
        %2322 = vmatprep.mubr.f32.mxu0 0.0
        %v2323 = vand.u32 %v1950, 4294901760
        %v2324 = vsub.f32 %v1950, %v2323
        %2325 = vmatmul.mubr.f32.gmra.mrb[0].mxu0 %v2324
        %v2326 = vpop.f32.mrb[0].mxu0
        %v2327 = vadd.f32 %v2217, %v2326
        %v2328 = vpop.f32.mrb[0].mxu0
        %2329 = vmatprep.mubr.f32.mxu0 0.0
        %v2330 = vand.u32 %v1951, 4294901760
        %v2331 = vsub.f32 %v1951, %v2330
        %2332 = vmatmul.mubr.f32.gmra.mrb[0].mxu0 %v2331
        %v2333 = vpop.f32.mrb[0].mxu0
        %v2334 = vadd.f32 %v2223, %v2333
        %v2335 = vpop.f32.mrb[0].mxu0
        %2336 = vdwg.mxu0
        %2337 = vmatprep.subr.mxu0 0.0
        %v2338 = vand.u32 %v1952, 4294901760
        %2339 = vmatpush1.msra.mxu0 %v2338
        %2340 = vmatprep.subr.mxu0 0.0
        %v2341 = vand.u32 %v1953, 4294901760
        %2342 = vmatpush1.msra.mxu0 %v2341
        %2343 = vmatprep.subr.mxu0 0.0
        %v2344 = vand.u32 %v1954, 4294901760
        %2345 = vmatpush1.msra.mxu0 %v2344
        %2346 = vmatprep.subr.mxu0 0.0
        %v2347 = vand.u32 %v1955, 4294901760
        %2348 = vmatpush1.msra.mxu0 %v2347
        %2349 = vmatprep.subr.mxu0 0.0
        %v2350 = vand.u32 %v1956, 4294901760
        %2351 = vmatpush1.msra.mxu0 %v2350
        %2352 = vmatprep.subr.mxu0 0.0
        %v2353 = vand.u32 %v1957, 4294901760
        %2354 = vmatpush1.msra.mxu0 %v2353
        %2355 = vmatprep.subr.mxu0 0.0
        %v2356 = vand.u32 %v1958, 4294901760
        %2357 = vmatpush1.msra.mxu0 %v2356
        %2358 = vmatprep.subr.mxu0 0.0
        %v2359 = vand.u32 %v1959, 4294901760
        %2360 = vmatpush1.msra.mxu0 %v2359
        %2361 = vmatprep.subr.mxu0 0.0
        %v2362 = vand.u32 %v1960, 4294901760
        %2363 = vmatpush1.msra.mxu0 %v2362
        %2364 = vmatprep.subr.mxu0 0.0
        %v2365 = vand.u32 %v1961, 4294901760
        %2366 = vmatpush1.msra.mxu0 %v2365
        %2367 = vmatprep.subr.mxu0 0.0
        %v2368 = vand.u32 %v1962, 4294901760
        %2369 = vmatpush1.msra.mxu0 %v2368
        %2370 = vmatprep.subr.mxu0 0.0
        %v2371 = vand.u32 %v1963, 4294901760
        %2372 = vmatpush1.msra.mxu0 %v2371
        %2373 = vmatprep.subr.mxu0 0.0
        %v2374 = vand.u32 %v1964, 4294901760
        %2375 = vmatpush1.msra.mxu0 %v2374
        %2376 = vmatprep.subr.mxu0 0.0
        %v2377 = vand.u32 %v1965, 4294901760
        %2378 = vmatpush1.msra.mxu0 %v2377
        %2379 = vmatprep.subr.mxu0 0.0
        %v2380 = vand.u32 %v1966, 4294901760
        %2381 = vmatpush1.msra.mxu0 %v2380
        %2382 = vmatprep.subr.mxu0 0.0
        %v2383 = vand.u32 %v1967, 4294901760
        %2384 = vmatpush1.msra.mxu0 %v2383
        %2385 = vmatprep.subr.mxu0 0.0
        %2386 = vmatpush1.msra.mxu0 0.0
        %2387 = vmatprep.subr.mxu0 0.0
        %2388 = vmatpush1.msra.mxu0 0.0
        %2389 = vmatprep.subr.mxu0 0.0
        %2390 = vmatpush1.msra.mxu0 0.0
        %2391 = vmatprep.subr.mxu0 0.0
        %2392 = vmatpush1.msra.mxu0 0.0
        %2393 = vmatprep.subr.mxu0 0.0
        %2394 = vmatpush1.msra.mxu0 0.0
        %2395 = vmatprep.subr.mxu0 0.0
        %2396 = vmatpush1.msra.mxu0 0.0
        %2397 = vmatprep.subr.mxu0 0.0
        %2398 = vmatpush1.msra.mxu0 0.0
        %2399 = vmatprep.subr.mxu0 0.0
        %2400 = vmatpush1.msra.mxu0 0.0
        %2401 = vmatprep.subr.mxu0 0.0
        %2402 = vmatpush1.msra.mxu0 0.0
        %2403 = vmatprep.subr.mxu0 0.0
        %2404 = vmatpush1.msra.mxu0 0.0
        %2405 = vmatprep.subr.mxu0 0.0
        %2406 = vmatpush1.msra.mxu0 0.0
        %2407 = vmatprep.subr.mxu0 0.0
        %2408 = vmatpush1.msra.mxu0 0.0
        %2409 = vmatprep.subr.mxu0 0.0
        %2410 = vmatpush1.msra.mxu0 0.0
        %2411 = vmatprep.subr.mxu0 0.0
        %2412 = vmatpush1.msra.mxu0 0.0
        %2413 = vmatprep.subr.mxu0 0.0
        %2414 = vmatpush1.msra.mxu0 0.0
        %2415 = vmatprep.subr.mxu0 0.0
        %2416 = vmatpush1.msra.mxu0 0.0
        %2417 = vmatprep.mubr.f32.mxu0 0.0
        %v2418 = vand.u32 %v1950, 4294901760
        %v2419 = vsub.f32 %v1950, %v2418
        %v2420 = vand.u32 %v2419, 4294901760
        %2421 = vmatmul.mubr.f32.gmra.mrb[0].mxu0 %v2420
        %v2422 = vpop.f32.mrb[0].mxu0
        %v2423 = vadd.f32 %v2327, %v2422
        %v2424 = vpop.f32.mrb[0].mxu0
        %2425 = vmatprep.mubr.f32.mxu0 0.0
        %v2426 = vand.u32 %v1951, 4294901760
        %v2427 = vsub.f32 %v1951, %v2426
        %v2428 = vand.u32 %v2427, 4294901760
        %2429 = vmatmul.mubr.f32.gmra.mrb[0].mxu0 %v2428
        %v2430 = vpop.f32.mrb[0].mxu0
        %v2431 = vadd.f32 %v2334, %v2430
        %v2432 = vpop.f32.mrb[0].mxu0
        %2433 = vdwg.mxu0
        %2434 = vmatprep.subr.mxu0 0.0
        %v2435 = vand.u32 %v1952, 4294901760
        %v2436 = vsub.f32 %v1952, %v2435
        %v2437 = vand.u32 %v2436, 4294901760
        %2438 = vmatpush1.msra.mxu0 %v2437
        %2439 = vmatprep.subr.mxu0 0.0
        %v2440 = vand.u32 %v1953, 4294901760
        %v2441 = vsub.f32 %v1953, %v2440
        %v2442 = vand.u32 %v2441, 4294901760
        %2443 = vmatpush1.msra.mxu0 %v2442
        %2444 = vmatprep.subr.mxu0 0.0
        %v2445 = vand.u32 %v1954, 4294901760
        %v2446 = vsub.f32 %v1954, %v2445
        %v2447 = vand.u32 %v2446, 4294901760
        %2448 = vmatpush1.msra.mxu0 %v2447
        %2449 = vmatprep.subr.mxu0 0.0
        %v2450 = vand.u32 %v1955, 4294901760
        %v2451 = vsub.f32 %v1955, %v2450
        %v2452 = vand.u32 %v2451, 4294901760
        %2453 = vmatpush1.msra.mxu0 %v2452
        %2454 = vmatprep.subr.mxu0 0.0
        %v2455 = vand.u32 %v1956, 4294901760
        %v2456 = vsub.f32 %v1956, %v2455
        %v2457 = vand.u32 %v2456, 4294901760
        %2458 = vmatpush1.msra.mxu0 %v2457
        %2459 = vmatprep.subr.mxu0 0.0
        %v2460 = vand.u32 %v1957, 4294901760
        %v2461 = vsub.f32 %v1957, %v2460
        %v2462 = vand.u32 %v2461, 4294901760
        %2463 = vmatpush1.msra.mxu0 %v2462
        %2464 = vmatprep.subr.mxu0 0.0
        %v2465 = vand.u32 %v1958, 4294901760
        %v2466 = vsub.f32 %v1958, %v2465
        %v2467 = vand.u32 %v2466, 4294901760
        %2468 = vmatpush1.msra.mxu0 %v2467
        %2469 = vmatprep.subr.mxu0 0.0
        %v2470 = vand.u32 %v1959, 4294901760
        %v2471 = vsub.f32 %v1959, %v2470
        %v2472 = vand.u32 %v2471, 4294901760
        %2473 = vmatpush1.msra.mxu0 %v2472
        %2474 = vmatprep.subr.mxu0 0.0
        %v2475 = vand.u32 %v1960, 4294901760
        %v2476 = vsub.f32 %v1960, %v2475
        %v2477 = vand.u32 %v2476, 4294901760
        %2478 = vmatpush1.msra.mxu0 %v2477
        %2479 = vmatprep.subr.mxu0 0.0
        %v2480 = vand.u32 %v1961, 4294901760
        %v2481 = vsub.f32 %v1961, %v2480
        %v2482 = vand.u32 %v2481, 4294901760
        %2483 = vmatpush1.msra.mxu0 %v2482
        %2484 = vmatprep.subr.mxu0 0.0
        %v2485 = vand.u32 %v1962, 4294901760
        %v2486 = vsub.f32 %v1962, %v2485
        %v2487 = vand.u32 %v2486, 4294901760
        %2488 = vmatpush1.msra.mxu0 %v2487
        %2489 = vmatprep.subr.mxu0 0.0
        %v2490 = vand.u32 %v1963, 4294901760
        %v2491 = vsub.f32 %v1963, %v2490
        %v2492 = vand.u32 %v2491, 4294901760
        %2493 = vmatpush1.msra.mxu0 %v2492
        %2494 = vmatprep.subr.mxu0 0.0
        %v2495 = vand.u32 %v1964, 4294901760
        %v2496 = vsub.f32 %v1964, %v2495
        %v2497 = vand.u32 %v2496, 4294901760
        %2498 = vmatpush1.msra.mxu0 %v2497
        %2499 = vmatprep.subr.mxu0 0.0
        %v2500 = vand.u32 %v1965, 4294901760
        %v2501 = vsub.f32 %v1965, %v2500
        %v2502 = vand.u32 %v2501, 4294901760
        %2503 = vmatpush1.msra.mxu0 %v2502
        %2504 = vmatprep.subr.mxu0 0.0
        %v2505 = vand.u32 %v1966, 4294901760
        %v2506 = vsub.f32 %v1966, %v2505
        %v2507 = vand.u32 %v2506, 4294901760
        %2508 = vmatpush1.msra.mxu0 %v2507
        %2509 = vmatprep.subr.mxu0 0.0
        %v2510 = vand.u32 %v1967, 4294901760
        %v2511 = vsub.f32 %v1967, %v2510
        %v2512 = vand.u32 %v2511, 4294901760
        %2513 = vmatpush1.msra.mxu0 %v2512
        %2514 = vmatprep.subr.mxu0 0.0
        %2515 = vmatpush1.msra.mxu0 0.0
        %2516 = vmatprep.subr.mxu0 0.0
        %2517 = vmatpush1.msra.mxu0 0.0
        %2518 = vmatprep.subr.mxu0 0.0
        %2519 = vmatpush1.msra.mxu0 0.0
        %2520 = vmatprep.subr.mxu0 0.0
        %2521 = vmatpush1.msra.mxu0 0.0
        %2522 = vmatprep.subr.mxu0 0.0
        %2523 = vmatpush1.msra.mxu0 0.0
        %2524 = vmatprep.subr.mxu0 0.0
        %2525 = vmatpush1.msra.mxu0 0.0
        %2526 = vmatprep.subr.mxu0 0.0
        %2527 = vmatpush1.msra.mxu0 0.0
        %2528 = vmatprep.subr.mxu0 0.0
        %2529 = vmatpush1.msra.mxu0 0.0
        %2530 = vmatprep.subr.mxu0 0.0
        %2531 = vmatpush1.msra.mxu0 0.0
        %2532 = vmatprep.subr.mxu0 0.0
        %2533 = vmatpush1.msra.mxu0 0.0
        %2534 = vmatprep.subr.mxu0 0.0
        %2535 = vmatpush1.msra.mxu0 0.0
        %2536 = vmatprep.subr.mxu0 0.0
        %2537 = vmatpush1.msra.mxu0 0.0
        %2538 = vmatprep.subr.mxu0 0.0
        %2539 = vmatpush1.msra.mxu0 0.0
        %2540 = vmatprep.subr.mxu0 0.0
        %2541 = vmatpush1.msra.mxu0 0.0
        %2542 = vmatprep.subr.mxu0 0.0
        %2543 = vmatpush1.msra.mxu0 0.0
        %2544 = vmatprep.subr.mxu0 0.0
        %2545 = vmatpush1.msra.mxu0 0.0
        %2546 = vmatprep.mubr.f32.mxu0 0.0
        %v2547 = vand.u32 %v1950, 4294901760
        %2548 = vmatmul.mubr.f32.gmra.mrb[0].mxu0 %v2547
        %v2549 = vpop.f32.mrb[0].mxu0
        %v2550 = vadd.f32 %v2423, %v2549
        %v2551 = vpop.f32.mrb[0].mxu0
        %2552 = vmatprep.mubr.f32.mxu0 0.0
        %v2553 = vand.u32 %v1951, 4294901760
        %2554 = vmatmul.mubr.f32.gmra.mrb[0].mxu0 %v2553
        %v2555 = vpop.f32.mrb[0].mxu0
        %v2556 = vadd.f32 %v2431, %v2555
        %v2557 = vpop.f32.mrb[0].mxu0
        %2558 = vdwg.mxu0
        %2559 = vmatprep.subr.mxu0 0.0
        %v2560 = vand.u32 %v1952, 4294901760
        %2561 = vmatpush1.msra.mxu0 %v2560
        %2562 = vmatprep.subr.mxu0 0.0
        %v2563 = vand.u32 %v1953, 4294901760
        %2564 = vmatpush1.msra.mxu0 %v2563
        %2565 = vmatprep.subr.mxu0 0.0
        %v2566 = vand.u32 %v1954, 4294901760
        %2567 = vmatpush1.msra.mxu0 %v2566
        %2568 = vmatprep.subr.mxu0 0.0
        %v2569 = vand.u32 %v1955, 4294901760
        %2570 = vmatpush1.msra.mxu0 %v2569
        %2571 = vmatprep.subr.mxu0 0.0
        %v2572 = vand.u32 %v1956, 4294901760
        %2573 = vmatpush1.msra.mxu0 %v2572
        %2574 = vmatprep.subr.mxu0 0.0
        %v2575 = vand.u32 %v1957, 4294901760
        %2576 = vmatpush1.msra.mxu0 %v2575
        %2577 = vmatprep.subr.mxu0 0.0
        %v2578 = vand.u32 %v1958, 4294901760
        %2579 = vmatpush1.msra.mxu0 %v2578
        %2580 = vmatprep.subr.mxu0 0.0
        %v2581 = vand.u32 %v1959, 4294901760
        %2582 = vmatpush1.msra.mxu0 %v2581
        %2583 = vmatprep.subr.mxu0 0.0
        %v2584 = vand.u32 %v1960, 4294901760
        %2585 = vmatpush1.msra.mxu0 %v2584
        %2586 = vmatprep.subr.mxu0 0.0
        %v2587 = vand.u32 %v1961, 4294901760
        %2588 = vmatpush1.msra.mxu0 %v2587
        %2589 = vmatprep.subr.mxu0 0.0
        %v2590 = vand.u32 %v1962, 4294901760
        %2591 = vmatpush1.msra.mxu0 %v2590
        %2592 = vmatprep.subr.mxu0 0.0
        %v2593 = vand.u32 %v1963, 4294901760
        %2594 = vmatpush1.msra.mxu0 %v2593
        %2595 = vmatprep.subr.mxu0 0.0
        %v2596 = vand.u32 %v1964, 4294901760
        %2597 = vmatpush1.msra.mxu0 %v2596
        %2598 = vmatprep.subr.mxu0 0.0
        %v2599 = vand.u32 %v1965, 4294901760
        %2600 = vmatpush1.msra.mxu0 %v2599
        %2601 = vmatprep.subr.mxu0 0.0
        %v2602 = vand.u32 %v1966, 4294901760
        %2603 = vmatpush1.msra.mxu0 %v2602
        %2604 = vmatprep.subr.mxu0 0.0
        %v2605 = vand.u32 %v1967, 4294901760
        %2606 = vmatpush1.msra.mxu0 %v2605
        %2607 = vmatprep.subr.mxu0 0.0
        %2608 = vmatpush1.msra.mxu0 0.0
        %2609 = vmatprep.subr.mxu0 0.0
        %2610 = vmatpush1.msra.mxu0 0.0
        %2611 = vmatprep.subr.mxu0 0.0
        %2612 = vmatpush1.msra.mxu0 0.0
        %2613 = vmatprep.subr.mxu0 0.0
        %2614 = vmatpush1.msra.mxu0 0.0
        %2615 = vmatprep.subr.mxu0 0.0
        %2616 = vmatpush1.msra.mxu0 0.0
        %2617 = vmatprep.subr.mxu0 0.0
        %2618 = vmatpush1.msra.mxu0 0.0
        %2619 = vmatprep.subr.mxu0 0.0
        %2620 = vmatpush1.msra.mxu0 0.0
        %2621 = vmatprep.subr.mxu0 0.0
        %2622 = vmatpush1.msra.mxu0 0.0
        %2623 = vmatprep.subr.mxu0 0.0
        %2624 = vmatpush1.msra.mxu0 0.0
        %2625 = vmatprep.subr.mxu0 0.0
        %2626 = vmatpush1.msra.mxu0 0.0
        %2627 = vmatprep.subr.mxu0 0.0
        %2628 = vmatpush1.msra.mxu0 0.0
        %2629 = vmatprep.subr.mxu0 0.0
        %2630 = vmatpush1.msra.mxu0 0.0
        %2631 = vmatprep.subr.mxu0 0.0
        %2632 = vmatpush1.msra.mxu0 0.0
        %2633 = vmatprep.subr.mxu0 0.0
        %2634 = vmatpush1.msra.mxu0 0.0
        %2635 = vmatprep.subr.mxu0 0.0
        %2636 = vmatpush1.msra.mxu0 0.0
        %2637 = vmatprep.subr.mxu0 0.0
        %2638 = vmatpush1.msra.mxu0 0.0
        %2639 = vmatprep.mubr.f32.mxu0 0.0
        %v2640 = vand.u32 %v1950, 4294901760
        %2641 = vmatmul.mubr.f32.gmra.mrb[0].mxu0 %v2640
        %v2642 = vpop.f32.mrb[0].mxu0
        %v2643 = vadd.f32 %v2550, %v2642
        %v2644 = vpop.f32.mrb[0].mxu0
        %2645 = vmatprep.mubr.f32.mxu0 0.0
        %v2646 = vand.u32 %v1951, 4294901760
        %2647 = vmatmul.mubr.f32.gmra.mrb[0].mxu0 %v2646
        %v2648 = vpop.f32.mrb[0].mxu0
        %v2649 = vadd.f32 %v2556, %v2648
        %v2650 = vpop.f32.mrb[0].mxu0
        %2651 = vdwg.mxu0
        %2652 = vxpose.xlu0.b32.start [1/16] %v2643, 128
        %2653 = vxpose.xlu0.b32.cont [2/16] %v2649, 128
        %2654 = vxpose.xlu0.b32.cont [3/16] 0.0, 128
        %2655 = vxpose.xlu0.b32.cont [4/16] 0.0, 128
        %2656 = vxpose.xlu0.b32.cont [5/16] 0.0, 128
        %2657 = vxpose.xlu0.b32.cont [6/16] 0.0, 128
        %2658 = vxpose.xlu0.b32.cont [7/16] 0.0, 128
        %2659 = vxpose.xlu0.b32.cont [8/16] 0.0, 128
        %2660 = vxpose.xlu0.b32.cont [9/16] 0.0, 128
        %2661 = vxpose.xlu0.b32.cont [10/16] 0.0, 128
        %2662 = vxpose.xlu0.b32.cont [11/16] 0.0, 128
        %2663 = vxpose.xlu0.b32.cont [12/16] 0.0, 128
        %2664 = vxpose.xlu0.b32.cont [13/16] 0.0, 128
        %2665 = vxpose.xlu0.b32.cont [14/16] 0.0, 128
        %2666 = vxpose.xlu0.b32.cont [15/16] 0.0, 128
        %2667 = vxpose.xlu0.b32.end [16/16] 0.0, 128
        %v2668 = vpop.trf.xlu0
        %v2669 = vpop.trf.xlu0
        %v2670 = vpop.trf.xlu0
        %v2671 = vpop.trf.xlu0
        %v2672 = vpop.trf.xlu0
        %v2673 = vpop.trf.xlu0
        %v2674 = vpop.trf.xlu0
        %v2675 = vpop.trf.xlu0
        %v2676 = vpop.trf.xlu0
        %v2677 = vpop.trf.xlu0
        %v2678 = vpop.trf.xlu0
        %v2679 = vpop.trf.xlu0
        %v2680 = vpop.trf.xlu0
        %v2681 = vpop.trf.xlu0
        %v2682 = vpop.trf.xlu0
        %v2683 = vpop.trf.xlu0
        %2686 = vrot.lane.b32.xlu0 %v2643, 64
        %v2687 = vpop.permute.xlu0 %2686
        %2688 = vrot.lane.b32.xlu0 %v2649, 64
        %v2689 = vpop.permute.xlu0 %2688
        %2692 = vxpose.xlu0.b32.start [1/16] %v2687, 128
        %2693 = vxpose.xlu0.b32.cont [2/16] %v2689, 128
        %2694 = vxpose.xlu0.b32.cont [3/16] 0.0, 128
        %2695 = vxpose.xlu0.b32.cont [4/16] 0.0, 128
        %2696 = vxpose.xlu0.b32.cont [5/16] 0.0, 128
        %2697 = vxpose.xlu0.b32.cont [6/16] 0.0, 128
        %2698 = vxpose.xlu0.b32.cont [7/16] 0.0, 128
        %2699 = vxpose.xlu0.b32.cont [8/16] 0.0, 128
        %2700 = vxpose.xlu0.b32.cont [9/16] 0.0, 128
        %2701 = vxpose.xlu0.b32.cont [10/16] 0.0, 128
        %2702 = vxpose.xlu0.b32.cont [11/16] 0.0, 128
        %2703 = vxpose.xlu0.b32.cont [12/16] 0.0, 128
        %2704 = vxpose.xlu0.b32.cont [13/16] 0.0, 128
        %2705 = vxpose.xlu0.b32.cont [14/16] 0.0, 128
        %2706 = vxpose.xlu0.b32.cont [15/16] 0.0, 128
        %2707 = vxpose.xlu0.b32.end [16/16] 0.0, 128
        %v2708 = vpop.trf.xlu0
        %v2709 = vpop.trf.xlu0
        %v2710 = vpop.trf.xlu0
        %v2711 = vpop.trf.xlu0
        %v2712 = vpop.trf.xlu0
        %v2713 = vpop.trf.xlu0
        %v2714 = vpop.trf.xlu0
        %v2715 = vpop.trf.xlu0
        %v2716 = vpop.trf.xlu0
        %v2717 = vpop.trf.xlu0
        %v2718 = vpop.trf.xlu0
        %v2719 = vpop.trf.xlu0
        %v2720 = vpop.trf.xlu0
        %v2721 = vpop.trf.xlu0
        %v2722 = vpop.trf.xlu0
        %v2723 = vpop.trf.xlu0
        %2732 = vrot.lane.b32.xlu0 %v2708, 16
        %v2733 = vpop.permute.xlu0 %2732
        %2734 = vrot.lane.b32.xlu0 %v2709, 16
        %v2735 = vpop.permute.xlu0 %2734
        %2736 = vrot.lane.b32.xlu0 %v2710, 16
        %v2737 = vpop.permute.xlu0 %2736
        %2738 = vrot.lane.b32.xlu0 %v2711, 16
        %v2739 = vpop.permute.xlu0 %2738
        %2740 = vrot.lane.b32.xlu0 %v2712, 16
        %v2741 = vpop.permute.xlu0 %2740
        %2742 = vrot.lane.b32.xlu0 %v2713, 16
        %v2743 = vpop.permute.xlu0 %2742
        %2744 = vrot.lane.b32.xlu0 %v2714, 16
        %v2745 = vpop.permute.xlu0 %2744
        %2746 = vrot.lane.b32.xlu0 %v2715, 16
        %v2747 = vpop.permute.xlu0 %2746
        %v2756 = vsel %vm356, %v2668, %v2733
        %v2757 = vsel %vm356, %v2669, %v2735
        %v2758 = vsel %vm356, %v2670, %v2737
        %v2759 = vsel %vm356, %v2671, %v2739
        %v2760 = vsel %vm356, %v2672, %v2741
        %v2761 = vsel %vm356, %v2673, %v2743
        %v2762 = vsel %vm356, %v2674, %v2745
        %v2763 = vsel %vm356, %v2675, %v2747
        %v2764 = vld [vmem:[#allocation10] sm:$0xff]
        %v2765 = vld [vmem:[#allocation10 + $0x8] sm:$0xff]
        %v2766 = vld [vmem:[#allocation10 + $0x10] sm:$0xff]
        %v2767 = vld [vmem:[#allocation10 + $0x18] sm:$0xff]
        %vm2768 = vcmask 261120
        %v2770 = vsel %vm2768, %v2756, 0
        %v2773 = vsel %vm2768, %v2757, 0
        %v2776 = vsel %vm2768, %v2758, 0
        %v2779 = vsel %vm2768, %v2759, 0
        %v2782 = vsel %vm2768, %v2760, 0
        %v2785 = vsel %vm2768, %v2761, 0
        %v2788 = vsel %vm2768, %v2762, 0
        %v2791 = vsel %vm2768, %v2763, 0
        %2793 = vmatprep.subr.mxu0 0.0
        %v2794 = vand.u32 %v2764, 4294901760
        %2795 = vmatpush1.msra.mxu0 %v2794
        %2796 = vmatprep.subr.mxu0 0.0
        %v2797 = vand.u32 %v2765, 4294901760
        %2798 = vmatpush1.msra.mxu0 %v2797
        %2799 = vmatprep.subr.mxu0 0.0
        %v2800 = vand.u32 %v2766, 4294901760
        %2801 = vmatpush1.msra.mxu0 %v2800
        %2802 = vmatprep.subr.mxu0 0.0
        %v2803 = vand.u32 %v2767, 4294901760
        %2804 = vmatpush1.msra.mxu0 %v2803
        %2805 = vmatprep.subr.mxu0 0.0
        %2806 = vmatpush1.msra.mxu0 0.0
        %2807 = vmatprep.subr.mxu0 0.0
        %2808 = vmatpush1.msra.mxu0 0.0
        %2809 = vmatprep.subr.mxu0 0.0
        %2810 = vmatpush1.msra.mxu0 0.0
        %2811 = vmatprep.subr.mxu0 0.0
        %2812 = vmatpush1.msra.mxu0 0.0
        %2813 = vmatprep.subr.mxu0 0.0
        %2814 = vmatpush1.msra.mxu0 0.0
        %2815 = vmatprep.subr.mxu0 0.0
        %2816 = vmatpush1.msra.mxu0 0.0
        %2817 = vmatprep.subr.mxu0 0.0
        %2818 = vmatpush1.msra.mxu0 0.0
        %2819 = vmatprep.subr.mxu0 0.0
        %2820 = vmatpush1.msra.mxu0 0.0
        %2821 = vmatprep.subr.mxu0 0.0
        %2822 = vmatpush1.msra.mxu0 0.0
        %2823 = vmatprep.subr.mxu0 0.0
        %2824 = vmatpush1.msra.mxu0 0.0
        %2825 = vmatprep.subr.mxu0 0.0
        %2826 = vmatpush1.msra.mxu0 0.0
        %2827 = vmatprep.subr.mxu0 0.0
        %2828 = vmatpush1.msra.mxu0 0.0
        %2829 = vmatprep.subr.mxu0 0.0
        %2830 = vmatpush1.msra.mxu0 0.0
        %2831 = vmatprep.subr.mxu0 0.0
        %2832 = vmatpush1.msra.mxu0 0.0
        %2833 = vmatprep.subr.mxu0 0.0
        %2834 = vmatpush1.msra.mxu0 0.0
        %2835 = vmatprep.subr.mxu0 0.0
        %2836 = vmatpush1.msra.mxu0 0.0
        %2837 = vmatprep.subr.mxu0 0.0
        %2838 = vmatpush1.msra.mxu0 0.0
        %2839 = vmatprep.subr.mxu0 0.0
        %2840 = vmatpush1.msra.mxu0 0.0
        %2841 = vmatprep.subr.mxu0 0.0
        %2842 = vmatpush1.msra.mxu0 0.0
        %2843 = vmatprep.subr.mxu0 0.0
        %2844 = vmatpush1.msra.mxu0 0.0
        %2845 = vmatprep.subr.mxu0 0.0
        %2846 = vmatpush1.msra.mxu0 0.0
        %2847 = vmatprep.subr.mxu0 0.0
        %2848 = vmatpush1.msra.mxu0 0.0
        %2849 = vmatprep.subr.mxu0 0.0
        %2850 = vmatpush1.msra.mxu0 0.0
        %2851 = vmatprep.subr.mxu0 0.0
        %2852 = vmatpush1.msra.mxu0 0.0
        %2853 = vmatprep.subr.mxu0 0.0
        %2854 = vmatpush1.msra.mxu0 0.0
        %2855 = vmatprep.subr.mxu0 0.0
        %2856 = vmatpush1.msra.mxu0 0.0
        %2857 = vmatprep.subr.mxu0 0.0
        %2858 = vmatpush1.msra.mxu0 0.0
        %2859 = vmatprep.subr.mxu0 0.0
        %2860 = vmatpush1.msra.mxu0 0.0
        %2861 = vmatprep.mubr.f32.mxu0 0.0
        %v2862 = vand.u32 %v2770, 4294901760
        %v2863 = vsub.f32 %v2770, %v2862
        %v2864 = vand.u32 %v2863, 4294901760
        %v2865 = vsub.f32 %v2863, %v2864
        %v2866 = vand.u32 %v2865, 4294901760
        %2867 = vmatmul.mubr.f32.gmra.mrb[0].mxu0 %v2866
        %v2868 = vpop.f32.mrb[0].mxu0
        %v2869 = vadd.f32 0.0, %v2868
        %v2870 = vpop.f32.mrb[0].mxu0
        %2871 = vmatprep.mubr.f32.mxu0 0.0
        %v2872 = vand.u32 %v2773, 4294901760
        %v2873 = vsub.f32 %v2773, %v2872
        %v2874 = vand.u32 %v2873, 4294901760
        %v2875 = vsub.f32 %v2873, %v2874
        %v2876 = vand.u32 %v2875, 4294901760
        %2877 = vmatmul.mubr.f32.gmra.mrb[0].mxu0 %v2876
        %v2878 = vpop.f32.mrb[0].mxu0
        %v2879 = vadd.f32 0.0, %v2878
        %v2880 = vpop.f32.mrb[0].mxu0
        %2881 = vmatprep.mubr.f32.mxu0 0.0
        %v2882 = vand.u32 %v2776, 4294901760
        %v2883 = vsub.f32 %v2776, %v2882
        %v2884 = vand.u32 %v2883, 4294901760
        %v2885 = vsub.f32 %v2883, %v2884
        %v2886 = vand.u32 %v2885, 4294901760
        %2887 = vmatmul.mubr.f32.gmra.mrb[0].mxu0 %v2886
        %v2888 = vpop.f32.mrb[0].mxu0
        %v2889 = vadd.f32 0.0, %v2888
        %v2890 = vpop.f32.mrb[0].mxu0
        %2891 = vmatprep.mubr.f32.mxu0 0.0
        %v2892 = vand.u32 %v2779, 4294901760
        %v2893 = vsub.f32 %v2779, %v2892
        %v2894 = vand.u32 %v2893, 4294901760
        %v2895 = vsub.f32 %v2893, %v2894
        %v2896 = vand.u32 %v2895, 4294901760
        %2897 = vmatmul.mubr.f32.gmra.mrb[0].mxu0 %v2896
        %v2898 = vpop.f32.mrb[0].mxu0
        %v2899 = vadd.f32 0.0, %v2898
        %v2900 = vpop.f32.mrb[0].mxu0
        %2901 = vmatprep.mubr.f32.mxu0 0.0
        %v2902 = vand.u32 %v2782, 4294901760
        %v2903 = vsub.f32 %v2782, %v2902
        %v2904 = vand.u32 %v2903, 4294901760
        %v2905 = vsub.f32 %v2903, %v2904
        %v2906 = vand.u32 %v2905, 4294901760
        %2907 = vmatmul.mubr.f32.gmra.mrb[0].mxu0 %v2906
        %v2908 = vpop.f32.mrb[0].mxu0
        %v2909 = vadd.f32 0.0, %v2908
        %v2910 = vpop.f32.mrb[0].mxu0
        %2911 = vmatprep.mubr.f32.mxu0 0.0
        %v2912 = vand.u32 %v2785, 4294901760
        %v2913 = vsub.f32 %v2785, %v2912
        %v2914 = vand.u32 %v2913, 4294901760
        %v2915 = vsub.f32 %v2913, %v2914
        %v2916 = vand.u32 %v2915, 4294901760
        %2917 = vmatmul.mubr.f32.gmra.mrb[0].mxu0 %v2916
        %v2918 = vpop.f32.mrb[0].mxu0
        %v2919 = vadd.f32 0.0, %v2918
        %v2920 = vpop.f32.mrb[0].mxu0
        %2921 = vmatprep.mubr.f32.mxu0 0.0
        %v2922 = vand.u32 %v2788, 4294901760
        %v2923 = vsub.f32 %v2788, %v2922
        %v2924 = vand.u32 %v2923, 4294901760
        %v2925 = vsub.f32 %v2923, %v2924
        %v2926 = vand.u32 %v2925, 4294901760
        %2927 = vmatmul.mubr.f32.gmra.mrb[0].mxu0 %v2926
        %v2928 = vpop.f32.mrb[0].mxu0
        %v2929 = vadd.f32 0.0, %v2928
        %v2930 = vpop.f32.mrb[0].mxu0
        %2931 = vmatprep.mubr.f32.mxu0 0.0
        %v2932 = vand.u32 %v2791, 4294901760
        %v2933 = vsub.f32 %v2791, %v2932
        %v2934 = vand.u32 %v2933, 4294901760
        %v2935 = vsub.f32 %v2933, %v2934
        %v2936 = vand.u32 %v2935, 4294901760
        %2937 = vmatmul.mubr.f32.gmra.mrb[0].mxu0 %v2936
        %v2938 = vpop.f32.mrb[0].mxu0
        %v2939 = vadd.f32 0.0, %v2938
        %v2940 = vpop.f32.mrb[0].mxu0
        %2941 = vdwg.mxu0
        %2942 = vmatprep.subr.mxu0 0.0
        %v2943 = vand.u32 %v2764, 4294901760
        %v2944 = vsub.f32 %v2764, %v2943
        %v2945 = vand.u32 %v2944, 4294901760
        %v2946 = vsub.f32 %v2944, %v2945
        %v2947 = vand.u32 %v2946, 4294901760
        %2948 = vmatpush1.msra.mxu0 %v2947
        %2949 = vmatprep.subr.mxu0 0.0
        %v2950 = vand.u32 %v2765, 4294901760
        %v2951 = vsub.f32 %v2765, %v2950
        %v2952 = vand.u32 %v2951, 4294901760
        %v2953 = vsub.f32 %v2951, %v2952
        %v2954 = vand.u32 %v2953, 4294901760
        %2955 = vmatpush1.msra.mxu0 %v2954
        %2956 = vmatprep.subr.mxu0 0.0
        %v2957 = vand.u32 %v2766, 4294901760
        %v2958 = vsub.f32 %v2766, %v2957
        %v2959 = vand.u32 %v2958, 4294901760
        %v2960 = vsub.f32 %v2958, %v2959
        %v2961 = vand.u32 %v2960, 4294901760
        %2962 = vmatpush1.msra.mxu0 %v2961
        %2963 = vmatprep.subr.mxu0 0.0
        %v2964 = vand.u32 %v2767, 4294901760
        %v2965 = vsub.f32 %v2767, %v2964
        %v2966 = vand.u32 %v2965, 4294901760
        %v2967 = vsub.f32 %v2965, %v2966
        %v2968 = vand.u32 %v2967, 4294901760
        %2969 = vmatpush1.msra.mxu0 %v2968
        %2970 = vmatprep.subr.mxu0 0.0
        %2971 = vmatpush1.msra.mxu0 0.0
        %2972 = vmatprep.subr.mxu0 0.0
        %2973 = vmatpush1.msra.mxu0 0.0
        %2974 = vmatprep.subr.mxu0 0.0
        %2975 = vmatpush1.msra.mxu0 0.0
        %2976 = vmatprep.subr.mxu0 0.0
        %2977 = vmatpush1.msra.mxu0 0.0
        %2978 = vmatprep.subr.mxu0 0.0
        %2979 = vmatpush1.msra.mxu0 0.0
        %2980 = vmatprep.subr.mxu0 0.0
        %2981 = vmatpush1.msra.mxu0 0.0
        %2982 = vmatprep.subr.mxu0 0.0
        %2983 = vmatpush1.msra.mxu0 0.0
        %2984 = vmatprep.subr.mxu0 0.0
        %2985 = vmatpush1.msra.mxu0 0.0
        %2986 = vmatprep.subr.mxu0 0.0
        %2987 = vmatpush1.msra.mxu0 0.0
        %2988 = vmatprep.subr.mxu0 0.0
        %2989 = vmatpush1.msra.mxu0 0.0
        %2990 = vmatprep.subr.mxu0 0.0
        %2991 = vmatpush1.msra.mxu0 0.0
        %2992 = vmatprep.subr.mxu0 0.0
        %2993 = vmatpush1.msra.mxu0 0.0
        %2994 = vmatprep.subr.mxu0 0.0
        %2995 = vmatpush1.msra.mxu0 0.0
        %2996 = vmatprep.subr.mxu0 0.0
        %2997 = vmatpush1.msra.mxu0 0.0
        %2998 = vmatprep.subr.mxu0 0.0
        %2999 = vmatpush1.msra.mxu0 0.0
        %3000 = vmatprep.subr.mxu0 0.0
        %3001 = vmatpush1.msra.mxu0 0.0
        %3002 = vmatprep.subr.mxu0 0.0
        %3003 = vmatpush1.msra.mxu0 0.0
        %3004 = vmatprep.subr.mxu0 0.0
        %3005 = vmatpush1.msra.mxu0 0.0
        %3006 = vmatprep.subr.mxu0 0.0
        %3007 = vmatpush1.msra.mxu0 0.0
        %3008 = vmatprep.subr.mxu0 0.0
        %3009 = vmatpush1.msra.mxu0 0.0
        %3010 = vmatprep.subr.mxu0 0.0
        %3011 = vmatpush1.msra.mxu0 0.0
        %3012 = vmatprep.subr.mxu0 0.0
        %3013 = vmatpush1.msra.mxu0 0.0
        %3014 = vmatprep.subr.mxu0 0.0
        %3015 = vmatpush1.msra.mxu0 0.0
        %3016 = vmatprep.subr.mxu0 0.0
        %3017 = vmatpush1.msra.mxu0 0.0
        %3018 = vmatprep.subr.mxu0 0.0
        %3019 = vmatpush1.msra.mxu0 0.0
        %3020 = vmatprep.subr.mxu0 0.0
        %3021 = vmatpush1.msra.mxu0 0.0
        %3022 = vmatprep.subr.mxu0 0.0
        %3023 = vmatpush1.msra.mxu0 0.0
        %3024 = vmatprep.subr.mxu0 0.0
        %3025 = vmatpush1.msra.mxu0 0.0
        %3026 = vmatprep.mubr.f32.mxu0 0.0
        %v3027 = vand.u32 %v2770, 4294901760
        %3028 = vmatmul.mubr.f32.gmra.mrb[0].mxu0 %v3027
        %v3029 = vpop.f32.mrb[0].mxu0
        %v3030 = vadd.f32 %v2869, %v3029
        %v3031 = vpop.f32.mrb[0].mxu0
        %3032 = vmatprep.mubr.f32.mxu0 0.0
        %v3033 = vand.u32 %v2773, 4294901760
        %3034 = vmatmul.mubr.f32.gmra.mrb[0].mxu0 %v3033
        %v3035 = vpop.f32.mrb[0].mxu0
        %v3036 = vadd.f32 %v2879, %v3035
        %v3037 = vpop.f32.mrb[0].mxu0
        %3038 = vmatprep.mubr.f32.mxu0 0.0
        %v3039 = vand.u32 %v2776, 4294901760
        %3040 = vmatmul.mubr.f32.gmra.mrb[0].mxu0 %v3039
        %v3041 = vpop.f32.mrb[0].mxu0
        %v3042 = vadd.f32 %v2889, %v3041
        %v3043 = vpop.f32.mrb[0].mxu0
        %3044 = vmatprep.mubr.f32.mxu0 0.0
        %v3045 = vand.u32 %v2779, 4294901760
        %3046 = vmatmul.mubr.f32.gmra.mrb[0].mxu0 %v3045
        %v3047 = vpop.f32.mrb[0].mxu0
        %v3048 = vadd.f32 %v2899, %v3047
        %v3049 = vpop.f32.mrb[0].mxu0
        %3050 = vmatprep.mubr.f32.mxu0 0.0
        %v3051 = vand.u32 %v2782, 4294901760
        %3052 = vmatmul.mubr.f32.gmra.mrb[0].mxu0 %v3051
        %v3053 = vpop.f32.mrb[0].mxu0
        %v3054 = vadd.f32 %v2909, %v3053
        %v3055 = vpop.f32.mrb[0].mxu0
        %3056 = vmatprep.mubr.f32.mxu0 0.0
        %v3057 = vand.u32 %v2785, 4294901760
        %3058 = vmatmul.mubr.f32.gmra.mrb[0].mxu0 %v3057
        %v3059 = vpop.f32.mrb[0].mxu0
        %v3060 = vadd.f32 %v2919, %v3059
        %v3061 = vpop.f32.mrb[0].mxu0
        %3062 = vmatprep.mubr.f32.mxu0 0.0
        %v3063 = vand.u32 %v2788, 4294901760
        %3064 = vmatmul.mubr.f32.gmra.mrb[0].mxu0 %v3063
        %v3065 = vpop.f32.mrb[0].mxu0
        %v3066 = vadd.f32 %v2929, %v3065
        %v3067 = vpop.f32.mrb[0].mxu0
        %3068 = vmatprep.mubr.f32.mxu0 0.0
        %v3069 = vand.u32 %v2791, 4294901760
        %3070 = vmatmul.mubr.f32.gmra.mrb[0].mxu0 %v3069
        %v3071 = vpop.f32.mrb[0].mxu0
        %v3072 = vadd.f32 %v2939, %v3071
        %v3073 = vpop.f32.mrb[0].mxu0
        %3074 = vdwg.mxu0
        %3075 = vmatprep.subr.mxu0 0.0
        %v3076 = vand.u32 %v2764, 4294901760
        %v3077 = vsub.f32 %v2764, %v3076
        %3078 = vmatpush1.msra.mxu0 %v3077
        %3079 = vmatprep.subr.mxu0 0.0
        %v3080 = vand.u32 %v2765, 4294901760
        %v3081 = vsub.f32 %v2765, %v3080
        %3082 = vmatpush1.msra.mxu0 %v3081
        %3083 = vmatprep.subr.mxu0 0.0
        %v3084 = vand.u32 %v2766, 4294901760
        %v3085 = vsub.f32 %v2766, %v3084
        %3086 = vmatpush1.msra.mxu0 %v3085
        %3087 = vmatprep.subr.mxu0 0.0
        %v3088 = vand.u32 %v2767, 4294901760
        %v3089 = vsub.f32 %v2767, %v3088
        %3090 = vmatpush1.msra.mxu0 %v3089
        %3091 = vmatprep.subr.mxu0 0.0
        %3092 = vmatpush1.msra.mxu0 0.0
        %3093 = vmatprep.subr.mxu0 0.0
        %3094 = vmatpush1.msra.mxu0 0.0
        %3095 = vmatprep.subr.mxu0 0.0
        %3096 = vmatpush1.msra.mxu0 0.0
        %3097 = vmatprep.subr.mxu0 0.0
        %3098 = vmatpush1.msra.mxu0 0.0
        %3099 = vmatprep.subr.mxu0 0.0
        %3100 = vmatpush1.msra.mxu0 0.0
        %3101 = vmatprep.subr.mxu0 0.0
        %3102 = vmatpush1.msra.mxu0 0.0
        %3103 = vmatprep.subr.mxu0 0.0
        %3104 = vmatpush1.msra.mxu0 0.0
        %3105 = vmatprep.subr.mxu0 0.0
        %3106 = vmatpush1.msra.mxu0 0.0
        %3107 = vmatprep.subr.mxu0 0.0
        %3108 = vmatpush1.msra.mxu0 0.0
        %3109 = vmatprep.subr.mxu0 0.0
        %3110 = vmatpush1.msra.mxu0 0.0
        %3111 = vmatprep.subr.mxu0 0.0
        %3112 = vmatpush1.msra.mxu0 0.0
        %3113 = vmatprep.subr.mxu0 0.0
        %3114 = vmatpush1.msra.mxu0 0.0
        %3115 = vmatprep.subr.mxu0 0.0
        %3116 = vmatpush1.msra.mxu0 0.0
        %3117 = vmatprep.subr.mxu0 0.0
        %3118 = vmatpush1.msra.mxu0 0.0
        %3119 = vmatprep.subr.mxu0 0.0
        %3120 = vmatpush1.msra.mxu0 0.0
        %3121 = vmatprep.subr.mxu0 0.0
        %3122 = vmatpush1.msra.mxu0 0.0
        %3123 = vmatprep.subr.mxu0 0.0
        %3124 = vmatpush1.msra.mxu0 0.0
        %3125 = vmatprep.subr.mxu0 0.0
        %3126 = vmatpush1.msra.mxu0 0.0
        %3127 = vmatprep.subr.mxu0 0.0
        %3128 = vmatpush1.msra.mxu0 0.0
        %3129 = vmatprep.subr.mxu0 0.0
        %3130 = vmatpush1.msra.mxu0 0.0
        %3131 = vmatprep.subr.mxu0 0.0
        %3132 = vmatpush1.msra.mxu0 0.0
        %3133 = vmatprep.subr.mxu0 0.0
        %3134 = vmatpush1.msra.mxu0 0.0
        %3135 = vmatprep.subr.mxu0 0.0
        %3136 = vmatpush1.msra.mxu0 0.0
        %3137 = vmatprep.subr.mxu0 0.0
        %3138 = vmatpush1.msra.mxu0 0.0
        %3139 = vmatprep.subr.mxu0 0.0
        %3140 = vmatpush1.msra.mxu0 0.0
        %3141 = vmatprep.subr.mxu0 0.0
        %3142 = vmatpush1.msra.mxu0 0.0
        %3143 = vmatprep.subr.mxu0 0.0
        %3144 = vmatpush1.msra.mxu0 0.0
        %3145 = vmatprep.subr.mxu0 0.0
        %3146 = vmatpush1.msra.mxu0 0.0
        %3147 = vmatprep.mubr.f32.mxu0 0.0
        %v3148 = vand.u32 %v2770, 4294901760
        %v3149 = vsub.f32 %v2770, %v3148
        %3150 = vmatmul.mubr.f32.gmra.mrb[0].mxu0 %v3149
        %v3151 = vpop.f32.mrb[0].mxu0
        %v3152 = vadd.f32 %v3030, %v3151
        %v3153 = vpop.f32.mrb[0].mxu0
        %3154 = vmatprep.mubr.f32.mxu0 0.0
        %v3155 = vand.u32 %v2773, 4294901760
        %v3156 = vsub.f32 %v2773, %v3155
        %3157 = vmatmul.mubr.f32.gmra.mrb[0].mxu0 %v3156
        %v3158 = vpop.f32.mrb[0].mxu0
        %v3159 = vadd.f32 %v3036, %v3158
        %v3160 = vpop.f32.mrb[0].mxu0
        %3161 = vmatprep.mubr.f32.mxu0 0.0
        %v3162 = vand.u32 %v2776, 4294901760
        %v3163 = vsub.f32 %v2776, %v3162
        %3164 = vmatmul.mubr.f32.gmra.mrb[0].mxu0 %v3163
        %v3165 = vpop.f32.mrb[0].mxu0
        %v3166 = vadd.f32 %v3042, %v3165
        %v3167 = vpop.f32.mrb[0].mxu0
        %3168 = vmatprep.mubr.f32.mxu0 0.0
        %v3169 = vand.u32 %v2779, 4294901760
        %v3170 = vsub.f32 %v2779, %v3169
        %3171 = vmatmul.mubr.f32.gmra.mrb[0].mxu0 %v3170
        %v3172 = vpop.f32.mrb[0].mxu0
        %v3173 = vadd.f32 %v3048, %v3172
        %v3174 = vpop.f32.mrb[0].mxu0
        %3175 = vmatprep.mubr.f32.mxu0 0.0
        %v3176 = vand.u32 %v2782, 4294901760
        %v3177 = vsub.f32 %v2782, %v3176
        %3178 = vmatmul.mubr.f32.gmra.mrb[0].mxu0 %v3177
        %v3179 = vpop.f32.mrb[0].mxu0
        %v3180 = vadd.f32 %v3054, %v3179
        %v3181 = vpop.f32.mrb[0].mxu0
        %3182 = vmatprep.mubr.f32.mxu0 0.0
        %v3183 = vand.u32 %v2785, 4294901760
        %v3184 = vsub.f32 %v2785, %v3183
        %3185 = vmatmul.mubr.f32.gmra.mrb[0].mxu0 %v3184
        %v3186 = vpop.f32.mrb[0].mxu0
        %v3187 = vadd.f32 %v3060, %v3186
        %v3188 = vpop.f32.mrb[0].mxu0
        %3189 = vmatprep.mubr.f32.mxu0 0.0
        %v3190 = vand.u32 %v2788, 4294901760
        %v3191 = vsub.f32 %v2788, %v3190
        %3192 = vmatmul.mubr.f32.gmra.mrb[0].mxu0 %v3191
        %v3193 = vpop.f32.mrb[0].mxu0
        %v3194 = vadd.f32 %v3066, %v3193
        %v3195 = vpop.f32.mrb[0].mxu0
        %3196 = vmatprep.mubr.f32.mxu0 0.0
        %v3197 = vand.u32 %v2791, 4294901760
        %v3198 = vsub.f32 %v2791, %v3197
        %3199 = vmatmul.mubr.f32.gmra.mrb[0].mxu0 %v3198
        %v3200 = vpop.f32.mrb[0].mxu0
        %v3201 = vadd.f32 %v3072, %v3200
        %v3202 = vpop.f32.mrb[0].mxu0
        %3203 = vdwg.mxu0
        %3204 = vmatprep.subr.mxu0 0.0
        %v3205 = vand.u32 %v2764, 4294901760
        %3206 = vmatpush1.msra.mxu0 %v3205
        %3207 = vmatprep.subr.mxu0 0.0
        %v3208 = vand.u32 %v2765, 4294901760
        %3209 = vmatpush1.msra.mxu0 %v3208
        %3210 = vmatprep.subr.mxu0 0.0
        %v3211 = vand.u32 %v2766, 4294901760
        %3212 = vmatpush1.msra.mxu0 %v3211
        %3213 = vmatprep.subr.mxu0 0.0
        %v3214 = vand.u32 %v2767, 4294901760
        %3215 = vmatpush1.msra.mxu0 %v3214
        %3216 = vmatprep.subr.mxu0 0.0
        %3217 = vmatpush1.msra.mxu0 0.0
        %3218 = vmatprep.subr.mxu0 0.0
        %3219 = vmatpush1.msra.mxu0 0.0
        %3220 = vmatprep.subr.mxu0 0.0
        %3221 = vmatpush1.msra.mxu0 0.0
        %3222 = vmatprep.subr.mxu0 0.0
        %3223 = vmatpush1.msra.mxu0 0.0
        %3224 = vmatprep.subr.mxu0 0.0
        %3225 = vmatpush1.msra.mxu0 0.0
        %3226 = vmatprep.subr.mxu0 0.0
        %3227 = vmatpush1.msra.mxu0 0.0
        %3228 = vmatprep.subr.mxu0 0.0
        %3229 = vmatpush1.msra.mxu0 0.0
        %3230 = vmatprep.subr.mxu0 0.0
        %3231 = vmatpush1.msra.mxu0 0.0
        %3232 = vmatprep.subr.mxu0 0.0
        %3233 = vmatpush1.msra.mxu0 0.0
        %3234 = vmatprep.subr.mxu0 0.0
        %3235 = vmatpush1.msra.mxu0 0.0
        %3236 = vmatprep.subr.mxu0 0.0
        %3237 = vmatpush1.msra.mxu0 0.0
        %3238 = vmatprep.subr.mxu0 0.0
        %3239 = vmatpush1.msra.mxu0 0.0
        %3240 = vmatprep.subr.mxu0 0.0
        %3241 = vmatpush1.msra.mxu0 0.0
        %3242 = vmatprep.subr.mxu0 0.0
        %3243 = vmatpush1.msra.mxu0 0.0
        %3244 = vmatprep.subr.mxu0 0.0
        %3245 = vmatpush1.msra.mxu0 0.0
        %3246 = vmatprep.subr.mxu0 0.0
        %3247 = vmatpush1.msra.mxu0 0.0
        %3248 = vmatprep.subr.mxu0 0.0
        %3249 = vmatpush1.msra.mxu0 0.0
        %3250 = vmatprep.subr.mxu0 0.0
        %3251 = vmatpush1.msra.mxu0 0.0
        %3252 = vmatprep.subr.mxu0 0.0
        %3253 = vmatpush1.msra.mxu0 0.0
        %3254 = vmatprep.subr.mxu0 0.0
        %3255 = vmatpush1.msra.mxu0 0.0
        %3256 = vmatprep.subr.mxu0 0.0
        %3257 = vmatpush1.msra.mxu0 0.0
        %3258 = vmatprep.subr.mxu0 0.0
        %3259 = vmatpush1.msra.mxu0 0.0
        %3260 = vmatprep.subr.mxu0 0.0
        %3261 = vmatpush1.msra.mxu0 0.0
        %3262 = vmatprep.subr.mxu0 0.0
        %3263 = vmatpush1.msra.mxu0 0.0
        %3264 = vmatprep.subr.mxu0 0.0
        %3265 = vmatpush1.msra.mxu0 0.0
        %3266 = vmatprep.subr.mxu0 0.0
        %3267 = vmatpush1.msra.mxu0 0.0
        %3268 = vmatprep.subr.mxu0 0.0
        %3269 = vmatpush1.msra.mxu0 0.0
        %3270 = vmatprep.subr.mxu0 0.0
        %3271 = vmatpush1.msra.mxu0 0.0
        %3272 = vmatprep.mubr.f32.mxu0 0.0
        %v3273 = vand.u32 %v2770, 4294901760
        %v3274 = vsub.f32 %v2770, %v3273
        %v3275 = vand.u32 %v3274, 4294901760
        %3276 = vmatmul.mubr.f32.gmra.mrb[0].mxu0 %v3275
        %v3277 = vpop.f32.mrb[0].mxu0
        %v3278 = vadd.f32 %v3152, %v3277
        %v3279 = vpop.f32.mrb[0].mxu0
        %3280 = vmatprep.mubr.f32.mxu0 0.0
        %v3281 = vand.u32 %v2773, 4294901760
        %v3282 = vsub.f32 %v2773, %v3281
        %v3283 = vand.u32 %v3282, 4294901760
        %3284 = vmatmul.mubr.f32.gmra.mrb[0].mxu0 %v3283
        %v3285 = vpop.f32.mrb[0].mxu0
        %v3286 = vadd.f32 %v3159, %v3285
        %v3287 = vpop.f32.mrb[0].mxu0
        %3288 = vmatprep.mubr.f32.mxu0 0.0
        %v3289 = vand.u32 %v2776, 4294901760
        %v3290 = vsub.f32 %v2776, %v3289
        %v3291 = vand.u32 %v3290, 4294901760
        %3292 = vmatmul.mubr.f32.gmra.mrb[0].mxu0 %v3291
        %v3293 = vpop.f32.mrb[0].mxu0
        %v3294 = vadd.f32 %v3166, %v3293
        %v3295 = vpop.f32.mrb[0].mxu0
        %3296 = vmatprep.mubr.f32.mxu0 0.0
        %v3297 = vand.u32 %v2779, 4294901760
        %v3298 = vsub.f32 %v2779, %v3297
        %v3299 = vand.u32 %v3298, 4294901760
        %3300 = vmatmul.mubr.f32.gmra.mrb[0].mxu0 %v3299
        %v3301 = vpop.f32.mrb[0].mxu0
        %v3302 = vadd.f32 %v3173, %v3301
        %v3303 = vpop.f32.mrb[0].mxu0
        %3304 = vmatprep.mubr.f32.mxu0 0.0
        %v3305 = vand.u32 %v2782, 4294901760
        %v3306 = vsub.f32 %v2782, %v3305
        %v3307 = vand.u32 %v3306, 4294901760
        %3308 = vmatmul.mubr.f32.gmra.mrb[0].mxu0 %v3307
        %v3309 = vpop.f32.mrb[0].mxu0
        %v3310 = vadd.f32 %v3180, %v3309
        %v3311 = vpop.f32.mrb[0].mxu0
        %3312 = vmatprep.mubr.f32.mxu0 0.0
        %v3313 = vand.u32 %v2785, 4294901760
        %v3314 = vsub.f32 %v2785, %v3313
        %v3315 = vand.u32 %v3314, 4294901760
        %3316 = vmatmul.mubr.f32.gmra.mrb[0].mxu0 %v3315
        %v3317 = vpop.f32.mrb[0].mxu0
        %v3318 = vadd.f32 %v3187, %v3317
        %v3319 = vpop.f32.mrb[0].mxu0
        %3320 = vmatprep.mubr.f32.mxu0 0.0
        %v3321 = vand.u32 %v2788, 4294901760
        %v3322 = vsub.f32 %v2788, %v3321
        %v3323 = vand.u32 %v3322, 4294901760
        %3324 = vmatmul.mubr.f32.gmra.mrb[0].mxu0 %v3323
        %v3325 = vpop.f32.mrb[0].mxu0
        %v3326 = vadd.f32 %v3194, %v3325
        %v3327 = vpop.f32.mrb[0].mxu0
        %3328 = vmatprep.mubr.f32.mxu0 0.0
        %v3329 = vand.u32 %v2791, 4294901760
        %v3330 = vsub.f32 %v2791, %v3329
        %v3331 = vand.u32 %v3330, 4294901760
        %3332 = vmatmul.mubr.f32.gmra.mrb[0].mxu0 %v3331
        %v3333 = vpop.f32.mrb[0].mxu0
        %v3334 = vadd.f32 %v3201, %v3333
        %v3335 = vpop.f32.mrb[0].mxu0
        %3336 = vdwg.mxu0
        %3337 = vmatprep.subr.mxu0 0.0
        %v3338 = vand.u32 %v2764, 4294901760
        %v3339 = vsub.f32 %v2764, %v3338
        %v3340 = vand.u32 %v3339, 4294901760
        %3341 = vmatpush1.msra.mxu0 %v3340
        %3342 = vmatprep.subr.mxu0 0.0
        %v3343 = vand.u32 %v2765, 4294901760
        %v3344 = vsub.f32 %v2765, %v3343
        %v3345 = vand.u32 %v3344, 4294901760
        %3346 = vmatpush1.msra.mxu0 %v3345
        %3347 = vmatprep.subr.mxu0 0.0
        %v3348 = vand.u32 %v2766, 4294901760
        %v3349 = vsub.f32 %v2766, %v3348
        %v3350 = vand.u32 %v3349, 4294901760
        %3351 = vmatpush1.msra.mxu0 %v3350
        %3352 = vmatprep.subr.mxu0 0.0
        %v3353 = vand.u32 %v2767, 4294901760
        %v3354 = vsub.f32 %v2767, %v3353
        %v3355 = vand.u32 %v3354, 4294901760
        %3356 = vmatpush1.msra.mxu0 %v3355
        %3357 = vmatprep.subr.mxu0 0.0
        %3358 = vmatpush1.msra.mxu0 0.0
        %3359 = vmatprep.subr.mxu0 0.0
        %3360 = vmatpush1.msra.mxu0 0.0
        %3361 = vmatprep.subr.mxu0 0.0
        %3362 = vmatpush1.msra.mxu0 0.0
        %3363 = vmatprep.subr.mxu0 0.0
        %3364 = vmatpush1.msra.mxu0 0.0
        %3365 = vmatprep.subr.mxu0 0.0
        %3366 = vmatpush1.msra.mxu0 0.0
        %3367 = vmatprep.subr.mxu0 0.0
        %3368 = vmatpush1.msra.mxu0 0.0
        %3369 = vmatprep.subr.mxu0 0.0
        %3370 = vmatpush1.msra.mxu0 0.0
        %3371 = vmatprep.subr.mxu0 0.0
        %3372 = vmatpush1.msra.mxu0 0.0
        %3373 = vmatprep.subr.mxu0 0.0
        %3374 = vmatpush1.msra.mxu0 0.0
        %3375 = vmatprep.subr.mxu0 0.0
        %3376 = vmatpush1.msra.mxu0 0.0
        %3377 = vmatprep.subr.mxu0 0.0
        %3378 = vmatpush1.msra.mxu0 0.0
        %3379 = vmatprep.subr.mxu0 0.0
        %3380 = vmatpush1.msra.mxu0 0.0
        %3381 = vmatprep.subr.mxu0 0.0
        %3382 = vmatpush1.msra.mxu0 0.0
        %3383 = vmatprep.subr.mxu0 0.0
        %3384 = vmatpush1.msra.mxu0 0.0
        %3385 = vmatprep.subr.mxu0 0.0
        %3386 = vmatpush1.msra.mxu0 0.0
        %3387 = vmatprep.subr.mxu0 0.0
        %3388 = vmatpush1.msra.mxu0 0.0
        %3389 = vmatprep.subr.mxu0 0.0
        %3390 = vmatpush1.msra.mxu0 0.0
        %3391 = vmatprep.subr.mxu0 0.0
        %3392 = vmatpush1.msra.mxu0 0.0
        %3393 = vmatprep.subr.mxu0 0.0
        %3394 = vmatpush1.msra.mxu0 0.0
        %3395 = vmatprep.subr.mxu0 0.0
        %3396 = vmatpush1.msra.mxu0 0.0
        %3397 = vmatprep.subr.mxu0 0.0
        %3398 = vmatpush1.msra.mxu0 0.0
        %3399 = vmatprep.subr.mxu0 0.0
        %3400 = vmatpush1.msra.mxu0 0.0
        %3401 = vmatprep.subr.mxu0 0.0
        %3402 = vmatpush1.msra.mxu0 0.0
        %3403 = vmatprep.subr.mxu0 0.0
        %3404 = vmatpush1.msra.mxu0 0.0
        %3405 = vmatprep.subr.mxu0 0.0
        %3406 = vmatpush1.msra.mxu0 0.0
        %3407 = vmatprep.subr.mxu0 0.0
        %3408 = vmatpush1.msra.mxu0 0.0
        %3409 = vmatprep.subr.mxu0 0.0
        %3410 = vmatpush1.msra.mxu0 0.0
        %3411 = vmatprep.subr.mxu0 0.0
        %3412 = vmatpush1.msra.mxu0 0.0
        %3413 = vmatprep.mubr.f32.mxu0 0.0
        %v3414 = vand.u32 %v2770, 4294901760
        %3415 = vmatmul.mubr.f32.gmra.mrb[0].mxu0 %v3414
        %v3416 = vpop.f32.mrb[0].mxu0
        %v3417 = vadd.f32 %v3278, %v3416
        %v3418 = vpop.f32.mrb[0].mxu0
        %3419 = vmatprep.mubr.f32.mxu0 0.0
        %v3420 = vand.u32 %v2773, 4294901760
        %3421 = vmatmul.mubr.f32.gmra.mrb[0].mxu0 %v3420
        %v3422 = vpop.f32.mrb[0].mxu0
        %v3423 = vadd.f32 %v3286, %v3422
        %v3424 = vpop.f32.mrb[0].mxu0
        %3425 = vmatprep.mubr.f32.mxu0 0.0
        %v3426 = vand.u32 %v2776, 4294901760
        %3427 = vmatmul.mubr.f32.gmra.mrb[0].mxu0 %v3426
        %v3428 = vpop.f32.mrb[0].mxu0
        %v3429 = vadd.f32 %v3294, %v3428
        %v3430 = vpop.f32.mrb[0].mxu0
        %3431 = vmatprep.mubr.f32.mxu0 0.0
        %v3432 = vand.u32 %v2779, 4294901760
        %3433 = vmatmul.mubr.f32.gmra.mrb[0].mxu0 %v3432
        %v3434 = vpop.f32.mrb[0].mxu0
        %v3435 = vadd.f32 %v3302, %v3434
        %v3436 = vpop.f32.mrb[0].mxu0
        %3437 = vmatprep.mubr.f32.mxu0 0.0
        %v3438 = vand.u32 %v2782, 4294901760
        %3439 = vmatmul.mubr.f32.gmra.mrb[0].mxu0 %v3438
        %v3440 = vpop.f32.mrb[0].mxu0
        %v3441 = vadd.f32 %v3310, %v3440
        %v3442 = vpop.f32.mrb[0].mxu0
        %3443 = vmatprep.mubr.f32.mxu0 0.0
        %v3444 = vand.u32 %v2785, 4294901760
        %3445 = vmatmul.mubr.f32.gmra.mrb[0].mxu0 %v3444
        %v3446 = vpop.f32.mrb[0].mxu0
        %v3447 = vadd.f32 %v3318, %v3446
        %v3448 = vpop.f32.mrb[0].mxu0
        %3449 = vmatprep.mubr.f32.mxu0 0.0
        %v3450 = vand.u32 %v2788, 4294901760
        %3451 = vmatmul.mubr.f32.gmra.mrb[0].mxu0 %v3450
        %v3452 = vpop.f32.mrb[0].mxu0
        %v3453 = vadd.f32 %v3326, %v3452
        %v3454 = vpop.f32.mrb[0].mxu0
        %3455 = vmatprep.mubr.f32.mxu0 0.0
        %v3456 = vand.u32 %v2791, 4294901760
        %3457 = vmatmul.mubr.f32.gmra.mrb[0].mxu0 %v3456
        %v3458 = vpop.f32.mrb[0].mxu0
        %v3459 = vadd.f32 %v3334, %v3458
        %v3460 = vpop.f32.mrb[0].mxu0
        %3461 = vdwg.mxu0
        %3462 = vmatprep.subr.mxu0 0.0
        %v3463 = vand.u32 %v2764, 4294901760
        %3464 = vmatpush1.msra.mxu0 %v3463
        %3465 = vmatprep.subr.mxu0 0.0
        %v3466 = vand.u32 %v2765, 4294901760
        %3467 = vmatpush1.msra.mxu0 %v3466
        %3468 = vmatprep.subr.mxu0 0.0
        %v3469 = vand.u32 %v2766, 4294901760
        %3470 = vmatpush1.msra.mxu0 %v3469
        %3471 = vmatprep.subr.mxu0 0.0
        %v3472 = vand.u32 %v2767, 4294901760
        %3473 = vmatpush1.msra.mxu0 %v3472
        %3474 = vmatprep.subr.mxu0 0.0
        %3475 = vmatpush1.msra.mxu0 0.0
        %3476 = vmatprep.subr.mxu0 0.0
        %3477 = vmatpush1.msra.mxu0 0.0
        %3478 = vmatprep.subr.mxu0 0.0
        %3479 = vmatpush1.msra.mxu0 0.0
        %3480 = vmatprep.subr.mxu0 0.0
        %3481 = vmatpush1.msra.mxu0 0.0
        %3482 = vmatprep.subr.mxu0 0.0
        %3483 = vmatpush1.msra.mxu0 0.0
        %3484 = vmatprep.subr.mxu0 0.0
        %3485 = vmatpush1.msra.mxu0 0.0
        %3486 = vmatprep.subr.mxu0 0.0
        %3487 = vmatpush1.msra.mxu0 0.0
        %3488 = vmatprep.subr.mxu0 0.0
        %3489 = vmatpush1.msra.mxu0 0.0
        %3490 = vmatprep.subr.mxu0 0.0
        %3491 = vmatpush1.msra.mxu0 0.0
        %3492 = vmatprep.subr.mxu0 0.0
        %3493 = vmatpush1.msra.mxu0 0.0
        %3494 = vmatprep.subr.mxu0 0.0
        %3495 = vmatpush1.msra.mxu0 0.0
        %3496 = vmatprep.subr.mxu0 0.0
        %3497 = vmatpush1.msra.mxu0 0.0
        %3498 = vmatprep.subr.mxu0 0.0
        %3499 = vmatpush1.msra.mxu0 0.0
        %3500 = vmatprep.subr.mxu0 0.0
        %3501 = vmatpush1.msra.mxu0 0.0
        %3502 = vmatprep.subr.mxu0 0.0
        %3503 = vmatpush1.msra.mxu0 0.0
        %3504 = vmatprep.subr.mxu0 0.0
        %3505 = vmatpush1.msra.mxu0 0.0
        %3506 = vmatprep.subr.mxu0 0.0
        %3507 = vmatpush1.msra.mxu0 0.0
        %3508 = vmatprep.subr.mxu0 0.0
        %3509 = vmatpush1.msra.mxu0 0.0
        %3510 = vmatprep.subr.mxu0 0.0
        %3511 = vmatpush1.msra.mxu0 0.0
        %3512 = vmatprep.subr.mxu0 0.0
        %3513 = vmatpush1.msra.mxu0 0.0
        %3514 = vmatprep.subr.mxu0 0.0
        %3515 = vmatpush1.msra.mxu0 0.0
        %3516 = vmatprep.subr.mxu0 0.0
        %3517 = vmatpush1.msra.mxu0 0.0
        %3518 = vmatprep.subr.mxu0 0.0
        %3519 = vmatpush1.msra.mxu0 0.0
        %3520 = vmatprep.subr.mxu0 0.0
        %3521 = vmatpush1.msra.mxu0 0.0
        %3522 = vmatprep.subr.mxu0 0.0
        %3523 = vmatpush1.msra.mxu0 0.0
        %3524 = vmatprep.subr.mxu0 0.0
        %3525 = vmatpush1.msra.mxu0 0.0
        %3526 = vmatprep.subr.mxu0 0.0
        %3527 = vmatpush1.msra.mxu0 0.0
        %3528 = vmatprep.subr.mxu0 0.0
        %3529 = vmatpush1.msra.mxu0 0.0
        %3530 = vmatprep.mubr.f32.mxu0 0.0
        %v3531 = vand.u32 %v2770, 4294901760
        %3532 = vmatmul.mubr.f32.gmra.mrb[0].mxu0 %v3531
        %v3533 = vpop.f32.mrb[0].mxu0
        %v3534 = vadd.f32 %v3417, %v3533
        %v3535 = vpop.f32.mrb[0].mxu0
        %3536 = vmatprep.mubr.f32.mxu0 0.0
        %v3537 = vand.u32 %v2773, 4294901760
        %3538 = vmatmul.mubr.f32.gmra.mrb[0].mxu0 %v3537
        %v3539 = vpop.f32.mrb[0].mxu0
        %v3540 = vadd.f32 %v3423, %v3539
        %v3541 = vpop.f32.mrb[0].mxu0
        %3542 = vmatprep.mubr.f32.mxu0 0.0
        %v3543 = vand.u32 %v2776, 4294901760
        %3544 = vmatmul.mubr.f32.gmra.mrb[0].mxu0 %v3543
        %v3545 = vpop.f32.mrb[0].mxu0
        %v3546 = vadd.f32 %v3429, %v3545
        %v3547 = vpop.f32.mrb[0].mxu0
        %3548 = vmatprep.mubr.f32.mxu0 0.0
        %v3549 = vand.u32 %v2779, 4294901760
        %3550 = vmatmul.mubr.f32.gmra.mrb[0].mxu0 %v3549
        %v3551 = vpop.f32.mrb[0].mxu0
        %v3552 = vadd.f32 %v3435, %v3551
        %v3553 = vpop.f32.mrb[0].mxu0
        %3554 = vmatprep.mubr.f32.mxu0 0.0
        %v3555 = vand.u32 %v2782, 4294901760
        %3556 = vmatmul.mubr.f32.gmra.mrb[0].mxu0 %v3555
        %v3557 = vpop.f32.mrb[0].mxu0
        %v3558 = vadd.f32 %v3441, %v3557
        %v3559 = vpop.f32.mrb[0].mxu0
        %3560 = vmatprep.mubr.f32.mxu0 0.0
        %v3561 = vand.u32 %v2785, 4294901760
        %3562 = vmatmul.mubr.f32.gmra.mrb[0].mxu0 %v3561
        %v3563 = vpop.f32.mrb[0].mxu0
        %v3564 = vadd.f32 %v3447, %v3563
        %v3565 = vpop.f32.mrb[0].mxu0
        %3566 = vmatprep.mubr.f32.mxu0 0.0
        %v3567 = vand.u32 %v2788, 4294901760
        %3568 = vmatmul.mubr.f32.gmra.mrb[0].mxu0 %v3567
        %v3569 = vpop.f32.mrb[0].mxu0
        %v3570 = vadd.f32 %v3453, %v3569
        %v3571 = vpop.f32.mrb[0].mxu0
        %3572 = vmatprep.mubr.f32.mxu0 0.0
        %v3573 = vand.u32 %v2791, 4294901760
        %3574 = vmatmul.mubr.f32.gmra.mrb[0].mxu0 %v3573
        %v3575 = vpop.f32.mrb[0].mxu0
        %v3576 = vadd.f32 %v3459, %v3575
        %v3577 = vpop.f32.mrb[0].mxu0
        %3578 = vdwg.mxu0
        %v3579 = vmul.f32 %v3534, %v3534
        %v3580 = vmul.f32 %v3540, %v3540
        %v3581 = vmul.f32 %v3546, %v3546
        %v3582 = vmul.f32 %v3552, %v3552
        %v3583 = vmul.f32 %v3558, %v3558
        %v3584 = vmul.f32 %v3564, %v3564
        %v3585 = vmul.f32 %v3570, %v3570
        %v3586 = vmul.f32 %v3576, %v3576
        %3595 = vrot.lane.b32.xlu0 %v3579, 112
        %v3596 = vpop.permute.xlu0 %3595
        %3597 = vrot.lane.b32.xlu0 %v3580, 112
        %v3598 = vpop.permute.xlu0 %3597
        %3599 = vrot.lane.b32.xlu0 %v3581, 112
        %v3600 = vpop.permute.xlu0 %3599
        %3601 = vrot.lane.b32.xlu0 %v3582, 112
        %v3602 = vpop.permute.xlu0 %3601
        %3603 = vrot.lane.b32.xlu0 %v3583, 112
        %v3604 = vpop.permute.xlu0 %3603
        %3605 = vrot.lane.b32.xlu0 %v3584, 112
        %v3606 = vpop.permute.xlu0 %3605
        %3607 = vrot.lane.b32.xlu0 %v3585, 112
        %v3608 = vpop.permute.xlu0 %3607
        %3609 = vrot.lane.b32.xlu0 %v3586, 112
        %v3610 = vpop.permute.xlu0 %3609
        %v3619 = vadd.f32 %v3579, %v3596
        %v3620 = vadd.f32 %v3580, %v3598
        %v3621 = vadd.f32 %v3581, %v3600
        %v3622 = vadd.f32 %v3582, %v3602
        %v3623 = vadd.f32 %v3583, %v3604
        %v3624 = vadd.f32 %v3584, %v3606
        %v3625 = vadd.f32 %v3585, %v3608
        %v3626 = vadd.f32 %v3586, %v3610
        %v3627 = vrsqrt.pop %v3619
        %v3628 = vmul.f32 %v3619, %v3627
        %vm3629 = vcmp.eq.f32.partialorder %v3619, inf
        %v3630 = vsel %vm3629, %v3619, %v3628
        %vm3631 = vcmp.eq.f32.partialorder %v3619, 0.0
        %v3632 = vand.u32 %v3619, 2147483648
        %v3633 = vsel %vm3631, %v3632, %v3630
        %v3634 = vrsqrt.pop %v3620
        %v3635 = vmul.f32 %v3620, %v3634
        %vm3636 = vcmp.eq.f32.partialorder %v3620, inf
        %v3637 = vsel %vm3636, %v3620, %v3635
        %vm3638 = vcmp.eq.f32.partialorder %v3620, 0.0
        %v3639 = vand.u32 %v3620, 2147483648
        %v3640 = vsel %vm3638, %v3639, %v3637
        %v3641 = vrsqrt.pop %v3621
        %v3642 = vmul.f32 %v3621, %v3641
        %vm3643 = vcmp.eq.f32.partialorder %v3621, inf
        %v3644 = vsel %vm3643, %v3621, %v3642
        %vm3645 = vcmp.eq.f32.partialorder %v3621, 0.0
        %v3646 = vand.u32 %v3621, 2147483648
        %v3647 = vsel %vm3645, %v3646, %v3644
        %v3648 = vrsqrt.pop %v3622
        %v3649 = vmul.f32 %v3622, %v3648
        %vm3650 = vcmp.eq.f32.partialorder %v3622, inf
        %v3651 = vsel %vm3650, %v3622, %v3649
        %vm3652 = vcmp.eq.f32.partialorder %v3622, 0.0
        %v3653 = vand.u32 %v3622, 2147483648
        %v3654 = vsel %vm3652, %v3653, %v3651
        %v3655 = vrsqrt.pop %v3623
        %v3656 = vmul.f32 %v3623, %v3655
        %vm3657 = vcmp.eq.f32.partialorder %v3623, inf
        %v3658 = vsel %vm3657, %v3623, %v3656
        %vm3659 = vcmp.eq.f32.partialorder %v3623, 0.0
        %v3660 = vand.u32 %v3623, 2147483648
        %v3661 = vsel %vm3659, %v3660, %v3658
        %v3662 = vrsqrt.pop %v3624
        %v3663 = vmul.f32 %v3624, %v3662
        %vm3664 = vcmp.eq.f32.partialorder %v3624, inf
        %v3665 = vsel %vm3664, %v3624, %v3663
        %vm3666 = vcmp.eq.f32.partialorder %v3624, 0.0
        %v3667 = vand.u32 %v3624, 2147483648
        %v3668 = vsel %vm3666, %v3667, %v3665
        %v3669 = vrsqrt.pop %v3625
        %v3670 = vmul.f32 %v3625, %v3669
        %vm3671 = vcmp.eq.f32.partialorder %v3625, inf
        %v3672 = vsel %vm3671, %v3625, %v3670
        %vm3673 = vcmp.eq.f32.partialorder %v3625, 0.0
        %v3674 = vand.u32 %v3625, 2147483648
        %v3675 = vsel %vm3673, %v3674, %v3672
        %v3676 = vrsqrt.pop %v3626
        %v3677 = vmul.f32 %v3626, %v3676
        %vm3678 = vcmp.eq.f32.partialorder %v3626, inf
        %v3679 = vsel %vm3678, %v3626, %v3677
        %vm3680 = vcmp.eq.f32.partialorder %v3626, 0.0
        %v3681 = vand.u32 %v3626, 2147483648
        %v3682 = vsel %vm3680, %v3681, %v3679
        %3683 = vst.msk [vmem:[%s343] sm:$0xff] %vm356, %v3633
        %3684 = vst.msk [vmem:[%s343 + $0x8] sm:$0xff] %vm356, %v3640
        %3685 = vst.msk [vmem:[%s343 + $0x10] sm:$0xff] %vm356, %v3647
        %3686 = vst.msk [vmem:[%s343 + $0x18] sm:$0xff] %vm356, %v3654
        %3687 = vst.msk [vmem:[%s343 + $0x20] sm:$0xff] %vm356, %v3661
        %3688 = vst.msk [vmem:[%s343 + $0x28] sm:$0xff] %vm356, %v3668
        %3689 = vst.msk [vmem:[%s343 + $0x30] sm:$0xff] %vm356, %v3675
        %3690 = vst.msk [vmem:[%s343 + $0x38] sm:$0xff] %vm356, %v3682
        %s3691 = sand.u32 %s165, 1
        %s3692 = scalar_lea.sflag [#allocation4], %s3691
        %s3693 = sand.u32 %s165, 1
        %s3694 = smul.addr %s3693, 64
        %s3695 = scalar_lea.vmem [#allocation13], %s3694
        // Predicated region
        $region69: #{tpu_custom_call.1} parent=43 // pred_check
          %p3696 = pneg %p175
        $region70: #{tpu_custom_call.1} parent=43 // pred_check_branch
          %3698 = sbr.rel (%p3696) target = $region72
        $region71: #{tpu_custom_call.1} parent=43 // pred_region
          %s3699 = smul.u32 4, %s26
          %s3701 = ssub.s32 1024, 1024
          %3702 = vsyncadd %s3692, %s3701
          %s3703 = smul.addr %s3699, 2
          %s3704 = smul.addr %s3703, 128
          %s3705 = scalar_lea.hbm %s6, %s3704
          %s3706 = sshll.u32 %s3695, 4
          %s3707 = int_to_ptr.vmem [resolvable:$true] %s3706
          %3712 = dma.vmem_to_hbm [thread:$0]  %s3707, 1024, %s3705, %s3692, 128, 128, 8
        $region72: #{tpu_custom_call.1} parent=43 // pred_fallthru
          _
      $region44: #{tpu_custom_call.1} parent=5 // pred_fallthru
        _
      %p3713 = scmp.le.s32.totalorder 2, %s21
      // Predicated region
      $region73: #{tpu_custom_call.1} parent=5 // pred_check
        %p3714 = pneg %p3713
      $region74: #{tpu_custom_call.1} parent=5 // pred_check_branch
        %3716 = sbr.rel (%p3714) target = $region76
      $region75: #{tpu_custom_call.1} parent=5 // pred_region
        %s3717 = ssub.s32 %s21, 2
        // Predicated region
        $region77: #{tpu_custom_call.1} parent=75 // pred_check
          %p3718 = pneg %p181
        $region78: #{tpu_custom_call.1} parent=75 // pred_check_branch
          %3720 = sbr.rel (%p3718) target = $region80
        $region79: #{tpu_custom_call.1} parent=75 // pred_region
          %s3721 = sand.u32 %s166, 1
          %s3722 = scalar_lea.sflag [#allocation4], %s3721
          %s3723 = sand.u32 %s166, 1
          %s3724 = smul.addr %s3723, 64
          %s3725 = scalar_lea.vmem [#allocation13], %s3724
          %3726 = dma.done %s3722, 1024
        $region80: #{tpu_custom_call.1} parent=75 // pred_fallthru
          _
      $region76: #{tpu_custom_call.1} parent=5 // pred_fallthru
        _
    $region6: #{tpu_custom_call.1} parent=1 // loop_footer
      %s25 = sadd.s32 1, %s21
    $region7: #{tpu_custom_call.1} parent=1 // loop_footer_branch
      %20 = sbr.rel target = $region3
    $region8: #{tpu_custom_call.1} parent=1 // loop_exit
      _
    %3727 = vsyncpa [#allocation3], 1
    %s3728 = scalar_lea.sflag [#allocation3], 1
    %3729 = vsyncpa %s3728, 1
    %3730 = vsyncpa [#allocation6], 1
    %3731 = vsyncpa [#allocation9], 1
    %3732 = vsyncpa [#allocation12], 1
    %3733 = vsyncpa [#allocation4], 1
    %s3734 = scalar_lea.sflag [#allocation4], 1
    %3735 = vsyncpa %s3734, 1

</llo_original>
